<compile_context>
chip_gen: v5e
topology: v5e:2x2
jax: 0.10.0
libtpu: 0.0.40
codegen_flags: <defaults>
</compile_context>

<pallas_src>
import functools

import jax
import jax.numpy as jnp
from jax.experimental import pallas as pl
from jax.experimental.pallas import tpu as pltpu

# ---------------------------------------------------------------------------
# Problem sizes (small, TPU-tile friendly)
# ---------------------------------------------------------------------------
NUM_HEADS = 4
DIM_NODE = 128
DIM_EDGE = 128
DIM_TIME = 128
DIM_OUT = 128
DH = DIM_OUT // NUM_HEADS
DIM_KV_IN = DIM_NODE + DIM_EDGE + DIM_TIME + DIM_NODE   # [src | edge | time | dst] = 512
DIM_Z = 3 * DIM_OUT                                      # fused projection -> [K | V | Q_e]

NUM_DST = 64           # dst nodes processed per call (e.g. 4 graph blocks of 16, stacked)
NBR = 8                # fixed fan-out (edges per dst node)
NUM_EDGES = NUM_DST * NBR

NEG_SLOPE = 0.2        # LeakyReLU(0.2)
LN_EPS = 1e-5          # torch.nn.LayerNorm default


# ---------------------------------------------------------------------------
# Pallas kernel: fused projection + attention + edge softmax + reduce + output head
# ---------------------------------------------------------------------------
def _tmp_attn_kernel(dst_ref, kvin_ref, wkv_ref, wout_ref, hhb_ref, pack_ref,
                     o_ref, *, td, nbr):
    f32 = jnp.float32
    eb = td * nbr

    pack = pack_ref[...]                                                 # (8, 128) f32
    zb_k, zb_v, zb_q = pack[0:1], pack[1:2], pack[2:3]
    out_b, gamma, beta = pack[3:4], pack[4:5], pack[5:6]

    # Single fused bf16 matmul: [src | edge | time | dst_bcast] (eb,512) x (512,384)
    # -> [K | V | Q_e] with f32 accumulation.  Slice immediately; biases added in f32.
    z = jnp.dot(kvin_ref[...], wkv_ref[...], preferred_element_type=f32)          # (eb, 384)
    k = z[:, 0 * DIM_OUT:1 * DIM_OUT] + zb_k                                      # (eb, 128)
    v = z[:, 1 * DIM_OUT:2 * DIM_OUT] + zb_v                                      # (eb, 128)
    q_e = z[:, 2 * DIM_OUT:3 * DIM_OUT] + zb_q                                    # (eb, 128)

    # Segment helpers: each dst node owns `nbr` contiguous edge rows ((8,128)-aligned).
    def bcast_to_edges(x):                 # (td, 128) -> (eb, 128), sublane broadcast
        return jnp.broadcast_to(x[:, None, :], (td, nbr, x.shape[-1])).reshape(eb, x.shape[-1])

    def reduce_over_edges(x, op):          # (eb, 128) -> (td, 128), sublane reduce
        return op(x.reshape(td, nbr, x.shape[-1]), axis=1)

    # Lane-dense per-head scores: HHB is the 128x128 block-diagonal "sum within head
    # and broadcast to the head's lanes" 0/1 matrix -> bf16 MXU inputs, f32 accum.
    s = jnp.dot((q_e * k).astype(hhb_ref.dtype), hhb_ref[...],
                preferred_element_type=f32)                                       # (eb, 128)
    s = jnp.where(s >= 0.0, s, NEG_SLOPE * s)                                     # LeakyReLU(0.2)

    # edge_softmax over each dst node's nbr incident edges (per head), stabilized with
    # a per-(dst, head) max; one approx reciprocal per dst row instead of per-edge divide.
    m = reduce_over_edges(s, jnp.max)                                             # (td, 128)
    e_exp = jnp.exp(s - bcast_to_edges(m))                                        # (eb, 128)
    denom = reduce_over_edges(e_exp, jnp.sum)                                     # (td, 128)
    a = e_exp * bcast_to_edges(pl.reciprocal(denom, approx=True))                 # (eb, 128)

    # edge_reduce(sum) of V * attn
    attn_out = reduce_over_edges(v * a, jnp.sum)                                  # (td, 128)

    # Single output-head matmul on [attn_out | dst] -> ReLU -> LayerNorm.
    cat = jnp.concatenate([attn_out.astype(dst_ref.dtype), dst_ref[...]], axis=-1)  # (td, 256)
    h = jnp.dot(cat, wout_ref[...], preferred_element_type=f32) + out_b
    h = jnp.maximum(h, 0.0)
    mu = jnp.mean(h, axis=-1, keepdims=True)
    var = jnp.mean(jnp.square(h - mu), axis=-1, keepdims=True)
    h = (h - mu) * jax.lax.rsqrt(var + LN_EPS)
    o_ref[...] = h * gamma + beta


# ---------------------------------------------------------------------------
# Wrapper: glue (time encoding, gathers, weight stacking, bias folding) + pallas_call
# ---------------------------------------------------------------------------
def temporal_attn_forward(params, node_data, reverse_nids, efeat_unique, reverse_eids,
                          unique_time_delta, reverse_time_delta, num_dst, *, td=None):
    f32, bf16 = jnp.float32, jnp.bfloat16
    freq = params["time_freq"]                                           # (DIM_TIME,)

    dst_ids = reverse_nids[:num_dst]
    src_ids = reverse_nids[num_dst:]
    num_edges = src_ids.shape[0]
    assert num_edges == num_dst * NBR

    dst_feat = node_data[dst_ids]                                        # (D, DIM_NODE)

    # Fused projection input [src_node | edge | time_encode | dst_bcast]; the gathers,
    # cos and concat fuse in XLA.  The dst broadcast segment lets one matmul produce Q too.
    t_edge = unique_time_delta[reverse_time_delta]                       # (E,)
    time_feat = jnp.cos(t_edge[:, None] * freq[None, :])                 # (E, DIM_TIME)
    dst_bcast = jnp.repeat(dst_feat, NBR, axis=0)                        # (E, DIM_NODE)
    kv_in = jnp.concatenate(
        [node_data[src_ids], efeat_unique[reverse_eids], time_feat, dst_bcast], axis=1)  # (E, 512)

    # Fold the constant-per-dst time-query term and all biases; pack the five bias /
    # affine rows into one (8, 128) array (single DMA, single double buffer).
    time_zero = jnp.cos(jnp.zeros((1, DIM_TIME), f32))                   # time_encode(0)
    q_bias = (time_zero @ params["wqt_T"] + params["bqt"] + params["bqn"])[0]       # (128,)
    kv_bias = params["bkvn"] + params["bkve"] + params["bkvt"]                      # (256,)
    zero_row = jnp.zeros((DIM_OUT,), f32)
    pack = jnp.stack([kv_bias[:DIM_OUT], kv_bias[DIM_OUT:], q_bias,
                      params["bout"], params["gamma"], params["beta"],
                      zero_row, zero_row], axis=0)                                  # (8, 128)

    # Fused [K | V | Q] projection weight (512, 384): KV weights stacked, wq in the
    # dst-segment rows of the Q columns, zeros elsewhere.
    zpad = jnp.zeros((DIM_NODE, DIM_OUT), f32)
    wkv_fused = jnp.concatenate([
        jnp.concatenate([params["wkvn_T"], zpad], axis=1),
        jnp.concatenate([params["wkve_T"], zpad], axis=1),
        jnp.concatenate([params["wkvt_T"], zpad], axis=1),
        jnp.concatenate([jnp.zeros((DIM_NODE, 2 * DIM_OUT), f32), params["wqn_T"]], axis=1),
    ], axis=0)                                                           # (512, 384)

    # Block-diagonal head-sum-and-broadcast matrix (0/1, exact in bf16), hoisted here.
    head_of = jnp.arange(DIM_OUT, dtype=jnp.int32) // DH
    hhb = (head_of[:, None] == head_of[None, :]).astype(bf16)            # (128, 128)

    # bf16 at the MXU inputs (f32 accumulation inside the kernel).
    dst_bf = dst_feat.astype(bf16)
    kv_bf = kv_in.astype(bf16)
    wkv_bf = wkv_fused.astype(bf16)
    wout_bf = params["wout_T"].astype(bf16)                              # (256, 128), [attn|dst]

    # Per-generation MXU row fill: EB = td*NBR edge rows per grid step.
    if td is None:
        try:
            kind = jax.devices()[0].device_kind.lower()
        except Exception:
            kind = ""
        td = 16 if "v5" in kind else 32    # EB=128 on v5e (128x128 MXU), EB=256 on v6e/v7x
    td = min(td, num_dst)
    assert num_dst % td == 0
    eb = td * NBR

    kernel = functools.partial(_tmp_attn_kernel, td=td, nbr=NBR)
    resident = lambda i: (0, 0)   # constant block index -> DMA'd once, stays VMEM-resident

    return pl.pallas_call(
        kernel,
        out_shape=jax.ShapeDtypeStruct((num_dst, DIM_OUT), f32),
        grid_spec=pltpu.PrefetchScalarGridSpec(
            num_scalar_prefetch=0,
            grid=(num_dst // td,),
            in_specs=[
                pl.BlockSpec((td, DIM_NODE), lambda i: (i, 0)),          # dst features
                pl.BlockSpec((eb, DIM_KV_IN), lambda i: (i, 0)),         # fused KV/Q input
                pl.BlockSpec((DIM_KV_IN, DIM_Z), resident),              # fused projection W
                pl.BlockSpec((DIM_OUT + DIM_NODE, DIM_OUT), resident),   # output head W
                pl.BlockSpec((DIM_OUT, DIM_OUT), resident),              # HHB
                pl.BlockSpec((8, DIM_OUT), resident),                    # packed biases/affine
            ],
            out_specs=pl.BlockSpec((td, DIM_OUT), lambda i: (i, 0)),
        ),
        compiler_params=pltpu.CompilerParams(dimension_semantics=("parallel",)),
    )(dst_bf, kv_bf, wkv_bf, wout_bf, hhb, pack)


# ---------------------------------------------------------------------------
# Pure-JAX exact reference (mirrors the PyTorch forward op-for-op, f32 everywhere)
# ---------------------------------------------------------------------------
def reference_forward(params, node_data, reverse_nids, efeat_unique, reverse_eids,
                      unique_time_delta, reverse_time_delta, dst_index, num_dst):
    freq = params["time_freq"]
    time_dst_unique = jnp.cos(jnp.zeros((1, DIM_TIME), jnp.float32))    # precomputed_zeros
    time_unique = jnp.cos(unique_time_delta[:, None] * freq[None, :])   # precomputed_times

    node_dst_inverse = reverse_nids[:num_dst]
    node_inverse = reverse_nids[num_dst:]

    Q_node = node_data @ params["wqn_T"] + params["bqn"]
    Q_time = time_dst_unique @ params["wqt_T"] + params["bqt"]
    Q_our = Q_node[node_dst_inverse] + Q_time[jnp.zeros((num_dst,), jnp.int32)]
    Q = Q_our[dst_index]

    Z_node = node_data @ params["wkvn_T"] + params["bkvn"]
    Z_edge = efeat_unique @ params["wkve_T"] + params["bkve"]
    Z_time = time_unique @ params["wkvt_T"] + params["bkvt"]
    Z = Z_node[node_inverse] + Z_edge[reverse_eids] + Z_time[reverse_time_delta]
    K, V = Z[:, :DIM_OUT], Z[:, DIM_OUT:]

    E = Q.shape[0]
    Qh = Q.reshape(E, NUM_HEADS, DH)
    Kh = K.reshape(E, NUM_HEADS, DH)
    Vh = V.reshape(E, NUM_HEADS, DH)
    attn = jnp.sum(Qh * Kh, axis=2)
    attn = jnp.where(attn >= 0.0, attn, NEG_SLOPE * attn)
    attn = jax.nn.softmax(attn.reshape(num_dst, NBR, NUM_HEADS), axis=1).reshape(E, NUM_HEADS)
    out_e = (Vh * attn[:, :, None]).reshape(E, DIM_OUT)
    out = out_e.reshape(num_dst, NBR, DIM_OUT).sum(axis=1)              # edge_reduce(sum)
    dst_h = node_data[node_dst_inverse]
    cat = jnp.concatenate([out, dst_h], axis=1)
    h = cat @ params["wout_T"] + params["bout"]
    h = jax.nn.relu(h)
    mu = h.mean(-1, keepdims=True)
    var = ((h - mu) ** 2).mean(-1, keepdims=True)
    h = (h - mu) / jnp.sqrt(var + LN_EPS)
    return h * params["gamma"] + params["beta"]


# ---------------------------------------------------------------------------
# Numerics-matched reference: same fused layout and the same bf16 casts at the MXU
# inputs (fused projection, score matmul, output head) as the kernel (tight check);
# the exact-f32 reference above is only a loose sanity check.
# ---------------------------------------------------------------------------
def matched_reference(params, node_data, reverse_nids, efeat_unique, reverse_eids,
                      unique_time_delta, reverse_time_delta, num_dst):
    f32, bf16 = jnp.float32, jnp.bfloat16
    freq = params["time_freq"]
    dst_feat = node_data[reverse_nids[:num_dst]]
    t_edge = unique_time_delta[reverse_time_delta]
    time_feat = jnp.cos(t_edge[:, None] * freq[None, :])
    dst_bcast = jnp.repeat(dst_feat, NBR, axis=0)
    kv_in = jnp.concatenate([node_data[reverse_nids[num_dst:]], efeat_unique[reverse_eids],
                             time_feat, dst_bcast], axis=1)

    q_bias = (jnp.cos(jnp.zeros((1, DIM_TIME), f32)) @ params["wqt_T"]
              + params["bqt"] + params["bqn"])[0]
    kv_bias = params["bkvn"] + params["bkve"] + params["bkvt"]
    zpad = jnp.zeros((DIM_NODE, DIM_OUT), f32)
    wkv_fused = jnp.concatenate([
        jnp.concatenate([params["wkvn_T"], zpad], axis=1),
        jnp.concatenate([params["wkve_T"], zpad], axis=1),
        jnp.concatenate([params["wkvt_T"], zpad], axis=1),
        jnp.concatenate([jnp.zeros((DIM_NODE, 2 * DIM_OUT), f32), params["wqn_T"]], axis=1),
    ], axis=0)

    dot = lambda a, b: jnp.dot(a.astype(bf16), b.astype(bf16), preferred_element_type=f32)

    z = dot(kv_in, wkv_fused)
    k = z[:, :DIM_OUT] + kv_bias[:DIM_OUT]
    v = z[:, DIM_OUT:2 * DIM_OUT] + kv_bias[DIM_OUT:]
    q_e = z[:, 2 * DIM_OUT:] + q_bias

    prod = (q_e * k).astype(bf16).astype(f32)        # mirror bf16 inputs of the HHB matmul
    s = jnp.sum(prod.reshape(-1, NUM_HEADS, DH), axis=2)
    s = jnp.where(s >= 0.0, s, NEG_SLOPE * s)
    a = jax.nn.softmax(s.reshape(num_dst, NBR, NUM_HEADS), axis=1).reshape(-1, NUM_HEADS)
    out = (v.reshape(-1, NUM_HEADS, DH) * a[:, :, None]).reshape(-1, DIM_OUT)
    out = out.reshape(num_dst, NBR, DIM_OUT).sum(axis=1)

    h = dot(jnp.concatenate([out, dst_feat], axis=1), params["wout_T"]) + params["bout"]
    h = jax.nn.relu(h)
    mu = h.mean(-1, keepdims=True)
    var = ((h - mu) ** 2).mean(-1, keepdims=True)
    h = (h - mu) / jnp.sqrt(var + LN_EPS)
    return h * params["gamma"] + params["beta"]


# ---------------------------------------------------------------------------
# Deterministic parameter / input construction
# ---------------------------------------------------------------------------
def _linear_init(key, fan_in, fan_out):
    kw, kb = jax.random.split(key)
    bound = 1.0 / jnp.sqrt(fan_in)
    w_t = jax.random.uniform(kw, (fan_in, fan_out), jnp.float32, -bound, bound)
    b = jax.random.uniform(kb, (fan_out,), jnp.float32, -bound, bound)
    return w_t, b


def make_params(key):
    ks = jax.random.split(key, 8)
    wqn_T, bqn = _linear_init(ks[0], DIM_NODE, DIM_OUT)
    wqt_T, bqt = _linear_init(ks[1], DIM_TIME, DIM_OUT)
    wkvn_T, bkvn = _linear_init(ks[2], DIM_NODE, 2 * DIM_OUT)
    wkve_T, bkve = _linear_init(ks[3], DIM_EDGE, 2 * DIM_OUT)
    wkvt_T, bkvt = _linear_init(ks[4], DIM_TIME, 2 * DIM_OUT)
    wout_T, bout = _linear_init(ks[5], DIM_OUT + DIM_NODE, DIM_OUT)
    return dict(
        wqn_T=wqn_T, bqn=bqn, wqt_T=wqt_T, bqt=bqt,
        wkvn_T=wkvn_T, bkvn=bkvn, wkve_T=wkve_T, bkve=bkve, wkvt_T=wkvt_T, bkvt=bkvt,
        wout_T=wout_T, bout=bout,
        gamma=jnp.ones((DIM_OUT,), jnp.float32),
        beta=jnp.zeros((DIM_OUT,), jnp.float32),
        # TGN-style TimeEncode frequencies: 1 / 10^linspace(0, 9, dim_time)
        time_freq=(1.0 / (10.0 ** jnp.linspace(0.0, 9.0, DIM_TIME))).astype(jnp.float32),
    )


if __name__ == "__main__":
    key = jax.random.PRNGKey(0)
    k_par, k_n, k_e, k_t, k_rn, k_re, k_rt = jax.random.split(key, 7)

    params = make_params(k_par)

    n_unique_nodes, n_unique_edges, n_unique_times = 40, 32, 12
    node_data = jax.random.normal(k_n, (n_unique_nodes, DIM_NODE), jnp.float32)
    efeat_unique = jax.random.normal(k_e, (n_unique_edges, DIM_EDGE), jnp.float32)
    unique_time_delta = jax.random.uniform(k_t, (n_unique_times,), jnp.float32, 0.0, 100.0)

    reverse_nids = jax.random.randint(k_rn, (NUM_DST + NUM_EDGES,), 0, n_unique_nodes, jnp.int32)
    reverse_eids = jax.random.randint(k_re, (NUM_EDGES,), 0, n_unique_edges, jnp.int32)
    reverse_time_delta = jax.random.randint(k_rt, (NUM_EDGES,), 0, n_unique_times, jnp.int32)
    dst_index = jnp.repeat(jnp.arange(NUM_DST, dtype=jnp.int32), NBR)   # blk._g_dstindex

    out = temporal_attn_forward(params, node_data, reverse_nids, efeat_unique, reverse_eids,
                                unique_time_delta, reverse_time_delta, NUM_DST)
    out = jax.block_until_ready(out)

    ref_match = matched_reference(params, node_data, reverse_nids, efeat_unique, reverse_eids,
                                  unique_time_delta, reverse_time_delta, NUM_DST)
    ref_exact = reference_forward(params, node_data, reverse_nids, efeat_unique, reverse_eids,
                                  unique_time_delta, reverse_time_delta, dst_index, NUM_DST)
    jax.block_until_ready((ref_match, ref_exact))

    assert out.shape == (NUM_DST, DIM_OUT), out.shape
    # Tight check vs a reference with the same fused layout and bf16-at-MXU numerics as
    # the kernel (approx reciprocal remains the only un-mirrored difference).
    err_match = float(jnp.max(jnp.abs(out - ref_match)))
    assert err_match < 3e-2, err_match
    # Loose sanity check vs the exact f32 PyTorch-mirroring reference (bf16 MXU inputs
    # introduce ~1e-2 per-element deviation; LayerNorm output is O(1)).
    err_exact = float(jnp.max(jnp.abs(out - ref_exact)))
    assert err_exact < 0.25, err_exact
    print("KERNEL_OK")
</pallas_src>

<mosaic_0001>
module attributes {stable_mosaic.version = 11 : i64} {
  func.func @_tmp_attn_kernel(%arg0: i32, %arg1: memref<32x128xbf16, #tpu.memory_space<vmem>>, %arg2: memref<256x512xbf16, #tpu.memory_space<vmem>>, %arg3: memref<512x384xbf16, #tpu.memory_space<vmem>>, %arg4: memref<256x128xbf16, #tpu.memory_space<vmem>>, %arg5: memref<128x128xbf16, #tpu.memory_space<vmem>>, %arg6: memref<8x128xf32, #tpu.memory_space<vmem>>, %arg7: memref<32x128xf32, #tpu.memory_space<vmem>>) attributes {dimension_semantics = [#tpu.dimension_semantics<parallel>], iteration_bounds = array<i64: 2>, scalar_prefetch = 0 : i64, scratch_operands = 0 : i64, tpu.core_type = #tpu.core_type<tc>, window_params = [{transform_indices = @transform_0, window_bounds = array<i64: 32, 128>}, {transform_indices = @transform_1, window_bounds = array<i64: 256, 512>}, {pipeline_mode = #tpu.pipeline_mode<synchronous>, transform_indices = @transform_2, window_bounds = array<i64: 512, 384>}, {pipeline_mode = #tpu.pipeline_mode<synchronous>, transform_indices = @transform_3, window_bounds = array<i64: 256, 128>}, {pipeline_mode = #tpu.pipeline_mode<synchronous>, transform_indices = @transform_4, window_bounds = array<i64: 128, 128>}, {pipeline_mode = #tpu.pipeline_mode<synchronous>, transform_indices = @transform_5, window_bounds = array<i64: 8, 128>}, {transform_indices = @transform_6, window_bounds = array<i64: 32, 128>}]} {
    %c0 = arith.constant 0 : index
    %c0_0 = arith.constant 0 : index
    %0 = vector.load %arg6[%c0, %c0_0] : memref<8x128xf32, #tpu.memory_space<vmem>>, vector<8x128xf32>
    %1 = vector.extract_strided_slice %0 {offsets = [0, 0], sizes = [1, 128], strides = [1, 1]} : vector<8x128xf32> to vector<1x128xf32>
    %2 = vector.extract_strided_slice %0 {offsets = [1, 0], sizes = [1, 128], strides = [1, 1]} : vector<8x128xf32> to vector<1x128xf32>
    %3 = vector.extract_strided_slice %0 {offsets = [2, 0], sizes = [1, 128], strides = [1, 1]} : vector<8x128xf32> to vector<1x128xf32>
    %4 = vector.extract_strided_slice %0 {offsets = [3, 0], sizes = [1, 128], strides = [1, 1]} : vector<8x128xf32> to vector<1x128xf32>
    %5 = vector.extract_strided_slice %0 {offsets = [4, 0], sizes = [1, 128], strides = [1, 1]} : vector<8x128xf32> to vector<1x128xf32>
    %6 = vector.extract_strided_slice %0 {offsets = [5, 0], sizes = [1, 128], strides = [1, 1]} : vector<8x128xf32> to vector<1x128xf32>
    %c0_1 = arith.constant 0 : index
    %c0_2 = arith.constant 0 : index
    %7 = vector.load %arg2[%c0_1, %c0_2] : memref<256x512xbf16, #tpu.memory_space<vmem>>, vector<256x512xbf16>
    %c0_3 = arith.constant 0 : index
    %c0_4 = arith.constant 0 : index
    %8 = vector.load %arg3[%c0_3, %c0_4] : memref<512x384xbf16, #tpu.memory_space<vmem>>, vector<512x384xbf16>
    %cst = arith.constant dense<0.000000e+00> : vector<256x384xf32>
    %9 = tpu.matmul %7, %8, %cst {dimension_numbers = #tpu.dot_dimension_numbers<[1], [0], [0], [1], [0, 0, 1, 1], [], []>} : vector<256x512xbf16>, vector<512x384xbf16>, vector<256x384xf32> -> vector<256x384xf32>
    %10 = vector.extract_strided_slice %9 {offsets = [0, 0], sizes = [256, 128], strides = [1, 1]} : vector<256x384xf32> to vector<256x128xf32>
    %11 = vector.broadcast %1 : vector<1x128xf32> to vector<256x128xf32>
    %12 = arith.addf %10, %11 : vector<256x128xf32>
    %13 = vector.extract_strided_slice %9 {offsets = [0, 128], sizes = [256, 128], strides = [1, 1]} : vector<256x384xf32> to vector<256x128xf32>
    %14 = vector.broadcast %2 : vector<1x128xf32> to vector<256x128xf32>
    %15 = arith.addf %13, %14 : vector<256x128xf32>
    %16 = vector.extract_strided_slice %9 {offsets = [0, 256], sizes = [256, 128], strides = [1, 1]} : vector<256x384xf32> to vector<256x128xf32>
    %17 = vector.broadcast %3 : vector<1x128xf32> to vector<256x128xf32>
    %18 = arith.addf %16, %17 : vector<256x128xf32>
    %19 = arith.mulf %18, %12 : vector<256x128xf32>
    %20 = arith.truncf %19 : vector<256x128xf32> to vector<256x128xbf16>
    %c0_5 = arith.constant 0 : index
    %c0_6 = arith.constant 0 : index
    %21 = vector.load %arg5[%c0_5, %c0_6] : memref<128x128xbf16, #tpu.memory_space<vmem>>, vector<128x128xbf16>
    %cst_7 = arith.constant dense<0.000000e+00> : vector<256x128xf32>
    %22 = tpu.matmul %20, %21, %cst_7 {dimension_numbers = #tpu.dot_dimension_numbers<[1], [0], [0], [1], [0, 0, 1, 1], [], []>} : vector<256x128xbf16>, vector<128x128xbf16>, vector<256x128xf32> -> vector<256x128xf32>
    %cst_8 = arith.constant 0.000000e+00 : f32
    %23 = vector.broadcast %cst_8 : f32 to vector<256x128xf32>
    %24 = arith.cmpf oge, %22, %23 : vector<256x128xf32>
    %cst_9 = arith.constant 2.000000e-01 : f32
    %25 = vector.broadcast %cst_9 : f32 to vector<256x128xf32>
    %26 = arith.mulf %25, %22 : vector<256x128xf32>
    %27 = arith.select %24, %22, %26 : vector<256x128xi1>, vector<256x128xf32>
    %28 = vector.shape_cast %27 : vector<256x128xf32> to vector<32x8x128xf32>
    %cst_10 = arith.constant dense<0xFF800000> : vector<32x128xf32>
    %29 = vector.multi_reduction <maximumf>, %28, %cst_10 [1] : vector<32x8x128xf32> to vector<32x128xf32>
    %30 = vector.shape_cast %29 : vector<32x128xf32> to vector<32x1x128xf32>
    %31 = vector.shape_cast %30 : vector<32x1x128xf32> to vector<32x1x128xf32>
    %32 = vector.broadcast %31 : vector<32x1x128xf32> to vector<32x8x128xf32>
    %33 = vector.shape_cast %32 : vector<32x8x128xf32> to vector<256x128xf32>
    %34 = arith.subf %27, %33 : vector<256x128xf32>
    %35 = math.exp %34 : vector<256x128xf32>
    %36 = vector.shape_cast %35 : vector<256x128xf32> to vector<32x8x128xf32>
    %cst_11 = arith.constant dense<0.000000e+00> : vector<32x128xf32>
    %37 = vector.multi_reduction <add>, %36, %cst_11 [1] : vector<32x8x128xf32> to vector<32x128xf32>
    %38 = tpu.reciprocal %37 {approx = true} : vector<32x128xf32> -> vector<32x128xf32>
    %39 = vector.shape_cast %38 : vector<32x128xf32> to vector<32x1x128xf32>
    %40 = vector.shape_cast %39 : vector<32x1x128xf32> to vector<32x1x128xf32>
    %41 = vector.broadcast %40 : vector<32x1x128xf32> to vector<32x8x128xf32>
    %42 = vector.shape_cast %41 : vector<32x8x128xf32> to vector<256x128xf32>
    %43 = arith.mulf %35, %42 : vector<256x128xf32>
    %44 = arith.mulf %15, %43 : vector<256x128xf32>
    %45 = vector.shape_cast %44 : vector<256x128xf32> to vector<32x8x128xf32>
    %cst_12 = arith.constant dense<0.000000e+00> : vector<32x128xf32>
    %46 = vector.multi_reduction <add>, %45, %cst_12 [1] : vector<32x8x128xf32> to vector<32x128xf32>
    %47 = arith.truncf %46 : vector<32x128xf32> to vector<32x128xbf16>
    %c0_13 = arith.constant 0 : index
    %c0_14 = arith.constant 0 : index
    %48 = vector.load %arg1[%c0_13, %c0_14] : memref<32x128xbf16, #tpu.memory_space<vmem>>, vector<32x128xbf16>
    %49 = tpu.concatenate %47, %48 in 1 : vector<32x128xbf16>, vector<32x128xbf16> -> vector<32x256xbf16>
    %c0_15 = arith.constant 0 : index
    %c0_16 = arith.constant 0 : index
    %50 = vector.load %arg4[%c0_15, %c0_16] : memref<256x128xbf16, #tpu.memory_space<vmem>>, vector<256x128xbf16>
    %cst_17 = arith.constant dense<0.000000e+00> : vector<32x128xf32>
    %51 = tpu.matmul %49, %50, %cst_17 {dimension_numbers = #tpu.dot_dimension_numbers<[1], [0], [0], [1], [0, 0, 1, 1], [], []>} : vector<32x256xbf16>, vector<256x128xbf16>, vector<32x128xf32> -> vector<32x128xf32>
    %52 = vector.broadcast %4 : vector<1x128xf32> to vector<32x128xf32>
    %53 = arith.addf %51, %52 : vector<32x128xf32>
    %cst_18 = arith.constant 0.000000e+00 : f32
    %54 = vector.broadcast %cst_18 : f32 to vector<32x128xf32>
    %55 = arith.maximumf %53, %54 : vector<32x128xf32>
    %cst_19 = arith.constant dense<0.000000e+00> : vector<32xf32>
    %56 = vector.multi_reduction <add>, %55, %cst_19 [1] : vector<32x128xf32> to vector<32xf32>
    %57 = vector.shape_cast %56 : vector<32xf32> to vector<32x1xf32>
    %cst_20 = arith.constant 1.280000e+02 : f32
    %58 = vector.broadcast %cst_20 : f32 to vector<32x1xf32>
    %59 = arith.divf %57, %58 : vector<32x1xf32>
    %60 = vector.broadcast %59 : vector<32x1xf32> to vector<32x128xf32>
    %61 = arith.subf %55, %60 : vector<32x128xf32>
    %62 = arith.mulf %61, %61 : vector<32x128xf32>
    %cst_21 = arith.constant dense<0.000000e+00> : vector<32xf32>
    %63 = vector.multi_reduction <add>, %62, %cst_21 [1] : vector<32x128xf32> to vector<32xf32>
    %64 = vector.shape_cast %63 : vector<32xf32> to vector<32x1xf32>
    %cst_22 = arith.constant 1.280000e+02 : f32
    %65 = vector.broadcast %cst_22 : f32 to vector<32x1xf32>
    %66 = arith.divf %64, %65 : vector<32x1xf32>
    %67 = vector.broadcast %59 : vector<32x1xf32> to vector<32x128xf32>
    %68 = arith.subf %55, %67 : vector<32x128xf32>
    %cst_23 = arith.constant 9.99999974E-6 : f32
    %69 = vector.broadcast %cst_23 : f32 to vector<32x1xf32>
    %70 = arith.addf %66, %69 : vector<32x1xf32>
    %71 = math.rsqrt %70 : vector<32x1xf32>
    %72 = vector.broadcast %71 : vector<32x1xf32> to vector<32x128xf32>
    %73 = arith.mulf %68, %72 : vector<32x128xf32>
    %74 = vector.broadcast %5 : vector<1x128xf32> to vector<32x128xf32>
    %75 = arith.mulf %73, %74 : vector<32x128xf32>
    %76 = vector.broadcast %6 : vector<1x128xf32> to vector<32x128xf32>
    %77 = arith.addf %75, %76 : vector<32x128xf32>
    %c0_24 = arith.constant 0 : index
    %c0_25 = arith.constant 0 : index
    %78 = vector.load %arg7[%c0_24, %c0_25] : memref<32x128xf32, #tpu.memory_space<vmem>>, vector<32x128xf32>
    tpu.vector_store %arg7[%c0_24, %c0_25], %77 {strides = array<i32>} : memref<32x128xf32, #tpu.memory_space<vmem>>, vector<32x128xf32>,
    return
  }
  func.func @transform_0(%arg0: i32) -> (i32, i32) {
    %c0_i32 = arith.constant 0 : i32
    %c0_i32_0 = arith.constant 0 : i32
    return %arg0, %c0_i32 : i32, i32
  }
  func.func @transform_1(%arg0: i32) -> (i32, i32) {
    %c0_i32 = arith.constant 0 : i32
    %c0_i32_0 = arith.constant 0 : i32
    return %arg0, %c0_i32 : i32, i32
  }
  func.func @transform_2(%arg0: i32) -> (i32, i32) {
    %c0_i32 = arith.constant 0 : i32
    %c0_i32_0 = arith.constant 0 : i32
    %c0_i32_1 = arith.constant 0 : i32
    return %c0_i32, %c0_i32_0 : i32, i32
  }
  func.func @transform_3(%arg0: i32) -> (i32, i32) {
    %c0_i32 = arith.constant 0 : i32
    %c0_i32_0 = arith.constant 0 : i32
    %c0_i32_1 = arith.constant 0 : i32
    return %c0_i32, %c0_i32_0 : i32, i32
  }
  func.func @transform_4(%arg0: i32) -> (i32, i32) {
    %c0_i32 = arith.constant 0 : i32
    %c0_i32_0 = arith.constant 0 : i32
    %c0_i32_1 = arith.constant 0 : i32
    return %c0_i32, %c0_i32_0 : i32, i32
  }
  func.func @transform_5(%arg0: i32) -> (i32, i32) {
    %c0_i32 = arith.constant 0 : i32
    %c0_i32_0 = arith.constant 0 : i32
    %c0_i32_1 = arith.constant 0 : i32
    return %c0_i32, %c0_i32_0 : i32, i32
  }
  func.func @transform_6(%arg0: i32) -> (i32, i32) {
    %c0_i32 = arith.constant 0 : i32
    %c0_i32_0 = arith.constant 0 : i32
    return %arg0, %c0_i32 : i32, i32
  }
}

</mosaic_0001>

<llo_original>
// kernel: tpu_custom_call.1
$region0: #{tpu_custom_call.1}
  #allocation0 [shape = 'u32[]', space=smem, size = 0x4, offset = 0x4, fixed_abs, tag = 'smem constant byte address 0x4 - core index']
  #allocation1 [shape = 'u32[72,128]{1,0:T(1,128)}', space=vmem, size = 0x9000, scoped, tag = 'internal scratch']
  %s0 = inlined_call_operand.hbm [shape: bf16[64,128], index: 0, kind: input, shape index: {}]
  %s1 = inlined_call_operand.hbm [shape: bf16[512,512], index: 1, kind: input, shape index: {}]
  %s2 = inlined_call_operand.hbm [shape: bf16[512,384], index: 2, kind: input, shape index: {}]
  %s3 = inlined_call_operand.hbm [shape: bf16[256,128], index: 3, kind: input, shape index: {}]
  %s4 = inlined_call_operand.hbm [shape: bf16[128,128], index: 4, kind: input, shape index: {}]
  %s5 = inlined_call_operand.hbm [shape: f32[8,128], index: 5, kind: input, shape index: {}]
  %s6 = inlined_call_operand.hbm [shape: f32[64,128], index: 6, kind: output, shape index: {}]
  %s7 = sld [smem:[#allocation0]]
  $region81: #{tpu_custom_call.1} parent=0
    _
  %s9 = ssub.s32 1, %s7
  %s10 = scalar_select 0, %s9, %s7
  $region1: #{tpu_custom_call.1} parent=0
    #allocation2 [shape = 'u8[16384]{0}', space=vmem, size = 0x4000, scoped, tag = 'input window, operand 0']
    #allocation3 [shape = 's32[2]{0}', space=sflag, size = 0x8, scoped, tag = 'scoped memory for tpu_custom_call.1']
    #allocation4 [shape = 's32[2]{0}', space=sflag, size = 0x8, scoped, tag = 'scoped memory for tpu_custom_call.1']
    #allocation5 [shape = 'u8[524288]{0}', space=vmem, size = 0x80000, scoped, tag = 'input window, operand 1']
    #allocation6 [shape = 's32[2]{0}', space=sflag, size = 0x8, scoped, tag = 'scoped memory for tpu_custom_call.1']
    #allocation7 [shape = 'u8[393216]{0}', space=vmem, size = 0x60000, scoped, tag = 'input window, operand 2, single buffered']
    #allocation8 [shape = 'u8[65536]{0}', space=vmem, size = 0x10000, scoped, tag = 'input window, operand 3, single buffered']
    #allocation9 [shape = 's32[1]{0}', space=sflag, size = 0x4, scoped, tag = 'scoped memory for tpu_custom_call.1']
    #allocation10 [shape = 'u8[32768]{0}', space=vmem, size = 0x8000, scoped, tag = 'input window, operand 4, single buffered']
    #allocation11 [shape = 'u8[4096]{0}', space=vmem, size = 0x1000, scoped, tag = 'input window, operand 5, single buffered']
    #allocation12 [shape = 's32[1]{0}', space=sflag, size = 0x4, scoped, tag = 'scoped memory for tpu_custom_call.1']
    #allocation13 [shape = 'u8[32768]{0}', space=vmem, size = 0x8000, scoped, tag = 'output window, operand 0']
    %11 = vsyncpa [#allocation3], 0
    %s12 = scalar_lea.sflag [#allocation3], 1
    %13 = vsyncpa %s12, 0
    %14 = vsyncpa [#allocation6], 0
    %s15 = scalar_lea.sflag [#allocation6], 1
    %16 = vsyncpa %s15, 0
    %17 = vsyncpa [#allocation9], 0
    %18 = vsyncpa [#allocation12], 0
    %19 = vsyncpa [#allocation4], 0
    %s20 = scalar_lea.sflag [#allocation4], 1
    %21 = vsyncpa %s20, 0
    loop: start=0, step=1, limit=4
    $region2: #{tpu_custom_call.1} parent=1 // loop_pre_header
      _
    $region3: #{tpu_custom_call.1} parent=1 // loop_header
      %s23 = sphi 0, %s27
      %p24 = scmp.ge.s32.totalorder %s23, 4
      %s33 = sphi 0, %s35
      %s36 = sphi 0, %s33
      %s37 = sphi 0, %s36
      %s53 = sphi 0, %s37
      %s59 = sphi 0, %s61
      %s62 = sphi 0, %s59
      %s63 = sphi 0, %s62
      %s79 = sphi 0, %s63
      %s83 = sphi 0, %s83
      %s85 = sphi 0, %s83
      %s86 = sphi 0, %s85
      %s100 = sphi 0, %s86
      %s104 = sphi 0, %s104
      %s106 = sphi 0, %s104
      %s107 = sphi 0, %s106
      %s121 = sphi 0, %s107
      %s125 = sphi 0, %s125
      %s127 = sphi 0, %s125
      %s128 = sphi 0, %s127
      %s142 = sphi 0, %s128
      %s146 = sphi 0, %s146
      %s148 = sphi 0, %s146
      %s149 = sphi 0, %s148
      %s163 = sphi 0, %s149
      %s169 = sphi 0, %s171
      %s172 = sphi 0, %s169
      %s173 = sphi 0, %s172
      %s189 = sphi 0, %s173
    $region4: #{tpu_custom_call.1} parent=1 // loop_header_branch
      %26 = sbr.rel (%p24) target = $region8
    $region5: #{tpu_custom_call.1} parent=1 // loop_body
      %s28 = ssub.s32 %s23, 1
      %s29 = ssub.s32 %s23, 2
      %s30 = sadd.s32 %s23, 1
      %s31 = ssub.s32 %s23, %s30
      %p32 = scmp.eq.s32.totalorder %s31, 0
      %s34 = sadd.s32 %s33, 1
      %s35 = scalar_select %p32, %s33, %s34
      %p38 = pneg %p32
      %p39 = scmp.eq.s32.totalorder %s23, 1
      %p40 = por %p38, %p39
      %p41 = scmp.ne.s32.totalorder %s33, %s36
      %p42 = scmp.eq.s32.totalorder %s23, 0
      %p43 = por %p41, %p42
      %p44 = scmp.ne.s32.totalorder %s33, %s36
      %p45 = scmp.eq.s32.totalorder %s28, 1
      %p46 = por %p44, %p45
      %p47 = scmp.ne.s32.totalorder %s36, %s37
      %p48 = scmp.eq.s32.totalorder %s28, 0
      %p49 = por %p47, %p48
      %p50 = scmp.ne.s32.totalorder %s36, %s37
      %p51 = scmp.eq.s32.totalorder %s29, 1
      %p52 = por %p50, %p51
      %p54 = scmp.ne.s32.totalorder %s37, %s53
      %p55 = scmp.eq.s32.totalorder %s29, 0
      %p56 = por %p54, %p55
      %s57 = ssub.s32 %s23, %s30
      %p58 = scmp.eq.s32.totalorder %s57, 0
      %s60 = sadd.s32 %s59, 1
      %s61 = scalar_select %p58, %s59, %s60
      %p64 = pneg %p58
      %p65 = scmp.eq.s32.totalorder %s23, 1
      %p66 = por %p64, %p65
      %p67 = scmp.ne.s32.totalorder %s59, %s62
      %p68 = scmp.eq.s32.totalorder %s23, 0
      %p69 = por %p67, %p68
      %p70 = scmp.ne.s32.totalorder %s59, %s62
      %p71 = scmp.eq.s32.totalorder %s28, 1
      %p72 = por %p70, %p71
      %p73 = scmp.ne.s32.totalorder %s62, %s63
      %p74 = scmp.eq.s32.totalorder %s28, 0
      %p75 = por %p73, %p74
      %p76 = scmp.ne.s32.totalorder %s62, %s63
      %p77 = scmp.eq.s32.totalorder %s29, 1
      %p78 = por %p76, %p77
      %p80 = scmp.ne.s32.totalorder %s63, %s79
      %p81 = scmp.eq.s32.totalorder %s29, 0
      %p82 = por %p80, %p81
      %s84 = sadd.s32 %s83, 1
      %p87 = scmp.eq.s32.totalorder %s23, 1
      %p88 = scmp.ne.s32.totalorder %s83, %s85
      %p89 = scmp.eq.s32.totalorder %s23, 0
      %p90 = por %p88, %p89
      %p91 = scmp.ne.s32.totalorder %s83, %s85
      %p92 = scmp.eq.s32.totalorder %s28, 1
      %p93 = por %p91, %p92
      %p94 = scmp.ne.s32.totalorder %s85, %s86
      %p95 = scmp.eq.s32.totalorder %s28, 0
      %p96 = por %p94, %p95
      %p97 = scmp.ne.s32.totalorder %s85, %s86
      %p98 = scmp.eq.s32.totalorder %s29, 1
      %p99 = por %p97, %p98
      %p101 = scmp.ne.s32.totalorder %s86, %s100
      %p102 = scmp.eq.s32.totalorder %s29, 0
      %p103 = por %p101, %p102
      %s105 = sadd.s32 %s104, 1
      %p108 = scmp.eq.s32.totalorder %s23, 1
      %p109 = scmp.ne.s32.totalorder %s104, %s106
      %p110 = scmp.eq.s32.totalorder %s23, 0
      %p111 = por %p109, %p110
      %p112 = scmp.ne.s32.totalorder %s104, %s106
      %p113 = scmp.eq.s32.totalorder %s28, 1
      %p114 = por %p112, %p113
      %p115 = scmp.ne.s32.totalorder %s106, %s107
      %p116 = scmp.eq.s32.totalorder %s28, 0
      %p117 = por %p115, %p116
      %p118 = scmp.ne.s32.totalorder %s106, %s107
      %p119 = scmp.eq.s32.totalorder %s29, 1
      %p120 = por %p118, %p119
      %p122 = scmp.ne.s32.totalorder %s107, %s121
      %p123 = scmp.eq.s32.totalorder %s29, 0
      %p124 = por %p122, %p123
      %s126 = sadd.s32 %s125, 1
      %p129 = scmp.eq.s32.totalorder %s23, 1
      %p130 = scmp.ne.s32.totalorder %s125, %s127
      %p131 = scmp.eq.s32.totalorder %s23, 0
      %p132 = por %p130, %p131
      %p133 = scmp.ne.s32.totalorder %s125, %s127
      %p134 = scmp.eq.s32.totalorder %s28, 1
      %p135 = por %p133, %p134
      %p136 = scmp.ne.s32.totalorder %s127, %s128
      %p137 = scmp.eq.s32.totalorder %s28, 0
      %p138 = por %p136, %p137
      %p139 = scmp.ne.s32.totalorder %s127, %s128
      %p140 = scmp.eq.s32.totalorder %s29, 1
      %p141 = por %p139, %p140
      %p143 = scmp.ne.s32.totalorder %s128, %s142
      %p144 = scmp.eq.s32.totalorder %s29, 0
      %p145 = por %p143, %p144
      %s147 = sadd.s32 %s146, 1
      %p150 = scmp.eq.s32.totalorder %s23, 1
      %p151 = scmp.ne.s32.totalorder %s146, %s148
      %p152 = scmp.eq.s32.totalorder %s23, 0
      %p153 = por %p151, %p152
      %p154 = scmp.ne.s32.totalorder %s146, %s148
      %p155 = scmp.eq.s32.totalorder %s28, 1
      %p156 = por %p154, %p155
      %p157 = scmp.ne.s32.totalorder %s148, %s149
      %p158 = scmp.eq.s32.totalorder %s28, 0
      %p159 = por %p157, %p158
      %p160 = scmp.ne.s32.totalorder %s148, %s149
      %p161 = scmp.eq.s32.totalorder %s29, 1
      %p162 = por %p160, %p161
      %p164 = scmp.ne.s32.totalorder %s149, %s163
      %p165 = scmp.eq.s32.totalorder %s29, 0
      %p166 = por %p164, %p165
      %s167 = ssub.s32 %s23, %s30
      %p168 = scmp.eq.s32.totalorder %s167, 0
      %s170 = sadd.s32 %s169, 1
      %s171 = scalar_select %p168, %s169, %s170
      %p174 = pneg %p168
      %p175 = scmp.eq.s32.totalorder %s23, 1
      %p176 = por %p174, %p175
      %p177 = scmp.ne.s32.totalorder %s169, %s172
      %p178 = scmp.eq.s32.totalorder %s23, 0
      %p179 = por %p177, %p178
      %p180 = scmp.ne.s32.totalorder %s169, %s172
      %p181 = scmp.eq.s32.totalorder %s28, 1
      %p182 = por %p180, %p181
      %p183 = scmp.ne.s32.totalorder %s172, %s173
      %p184 = scmp.eq.s32.totalorder %s28, 0
      %p185 = por %p183, %p184
      %p186 = scmp.ne.s32.totalorder %s172, %s173
      %p187 = scmp.eq.s32.totalorder %s29, 1
      %p188 = por %p186, %p187
      %p190 = scmp.ne.s32.totalorder %s173, %s189
      %p191 = scmp.eq.s32.totalorder %s29, 0
      %p192 = por %p190, %p191
      %p193 = scmp.le.s32.totalorder 1, %s23
      %p194 = scmp.lt.s32.totalorder %s23, 3
      %p195 = pnand %p193, %p194
      %p196 = pneg %p195
      // Predicated region
      $region9: #{tpu_custom_call.1} parent=5 // pred_check
        _
      $region10: #{tpu_custom_call.1} parent=5 // pred_check_branch
        %198 = sbr.rel (%p195) target = $region12
      $region11: #{tpu_custom_call.1} parent=5 // pred_region
        %s199 = ssub.s32 %s23, 1
        // Predicated region
        $region13: #{tpu_custom_call.1} parent=11 // pred_check
          %p200 = pneg %p96
        $region14: #{tpu_custom_call.1} parent=11 // pred_check_branch
          %202 = sbr.rel (%p200) target = $region16
        $region15: #{tpu_custom_call.1} parent=11 // pred_region
          %204 = vsyncadd [#allocation6], 0
          %s205 = sshll.u32 %s2, 4
          %s206 = int_to_ptr.hbm [resolvable:$true] %s205
          %s207 = sshll.u32 [#allocation7], 4
          %s208 = int_to_ptr.vmem [resolvable:$true] %s207
          %213 = dma.hbm_to_vmem [thread:$0]  %s206, 12288, %s208, [#allocation6], 192, 192, 12
        $region16: #{tpu_custom_call.1} parent=11 // pred_fallthru
          _
        // Predicated region
        $region17: #{tpu_custom_call.1} parent=11 // pred_check
          %p214 = pneg %p117
        $region18: #{tpu_custom_call.1} parent=11 // pred_check_branch
          %216 = sbr.rel (%p214) target = $region20
        $region19: #{tpu_custom_call.1} parent=11 // pred_region
          %218 = vsyncadd [#allocation9], 0
          %s219 = sshll.u32 %s3, 4
          %s220 = int_to_ptr.hbm [resolvable:$true] %s219
          %s221 = sshll.u32 [#allocation8], 4
          %s222 = int_to_ptr.vmem [resolvable:$true] %s221
          %227 = dma.hbm_to_vmem [thread:$0]  %s220, 2048, %s222, [#allocation9], 64, 64, 4
        $region20: #{tpu_custom_call.1} parent=11 // pred_fallthru
          _
        // Predicated region
        $region21: #{tpu_custom_call.1} parent=11 // pred_check
          %p228 = pneg %p138
        $region22: #{tpu_custom_call.1} parent=11 // pred_check_branch
          %230 = sbr.rel (%p228) target = $region24
        $region23: #{tpu_custom_call.1} parent=11 // pred_region
          %232 = vsyncadd [#allocation9], 0
          %s233 = sshll.u32 %s4, 4
          %s234 = int_to_ptr.hbm [resolvable:$true] %s233
          %s235 = sshll.u32 [#allocation10], 4
          %s236 = int_to_ptr.vmem [resolvable:$true] %s235
          %241 = dma.hbm_to_vmem [thread:$0]  %s234, 1024, %s236, [#allocation9], 64, 64, 4
        $region24: #{tpu_custom_call.1} parent=11 // pred_fallthru
          _
        // Predicated region
        $region25: #{tpu_custom_call.1} parent=11 // pred_check
          %p242 = pneg %p159
        $region26: #{tpu_custom_call.1} parent=11 // pred_check_branch
          %244 = sbr.rel (%p242) target = $region28
        $region27: #{tpu_custom_call.1} parent=11 // pred_region
          %246 = vsyncadd [#allocation12], 0
          %s248 = sshll.u32 %s5, 4
          %s249 = int_to_ptr.hbm [resolvable:$true] %s248
          %s250 = sshll.u32 [#allocation11], 4
          %s251 = int_to_ptr.vmem [resolvable:$true] %s250
          %253 = dma.hbm_to_vmem [thread:$0]  %s249, 128, %s251, [#allocation12]
        $region28: #{tpu_custom_call.1} parent=11 // pred_fallthru
          _
      $region12: #{tpu_custom_call.1} parent=5 // pred_fallthru
        _
      %p254 = scmp.lt.s32.totalorder %s23, 2
      // Predicated region
      $region29: #{tpu_custom_call.1} parent=5 // pred_check
        %p255 = pneg %p254
      $region30: #{tpu_custom_call.1} parent=5 // pred_check_branch
        %257 = sbr.rel (%p255) target = $region32
      $region31: #{tpu_custom_call.1} parent=5 // pred_region
        // Predicated region
        $region33: #{tpu_custom_call.1} parent=31 // pred_check
          %p258 = pneg %p43
        $region34: #{tpu_custom_call.1} parent=31 // pred_check_branch
          %260 = sbr.rel (%p258) target = $region36
        $region35: #{tpu_custom_call.1} parent=31 // pred_region
          %s261 = sand.u32 %s33, 1
          %s262 = scalar_lea.sflag [#allocation3], %s261
          %s263 = sand.u32 %s33, 1
          %s264 = smul.addr %s263, 16
          %s265 = scalar_lea.vmem [#allocation2], %s264
          %s266 = smul.u32 4, %s23
          %268 = vsyncadd %s262, 0
          %s269 = smul.addr %s266, 4
          %s270 = scalar_lea.hbm %s0, %s269
          %s271 = sshll.u32 %s270, 4
          %s272 = int_to_ptr.hbm [resolvable:$true] %s271
          %s273 = sshll.u32 %s265, 4
          %s274 = int_to_ptr.vmem [resolvable:$true] %s273
          %279 = dma.hbm_to_vmem [thread:$0]  %s272, 256, %s274, %s262, 64, 64, 4
        $region36: #{tpu_custom_call.1} parent=31 // pred_fallthru
          _
        // Predicated region
        $region37: #{tpu_custom_call.1} parent=31 // pred_check
          %p280 = pneg %p69
        $region38: #{tpu_custom_call.1} parent=31 // pred_check_branch
          %282 = sbr.rel (%p280) target = $region40
        $region39: #{tpu_custom_call.1} parent=31 // pred_region
          %s283 = sand.u32 %s23, 1
          %s284 = scalar_lea.sflag [#allocation6], %s283
          %s285 = sand.u32 %s59, 1
          %s286 = smul.addr %s285, 512
          %s287 = scalar_lea.vmem [#allocation5], %s286
          %s288 = smul.u32 32, %s23
          %290 = vsyncadd %s284, 0
          %s291 = smul.addr %s288, 4
          %s292 = smul.addr %s291, 4
          %s293 = scalar_lea.hbm %s1, %s292
          %s294 = sshll.u32 %s293, 4
          %s295 = int_to_ptr.hbm [resolvable:$true] %s294
          %s296 = sshll.u32 %s287, 4
          %s297 = int_to_ptr.vmem [resolvable:$true] %s296
          %302 = dma.hbm_to_vmem [thread:$0]  %s295, 8192, %s297, %s284, 256, 256, 16
        $region40: #{tpu_custom_call.1} parent=31 // pred_fallthru
          _
      $region32: #{tpu_custom_call.1} parent=5 // pred_fallthru
        _
      %p303 = scmp.le.s32.totalorder 1, %s23
      %p304 = scmp.lt.s32.totalorder %s23, 3
      %p305 = pnand %p303, %p304
      %p306 = pneg %p305
      // Predicated region
      $region41: #{tpu_custom_call.1} parent=5 // pred_check
        _
      $region42: #{tpu_custom_call.1} parent=5 // pred_check_branch
        %308 = sbr.rel (%p305) target = $region44
      $region43: #{tpu_custom_call.1} parent=5 // pred_region
        %s309 = ssub.s32 %s23, 1
        %s310 = sand.u32 %s36, 1
        %s311 = scalar_lea.sflag [#allocation3], %s310
        %s312 = sand.u32 %s36, 1
        %s313 = smul.addr %s312, 16
        %s314 = scalar_lea.vmem [#allocation2], %s313
        // Predicated region
        $region45: #{tpu_custom_call.1} parent=43 // pred_check
          %p315 = pneg %p49
        $region46: #{tpu_custom_call.1} parent=43 // pred_check_branch
          %317 = sbr.rel (%p315) target = $region48
        $region47: #{tpu_custom_call.1} parent=43 // pred_region
          %319 = dma.done %s311, 256
        $region48: #{tpu_custom_call.1} parent=43 // pred_fallthru
          _
        %s320 = sand.u32 %s28, 1
        %s321 = scalar_lea.sflag [#allocation6], %s320
        %s322 = sand.u32 %s62, 1
        %s323 = smul.addr %s322, 512
        %s324 = scalar_lea.vmem [#allocation5], %s323
        // Predicated region
        $region49: #{tpu_custom_call.1} parent=43 // pred_check
          %p325 = pneg %p75
        $region50: #{tpu_custom_call.1} parent=43 // pred_check_branch
          %327 = sbr.rel (%p325) target = $region52
        $region51: #{tpu_custom_call.1} parent=43 // pred_region
          %329 = dma.done %s321, 8192
        $region52: #{tpu_custom_call.1} parent=43 // pred_fallthru
          _
        // Predicated region
        $region53: #{tpu_custom_call.1} parent=43 // pred_check
          %p330 = pneg %p96
        $region54: #{tpu_custom_call.1} parent=43 // pred_check_branch
          %332 = sbr.rel (%p330) target = $region56
        $region55: #{tpu_custom_call.1} parent=43 // pred_region
          %334 = dma.done [#allocation6], 12288
        $region56: #{tpu_custom_call.1} parent=43 // pred_fallthru
          _
        // Predicated region
        $region57: #{tpu_custom_call.1} parent=43 // pred_check
          %p335 = pneg %p117
        $region58: #{tpu_custom_call.1} parent=43 // pred_check_branch
          %337 = sbr.rel (%p335) target = $region60
        $region59: #{tpu_custom_call.1} parent=43 // pred_region
          %339 = dma.done [#allocation9], 2048
        $region60: #{tpu_custom_call.1} parent=43 // pred_fallthru
          _
        // Predicated region
        $region61: #{tpu_custom_call.1} parent=43 // pred_check
          %p340 = pneg %p138
        $region62: #{tpu_custom_call.1} parent=43 // pred_check_branch
          %342 = sbr.rel (%p340) target = $region64
        $region63: #{tpu_custom_call.1} parent=43 // pred_region
          %344 = dma.done [#allocation9], 1024
        $region64: #{tpu_custom_call.1} parent=43 // pred_fallthru
          _
        // Predicated region
        $region65: #{tpu_custom_call.1} parent=43 // pred_check
          %p345 = pneg %p159
        $region66: #{tpu_custom_call.1} parent=43 // pred_check_branch
          %347 = sbr.rel (%p345) target = $region68
        $region67: #{tpu_custom_call.1} parent=43 // pred_region
          %349 = dma.done [#allocation12], 128
        $region68: #{tpu_custom_call.1} parent=43 // pred_fallthru
          _
        %s350 = sand.u32 %s36, 1
        %s351 = scalar_lea.sflag [#allocation3], %s350
        %s352 = sand.u32 %s36, 1
        %s353 = smul.addr %s352, 16
        %s354 = scalar_lea.vmem [#allocation2], %s353
        %p355 = pneg %p49
        %p356 = pneg %p46
        %s357 = sand.u32 %s28, 1
        %s358 = scalar_lea.sflag [#allocation6], %s357
        %s359 = sand.u32 %s62, 1
        %s360 = smul.addr %s359, 512
        %s361 = scalar_lea.vmem [#allocation5], %s360
        %p362 = pneg %p75
        %p363 = pneg %p72
        %p364 = pneg %p96
        %p365 = pneg %p93
        %p366 = pneg %p117
        %p367 = pneg %p114
        %p368 = pneg %p138
        %p369 = pneg %p135
        %p370 = pneg %p159
        %p371 = pneg %p156
        %p372 = pneg %p185
        %p373 = pneg %p182
        %s374 = sand.u32 %s172, 1
        %s375 = scalar_lea.sflag [#allocation4], %s374
        %s376 = sand.u32 %s172, 1
        %s377 = smul.addr %s376, 32
        %s378 = scalar_lea.vmem [#allocation13], %s377
        %s379 = smul.u32 4, %s28
        %s380 = smul.u32 32, %s28
        %s381 = smul.u32 4, %s28
        %v382 = vld [vmem:[#allocation11] sm:$0xff]
        %v383 = vld [vmem:[%s324] sm:$0xff]
        %v384 = vld [vmem:[%s324 + $0x8] sm:$0xff]
        %v385 = vld [vmem:[%s324 + $0x10] sm:$0xff]
        %v386 = vld [vmem:[%s324 + $0x18] sm:$0xff]
        %v387 = vld [vmem:[%s324 + $0x20] sm:$0xff]
        %v388 = vld [vmem:[%s324 + $0x28] sm:$0xff]
        %v389 = vld [vmem:[%s324 + $0x30] sm:$0xff]
        %v390 = vld [vmem:[%s324 + $0x38] sm:$0xff]
        %v391 = vld [vmem:[%s324 + $0x40] sm:$0xff]
        %v392 = vld [vmem:[%s324 + $0x48] sm:$0xff]
        %v393 = vld [vmem:[%s324 + $0x50] sm:$0xff]
        %v394 = vld [vmem:[%s324 + $0x58] sm:$0xff]
        %v395 = vld [vmem:[%s324 + $0x60] sm:$0xff]
        %v396 = vld [vmem:[%s324 + $0x68] sm:$0xff]
        %v397 = vld [vmem:[%s324 + $0x70] sm:$0xff]
        %v398 = vld [vmem:[%s324 + $0x78] sm:$0xff]
        %v399 = vld [vmem:[%s324 + $0x80] sm:$0xff]
        %v400 = vld [vmem:[%s324 + $0x88] sm:$0xff]
        %v401 = vld [vmem:[%s324 + $0x90] sm:$0xff]
        %v402 = vld [vmem:[%s324 + $0x98] sm:$0xff]
        %v403 = vld [vmem:[%s324 + $0xa0] sm:$0xff]
        %v404 = vld [vmem:[%s324 + $0xa8] sm:$0xff]
        %v405 = vld [vmem:[%s324 + $0xb0] sm:$0xff]
        %v406 = vld [vmem:[%s324 + $0xb8] sm:$0xff]
        %v407 = vld [vmem:[%s324 + $0xc0] sm:$0xff]
        %v408 = vld [vmem:[%s324 + $0xc8] sm:$0xff]
        %v409 = vld [vmem:[%s324 + $0xd0] sm:$0xff]
        %v410 = vld [vmem:[%s324 + $0xd8] sm:$0xff]
        %v411 = vld [vmem:[%s324 + $0xe0] sm:$0xff]
        %v412 = vld [vmem:[%s324 + $0xe8] sm:$0xff]
        %v413 = vld [vmem:[%s324 + $0xf0] sm:$0xff]
        %v414 = vld [vmem:[%s324 + $0xf8] sm:$0xff]
        %v415 = vld [vmem:[%s324 + $0x100] sm:$0xff]
        %v416 = vld [vmem:[%s324 + $0x108] sm:$0xff]
        %v417 = vld [vmem:[%s324 + $0x110] sm:$0xff]
        %v418 = vld [vmem:[%s324 + $0x118] sm:$0xff]
        %v419 = vld [vmem:[%s324 + $0x120] sm:$0xff]
        %v420 = vld [vmem:[%s324 + $0x128] sm:$0xff]
        %v421 = vld [vmem:[%s324 + $0x130] sm:$0xff]
        %v422 = vld [vmem:[%s324 + $0x138] sm:$0xff]
        %v423 = vld [vmem:[%s324 + $0x140] sm:$0xff]
        %v424 = vld [vmem:[%s324 + $0x148] sm:$0xff]
        %v425 = vld [vmem:[%s324 + $0x150] sm:$0xff]
        %v426 = vld [vmem:[%s324 + $0x158] sm:$0xff]
        %v427 = vld [vmem:[%s324 + $0x160] sm:$0xff]
        %v428 = vld [vmem:[%s324 + $0x168] sm:$0xff]
        %v429 = vld [vmem:[%s324 + $0x170] sm:$0xff]
        %v430 = vld [vmem:[%s324 + $0x178] sm:$0xff]
        %v431 = vld [vmem:[%s324 + $0x180] sm:$0xff]
        %v432 = vld [vmem:[%s324 + $0x188] sm:$0xff]
        %v433 = vld [vmem:[%s324 + $0x190] sm:$0xff]
        %v434 = vld [vmem:[%s324 + $0x198] sm:$0xff]
        %v435 = vld [vmem:[%s324 + $0x1a0] sm:$0xff]
        %v436 = vld [vmem:[%s324 + $0x1a8] sm:$0xff]
        %v437 = vld [vmem:[%s324 + $0x1b0] sm:$0xff]
        %v438 = vld [vmem:[%s324 + $0x1b8] sm:$0xff]
        %v439 = vld [vmem:[%s324 + $0x1c0] sm:$0xff]
        %v440 = vld [vmem:[%s324 + $0x1c8] sm:$0xff]
        %v441 = vld [vmem:[%s324 + $0x1d0] sm:$0xff]
        %v442 = vld [vmem:[%s324 + $0x1d8] sm:$0xff]
        %v443 = vld [vmem:[%s324 + $0x1e0] sm:$0xff]
        %v444 = vld [vmem:[%s324 + $0x1e8] sm:$0xff]
        %v445 = vld [vmem:[%s324 + $0x1f0] sm:$0xff]
        %v446 = vld [vmem:[%s324 + $0x1f8] sm:$0xff]
        %v447 = vld [vmem:[#allocation7] sm:$0xff]
        %v448 = vld [vmem:[#allocation7 + $0x8] sm:$0xf]
        %v449 = vld [vmem:[#allocation7 + $0xc] sm:$0xff]
        %v450 = vld [vmem:[#allocation7 + $0x14] sm:$0xf]
        %v451 = vld [vmem:[#allocation7 + $0x18] sm:$0xff]
        %v452 = vld [vmem:[#allocation7 + $0x20] sm:$0xf]
        %v453 = vld [vmem:[#allocation7 + $0x24] sm:$0xff]
        %v454 = vld [vmem:[#allocation7 + $0x2c] sm:$0xf]
        %v455 = vld [vmem:[#allocation7 + $0x30] sm:$0xff]
        %v456 = vld [vmem:[#allocation7 + $0x38] sm:$0xf]
        %v457 = vld [vmem:[#allocation7 + $0x3c] sm:$0xff]
        %v458 = vld [vmem:[#allocation7 + $0x44] sm:$0xf]
        %v459 = vld [vmem:[#allocation7 + $0x48] sm:$0xff]
        %v460 = vld [vmem:[#allocation7 + $0x50] sm:$0xf]
        %v461 = vld [vmem:[#allocation7 + $0x54] sm:$0xff]
        %v462 = vld [vmem:[#allocation7 + $0x5c] sm:$0xf]
        %v463 = vld [vmem:[#allocation7 + $0x60] sm:$0xff]
        %v464 = vld [vmem:[#allocation7 + $0x68] sm:$0xf]
        %v465 = vld [vmem:[#allocation7 + $0x6c] sm:$0xff]
        %v466 = vld [vmem:[#allocation7 + $0x74] sm:$0xf]
        %v467 = vld [vmem:[#allocation7 + $0x78] sm:$0xff]
        %v468 = vld [vmem:[#allocation7 + $0x80] sm:$0xf]
        %v469 = vld [vmem:[#allocation7 + $0x84] sm:$0xff]
        %v470 = vld [vmem:[#allocation7 + $0x8c] sm:$0xf]
        %v471 = vld [vmem:[#allocation7 + $0x90] sm:$0xff]
        %v472 = vld [vmem:[#allocation7 + $0x98] sm:$0xf]
        %v473 = vld [vmem:[#allocation7 + $0x9c] sm:$0xff]
        %v474 = vld [vmem:[#allocation7 + $0xa4] sm:$0xf]
        %v475 = vld [vmem:[#allocation7 + $0xa8] sm:$0xff]
        %v476 = vld [vmem:[#allocation7 + $0xb0] sm:$0xf]
        %v477 = vld [vmem:[#allocation7 + $0xb4] sm:$0xff]
        %v478 = vld [vmem:[#allocation7 + $0xbc] sm:$0xf]
        %v479 = vld [vmem:[#allocation7 + $0xc0] sm:$0xff]
        %v480 = vld [vmem:[#allocation7 + $0xc8] sm:$0xf]
        %v481 = vld [vmem:[#allocation7 + $0xcc] sm:$0xff]
        %v482 = vld [vmem:[#allocation7 + $0xd4] sm:$0xf]
        %v483 = vld [vmem:[#allocation7 + $0xd8] sm:$0xff]
        %v484 = vld [vmem:[#allocation7 + $0xe0] sm:$0xf]
        %v485 = vld [vmem:[#allocation7 + $0xe4] sm:$0xff]
        %v486 = vld [vmem:[#allocation7 + $0xec] sm:$0xf]
        %v487 = vld [vmem:[#allocation7 + $0xf0] sm:$0xff]
        %v488 = vld [vmem:[#allocation7 + $0xf8] sm:$0xf]
        %v489 = vld [vmem:[#allocation7 + $0xfc] sm:$0xff]
        %v490 = vld [vmem:[#allocation7 + $0x104] sm:$0xf]
        %v491 = vld [vmem:[#allocation7 + $0x108] sm:$0xff]
        %v492 = vld [vmem:[#allocation7 + $0x110] sm:$0xf]
        %v493 = vld [vmem:[#allocation7 + $0x114] sm:$0xff]
        %v494 = vld [vmem:[#allocation7 + $0x11c] sm:$0xf]
        %v495 = vld [vmem:[#allocation7 + $0x120] sm:$0xff]
        %v496 = vld [vmem:[#allocation7 + $0x128] sm:$0xf]
        %v497 = vld [vmem:[#allocation7 + $0x12c] sm:$0xff]
        %v498 = vld [vmem:[#allocation7 + $0x134] sm:$0xf]
        %v499 = vld [vmem:[#allocation7 + $0x138] sm:$0xff]
        %v500 = vld [vmem:[#allocation7 + $0x140] sm:$0xf]
        %v501 = vld [vmem:[#allocation7 + $0x144] sm:$0xff]
        %v502 = vld [vmem:[#allocation7 + $0x14c] sm:$0xf]
        %v503 = vld [vmem:[#allocation7 + $0x150] sm:$0xff]
        %v504 = vld [vmem:[#allocation7 + $0x158] sm:$0xf]
        %v505 = vld [vmem:[#allocation7 + $0x15c] sm:$0xff]
        %v506 = vld [vmem:[#allocation7 + $0x164] sm:$0xf]
        %v507 = vld [vmem:[#allocation7 + $0x168] sm:$0xff]
        %v508 = vld [vmem:[#allocation7 + $0x170] sm:$0xf]
        %v509 = vld [vmem:[#allocation7 + $0x174] sm:$0xff]
        %v510 = vld [vmem:[#allocation7 + $0x17c] sm:$0xf]
        %v511 = vld [vmem:[#allocation7 + $0x180] sm:$0xff]
        %v512 = vld [vmem:[#allocation7 + $0x188] sm:$0xf]
        %v513 = vld [vmem:[#allocation7 + $0x18c] sm:$0xff]
        %v514 = vld [vmem:[#allocation7 + $0x194] sm:$0xf]
        %v515 = vld [vmem:[#allocation7 + $0x198] sm:$0xff]
        %v516 = vld [vmem:[#allocation7 + $0x1a0] sm:$0xf]
        %v517 = vld [vmem:[#allocation7 + $0x1a4] sm:$0xff]
        %v518 = vld [vmem:[#allocation7 + $0x1ac] sm:$0xf]
        %v519 = vld [vmem:[#allocation7 + $0x1b0] sm:$0xff]
        %v520 = vld [vmem:[#allocation7 + $0x1b8] sm:$0xf]
        %v521 = vld [vmem:[#allocation7 + $0x1bc] sm:$0xff]
        %v522 = vld [vmem:[#allocation7 + $0x1c4] sm:$0xf]
        %v523 = vld [vmem:[#allocation7 + $0x1c8] sm:$0xff]
        %v524 = vld [vmem:[#allocation7 + $0x1d0] sm:$0xf]
        %v525 = vld [vmem:[#allocation7 + $0x1d4] sm:$0xff]
        %v526 = vld [vmem:[#allocation7 + $0x1dc] sm:$0xf]
        %v527 = vld [vmem:[#allocation7 + $0x1e0] sm:$0xff]
        %v528 = vld [vmem:[#allocation7 + $0x1e8] sm:$0xf]
        %v529 = vld [vmem:[#allocation7 + $0x1ec] sm:$0xff]
        %v530 = vld [vmem:[#allocation7 + $0x1f4] sm:$0xf]
        %v531 = vld [vmem:[#allocation7 + $0x1f8] sm:$0xff]
        %v532 = vld [vmem:[#allocation7 + $0x200] sm:$0xf]
        %v533 = vld [vmem:[#allocation7 + $0x204] sm:$0xff]
        %v534 = vld [vmem:[#allocation7 + $0x20c] sm:$0xf]
        %v535 = vld [vmem:[#allocation7 + $0x210] sm:$0xff]
        %v536 = vld [vmem:[#allocation7 + $0x218] sm:$0xf]
        %v537 = vld [vmem:[#allocation7 + $0x21c] sm:$0xff]
        %v538 = vld [vmem:[#allocation7 + $0x224] sm:$0xf]
        %v539 = vld [vmem:[#allocation7 + $0x228] sm:$0xff]
        %v540 = vld [vmem:[#allocation7 + $0x230] sm:$0xf]
        %v541 = vld [vmem:[#allocation7 + $0x234] sm:$0xff]
        %v542 = vld [vmem:[#allocation7 + $0x23c] sm:$0xf]
        %v543 = vld [vmem:[#allocation7 + $0x240] sm:$0xff]
        %v544 = vld [vmem:[#allocation7 + $0x248] sm:$0xf]
        %v545 = vld [vmem:[#allocation7 + $0x24c] sm:$0xff]
        %v546 = vld [vmem:[#allocation7 + $0x254] sm:$0xf]
        %v547 = vld [vmem:[#allocation7 + $0x258] sm:$0xff]
        %v548 = vld [vmem:[#allocation7 + $0x260] sm:$0xf]
        %v549 = vld [vmem:[#allocation7 + $0x264] sm:$0xff]
        %v550 = vld [vmem:[#allocation7 + $0x26c] sm:$0xf]
        %v551 = vld [vmem:[#allocation7 + $0x270] sm:$0xff]
        %v552 = vld [vmem:[#allocation7 + $0x278] sm:$0xf]
        %v553 = vld [vmem:[#allocation7 + $0x27c] sm:$0xff]
        %v554 = vld [vmem:[#allocation7 + $0x284] sm:$0xf]
        %v555 = vld [vmem:[#allocation7 + $0x288] sm:$0xff]
        %v556 = vld [vmem:[#allocation7 + $0x290] sm:$0xf]
        %v557 = vld [vmem:[#allocation7 + $0x294] sm:$0xff]
        %v558 = vld [vmem:[#allocation7 + $0x29c] sm:$0xf]
        %v559 = vld [vmem:[#allocation7 + $0x2a0] sm:$0xff]
        %v560 = vld [vmem:[#allocation7 + $0x2a8] sm:$0xf]
        %v561 = vld [vmem:[#allocation7 + $0x2ac] sm:$0xff]
        %v562 = vld [vmem:[#allocation7 + $0x2b4] sm:$0xf]
        %v563 = vld [vmem:[#allocation7 + $0x2b8] sm:$0xff]
        %v564 = vld [vmem:[#allocation7 + $0x2c0] sm:$0xf]
        %v565 = vld [vmem:[#allocation7 + $0x2c4] sm:$0xff]
        %v566 = vld [vmem:[#allocation7 + $0x2cc] sm:$0xf]
        %v567 = vld [vmem:[#allocation7 + $0x2d0] sm:$0xff]
        %v568 = vld [vmem:[#allocation7 + $0x2d8] sm:$0xf]
        %v569 = vld [vmem:[#allocation7 + $0x2dc] sm:$0xff]
        %v570 = vld [vmem:[#allocation7 + $0x2e4] sm:$0xf]
        %v571 = vld [vmem:[#allocation7 + $0x2e8] sm:$0xff]
        %v572 = vld [vmem:[#allocation7 + $0x2f0] sm:$0xf]
        %v573 = vld [vmem:[#allocation7 + $0x2f4] sm:$0xff]
        %v574 = vld [vmem:[#allocation7 + $0x2fc] sm:$0xf]
        %v639 = vunpack.c.l.b16 %v383
        %v640 = vunpack.c.h.b16 %v383
        %v641 = vunpack.c.l.b16 %v384
        %v642 = vunpack.c.h.b16 %v384
        %v643 = vunpack.c.l.b16 %v385
        %v644 = vunpack.c.h.b16 %v385
        %v645 = vunpack.c.l.b16 %v386
        %v646 = vunpack.c.h.b16 %v386
        %v647 = vunpack.c.l.b16 %v387
        %v648 = vunpack.c.h.b16 %v387
        %v649 = vunpack.c.l.b16 %v388
        %v650 = vunpack.c.h.b16 %v388
        %v651 = vunpack.c.l.b16 %v389
        %v652 = vunpack.c.h.b16 %v389
        %v653 = vunpack.c.l.b16 %v390
        %v654 = vunpack.c.h.b16 %v390
        %v655 = vunpack.c.l.b16 %v391
        %v656 = vunpack.c.h.b16 %v391
        %v657 = vunpack.c.l.b16 %v392
        %v658 = vunpack.c.h.b16 %v392
        %v659 = vunpack.c.l.b16 %v393
        %v660 = vunpack.c.h.b16 %v393
        %v661 = vunpack.c.l.b16 %v394
        %v662 = vunpack.c.h.b16 %v394
        %v663 = vunpack.c.l.b16 %v395
        %v664 = vunpack.c.h.b16 %v395
        %v665 = vunpack.c.l.b16 %v396
        %v666 = vunpack.c.h.b16 %v396
        %v667 = vunpack.c.l.b16 %v397
        %v668 = vunpack.c.h.b16 %v397
        %v669 = vunpack.c.l.b16 %v398
        %v670 = vunpack.c.h.b16 %v398
        %v671 = vunpack.c.l.b16 %v399
        %v672 = vunpack.c.h.b16 %v399
        %v673 = vunpack.c.l.b16 %v400
        %v674 = vunpack.c.h.b16 %v400
        %v675 = vunpack.c.l.b16 %v401
        %v676 = vunpack.c.h.b16 %v401
        %v677 = vunpack.c.l.b16 %v402
        %v678 = vunpack.c.h.b16 %v402
        %v679 = vunpack.c.l.b16 %v403
        %v680 = vunpack.c.h.b16 %v403
        %v681 = vunpack.c.l.b16 %v404
        %v682 = vunpack.c.h.b16 %v404
        %v683 = vunpack.c.l.b16 %v405
        %v684 = vunpack.c.h.b16 %v405
        %v685 = vunpack.c.l.b16 %v406
        %v686 = vunpack.c.h.b16 %v406
        %v687 = vunpack.c.l.b16 %v407
        %v688 = vunpack.c.h.b16 %v407
        %v689 = vunpack.c.l.b16 %v408
        %v690 = vunpack.c.h.b16 %v408
        %v691 = vunpack.c.l.b16 %v409
        %v692 = vunpack.c.h.b16 %v409
        %v693 = vunpack.c.l.b16 %v410
        %v694 = vunpack.c.h.b16 %v410
        %v695 = vunpack.c.l.b16 %v411
        %v696 = vunpack.c.h.b16 %v411
        %v697 = vunpack.c.l.b16 %v412
        %v698 = vunpack.c.h.b16 %v412
        %v699 = vunpack.c.l.b16 %v413
        %v700 = vunpack.c.h.b16 %v413
        %v701 = vunpack.c.l.b16 %v414
        %v702 = vunpack.c.h.b16 %v414
        %v703 = vunpack.c.l.b16 %v415
        %v704 = vunpack.c.h.b16 %v415
        %v705 = vunpack.c.l.b16 %v416
        %v706 = vunpack.c.h.b16 %v416
        %v707 = vunpack.c.l.b16 %v417
        %v708 = vunpack.c.h.b16 %v417
        %v709 = vunpack.c.l.b16 %v418
        %v710 = vunpack.c.h.b16 %v418
        %v711 = vunpack.c.l.b16 %v419
        %v712 = vunpack.c.h.b16 %v419
        %v713 = vunpack.c.l.b16 %v420
        %v714 = vunpack.c.h.b16 %v420
        %v715 = vunpack.c.l.b16 %v421
        %v716 = vunpack.c.h.b16 %v421
        %v717 = vunpack.c.l.b16 %v422
        %v718 = vunpack.c.h.b16 %v422
        %v719 = vunpack.c.l.b16 %v423
        %v720 = vunpack.c.h.b16 %v423
        %v721 = vunpack.c.l.b16 %v424
        %v722 = vunpack.c.h.b16 %v424
        %v723 = vunpack.c.l.b16 %v425
        %v724 = vunpack.c.h.b16 %v425
        %v725 = vunpack.c.l.b16 %v426
        %v726 = vunpack.c.h.b16 %v426
        %v727 = vunpack.c.l.b16 %v427
        %v728 = vunpack.c.h.b16 %v427
        %v729 = vunpack.c.l.b16 %v428
        %v730 = vunpack.c.h.b16 %v428
        %v731 = vunpack.c.l.b16 %v429
        %v732 = vunpack.c.h.b16 %v429
        %v733 = vunpack.c.l.b16 %v430
        %v734 = vunpack.c.h.b16 %v430
        %v735 = vunpack.c.l.b16 %v431
        %v736 = vunpack.c.h.b16 %v431
        %v737 = vunpack.c.l.b16 %v432
        %v738 = vunpack.c.h.b16 %v432
        %v739 = vunpack.c.l.b16 %v433
        %v740 = vunpack.c.h.b16 %v433
        %v741 = vunpack.c.l.b16 %v434
        %v742 = vunpack.c.h.b16 %v434
        %v743 = vunpack.c.l.b16 %v435
        %v744 = vunpack.c.h.b16 %v435
        %v745 = vunpack.c.l.b16 %v436
        %v746 = vunpack.c.h.b16 %v436
        %v747 = vunpack.c.l.b16 %v437
        %v748 = vunpack.c.h.b16 %v437
        %v749 = vunpack.c.l.b16 %v438
        %v750 = vunpack.c.h.b16 %v438
        %v751 = vunpack.c.l.b16 %v439
        %v752 = vunpack.c.h.b16 %v439
        %v753 = vunpack.c.l.b16 %v440
        %v754 = vunpack.c.h.b16 %v440
        %v755 = vunpack.c.l.b16 %v441
        %v756 = vunpack.c.h.b16 %v441
        %v757 = vunpack.c.l.b16 %v442
        %v758 = vunpack.c.h.b16 %v442
        %v759 = vunpack.c.l.b16 %v443
        %v760 = vunpack.c.h.b16 %v443
        %v761 = vunpack.c.l.b16 %v444
        %v762 = vunpack.c.h.b16 %v444
        %v763 = vunpack.c.l.b16 %v445
        %v764 = vunpack.c.h.b16 %v445
        %v765 = vunpack.c.l.b16 %v446
        %v766 = vunpack.c.h.b16 %v446
        %v767 = vpack.c.b16 %v643, %v639
        %v768 = vpack.c.b16 %v644, %v640
        %v769 = vpack.c.b16 %v645, %v641
        %v770 = vpack.c.b16 %v646, %v642
        %v771 = vpack.c.b16 %v651, %v647
        %v772 = vpack.c.b16 %v652, %v648
        %v773 = vpack.c.b16 %v653, %v649
        %v774 = vpack.c.b16 %v654, %v650
        %v775 = vpack.c.b16 %v659, %v655
        %v776 = vpack.c.b16 %v660, %v656
        %v777 = vpack.c.b16 %v661, %v657
        %v778 = vpack.c.b16 %v662, %v658
        %v779 = vpack.c.b16 %v667, %v663
        %v780 = vpack.c.b16 %v668, %v664
        %v781 = vpack.c.b16 %v669, %v665
        %v782 = vpack.c.b16 %v670, %v666
        %v783 = vpack.c.b16 %v675, %v671
        %v784 = vpack.c.b16 %v676, %v672
        %v785 = vpack.c.b16 %v677, %v673
        %v786 = vpack.c.b16 %v678, %v674
        %v787 = vpack.c.b16 %v683, %v679
        %v788 = vpack.c.b16 %v684, %v680
        %v789 = vpack.c.b16 %v685, %v681
        %v790 = vpack.c.b16 %v686, %v682
        %v791 = vpack.c.b16 %v691, %v687
        %v792 = vpack.c.b16 %v692, %v688
        %v793 = vpack.c.b16 %v693, %v689
        %v794 = vpack.c.b16 %v694, %v690
        %v795 = vpack.c.b16 %v699, %v695
        %v796 = vpack.c.b16 %v700, %v696
        %v797 = vpack.c.b16 %v701, %v697
        %v798 = vpack.c.b16 %v702, %v698
        %v799 = vpack.c.b16 %v707, %v703
        %v800 = vpack.c.b16 %v708, %v704
        %v801 = vpack.c.b16 %v709, %v705
        %v802 = vpack.c.b16 %v710, %v706
        %v803 = vpack.c.b16 %v715, %v711
        %v804 = vpack.c.b16 %v716, %v712
        %v805 = vpack.c.b16 %v717, %v713
        %v806 = vpack.c.b16 %v718, %v714
        %v807 = vpack.c.b16 %v723, %v719
        %v808 = vpack.c.b16 %v724, %v720
        %v809 = vpack.c.b16 %v725, %v721
        %v810 = vpack.c.b16 %v726, %v722
        %v811 = vpack.c.b16 %v731, %v727
        %v812 = vpack.c.b16 %v732, %v728
        %v813 = vpack.c.b16 %v733, %v729
        %v814 = vpack.c.b16 %v734, %v730
        %v815 = vpack.c.b16 %v739, %v735
        %v816 = vpack.c.b16 %v740, %v736
        %v817 = vpack.c.b16 %v741, %v737
        %v818 = vpack.c.b16 %v742, %v738
        %v819 = vpack.c.b16 %v747, %v743
        %v820 = vpack.c.b16 %v748, %v744
        %v821 = vpack.c.b16 %v749, %v745
        %v822 = vpack.c.b16 %v750, %v746
        %v823 = vpack.c.b16 %v755, %v751
        %v824 = vpack.c.b16 %v756, %v752
        %v825 = vpack.c.b16 %v757, %v753
        %v826 = vpack.c.b16 %v758, %v754
        %v827 = vpack.c.b16 %v763, %v759
        %v828 = vpack.c.b16 %v764, %v760
        %v829 = vpack.c.b16 %v765, %v761
        %v830 = vpack.c.b16 %v766, %v762
        %v1023 = vunpack.c.l.b16 %v447
        %v1024 = vunpack.c.h.b16 %v447
        %v1025 = vunpack.c.l.b16 %v448
        %v1026 = vunpack.c.l.b16 %v449
        %v1027 = vunpack.c.h.b16 %v449
        %v1028 = vunpack.c.l.b16 %v450
        %v1029 = vunpack.c.l.b16 %v451
        %v1030 = vunpack.c.h.b16 %v451
        %v1031 = vunpack.c.l.b16 %v452
        %v1032 = vunpack.c.l.b16 %v453
        %v1033 = vunpack.c.h.b16 %v453
        %v1034 = vunpack.c.l.b16 %v454
        %v1035 = vunpack.c.l.b16 %v455
        %v1036 = vunpack.c.h.b16 %v455
        %v1037 = vunpack.c.l.b16 %v456
        %v1038 = vunpack.c.l.b16 %v457
        %v1039 = vunpack.c.h.b16 %v457
        %v1040 = vunpack.c.l.b16 %v458
        %v1041 = vunpack.c.l.b16 %v459
        %v1042 = vunpack.c.h.b16 %v459
        %v1043 = vunpack.c.l.b16 %v460
        %v1044 = vunpack.c.l.b16 %v461
        %v1045 = vunpack.c.h.b16 %v461
        %v1046 = vunpack.c.l.b16 %v462
        %v1047 = vunpack.c.l.b16 %v463
        %v1048 = vunpack.c.h.b16 %v463
        %v1049 = vunpack.c.l.b16 %v464
        %v1050 = vunpack.c.l.b16 %v465
        %v1051 = vunpack.c.h.b16 %v465
        %v1052 = vunpack.c.l.b16 %v466
        %v1053 = vunpack.c.l.b16 %v467
        %v1054 = vunpack.c.h.b16 %v467
        %v1055 = vunpack.c.l.b16 %v468
        %v1056 = vunpack.c.l.b16 %v469
        %v1057 = vunpack.c.h.b16 %v469
        %v1058 = vunpack.c.l.b16 %v470
        %v1059 = vunpack.c.l.b16 %v471
        %v1060 = vunpack.c.h.b16 %v471
        %v1061 = vunpack.c.l.b16 %v472
        %v1062 = vunpack.c.l.b16 %v473
        %v1063 = vunpack.c.h.b16 %v473
        %v1064 = vunpack.c.l.b16 %v474
        %v1065 = vunpack.c.l.b16 %v475
        %v1066 = vunpack.c.h.b16 %v475
        %v1067 = vunpack.c.l.b16 %v476
        %v1068 = vunpack.c.l.b16 %v477
        %v1069 = vunpack.c.h.b16 %v477
        %v1070 = vunpack.c.l.b16 %v478
        %v1071 = vunpack.c.l.b16 %v479
        %v1072 = vunpack.c.h.b16 %v479
        %v1073 = vunpack.c.l.b16 %v480
        %v1074 = vunpack.c.l.b16 %v481
        %v1075 = vunpack.c.h.b16 %v481
        %v1076 = vunpack.c.l.b16 %v482
        %v1077 = vunpack.c.l.b16 %v483
        %v1078 = vunpack.c.h.b16 %v483
        %v1079 = vunpack.c.l.b16 %v484
        %v1080 = vunpack.c.l.b16 %v485
        %v1081 = vunpack.c.h.b16 %v485
        %v1082 = vunpack.c.l.b16 %v486
        %v1083 = vunpack.c.l.b16 %v487
        %v1084 = vunpack.c.h.b16 %v487
        %v1085 = vunpack.c.l.b16 %v488
        %v1086 = vunpack.c.l.b16 %v489
        %v1087 = vunpack.c.h.b16 %v489
        %v1088 = vunpack.c.l.b16 %v490
        %v1089 = vunpack.c.l.b16 %v491
        %v1090 = vunpack.c.h.b16 %v491
        %v1091 = vunpack.c.l.b16 %v492
        %v1092 = vunpack.c.l.b16 %v493
        %v1093 = vunpack.c.h.b16 %v493
        %v1094 = vunpack.c.l.b16 %v494
        %v1095 = vunpack.c.l.b16 %v495
        %v1096 = vunpack.c.h.b16 %v495
        %v1097 = vunpack.c.l.b16 %v496
        %v1098 = vunpack.c.l.b16 %v497
        %v1099 = vunpack.c.h.b16 %v497
        %v1100 = vunpack.c.l.b16 %v498
        %v1101 = vunpack.c.l.b16 %v499
        %v1102 = vunpack.c.h.b16 %v499
        %v1103 = vunpack.c.l.b16 %v500
        %v1104 = vunpack.c.l.b16 %v501
        %v1105 = vunpack.c.h.b16 %v501
        %v1106 = vunpack.c.l.b16 %v502
        %v1107 = vunpack.c.l.b16 %v503
        %v1108 = vunpack.c.h.b16 %v503
        %v1109 = vunpack.c.l.b16 %v504
        %v1110 = vunpack.c.l.b16 %v505
        %v1111 = vunpack.c.h.b16 %v505
        %v1112 = vunpack.c.l.b16 %v506
        %v1113 = vunpack.c.l.b16 %v507
        %v1114 = vunpack.c.h.b16 %v507
        %v1115 = vunpack.c.l.b16 %v508
        %v1116 = vunpack.c.l.b16 %v509
        %v1117 = vunpack.c.h.b16 %v509
        %v1118 = vunpack.c.l.b16 %v510
        %v1119 = vunpack.c.l.b16 %v511
        %v1120 = vunpack.c.h.b16 %v511
        %v1121 = vunpack.c.l.b16 %v512
        %v1122 = vunpack.c.l.b16 %v513
        %v1123 = vunpack.c.h.b16 %v513
        %v1124 = vunpack.c.l.b16 %v514
        %v1125 = vunpack.c.l.b16 %v515
        %v1126 = vunpack.c.h.b16 %v515
        %v1127 = vunpack.c.l.b16 %v516
        %v1128 = vunpack.c.l.b16 %v517
        %v1129 = vunpack.c.h.b16 %v517
        %v1130 = vunpack.c.l.b16 %v518
        %v1131 = vunpack.c.l.b16 %v519
        %v1132 = vunpack.c.h.b16 %v519
        %v1133 = vunpack.c.l.b16 %v520
        %v1134 = vunpack.c.l.b16 %v521
        %v1135 = vunpack.c.h.b16 %v521
        %v1136 = vunpack.c.l.b16 %v522
        %v1137 = vunpack.c.l.b16 %v523
        %v1138 = vunpack.c.h.b16 %v523
        %v1139 = vunpack.c.l.b16 %v524
        %v1140 = vunpack.c.l.b16 %v525
        %v1141 = vunpack.c.h.b16 %v525
        %v1142 = vunpack.c.l.b16 %v526
        %v1143 = vunpack.c.l.b16 %v527
        %v1144 = vunpack.c.h.b16 %v527
        %v1145 = vunpack.c.l.b16 %v528
        %v1146 = vunpack.c.l.b16 %v529
        %v1147 = vunpack.c.h.b16 %v529
        %v1148 = vunpack.c.l.b16 %v530
        %v1149 = vunpack.c.l.b16 %v531
        %v1150 = vunpack.c.h.b16 %v531
        %v1151 = vunpack.c.l.b16 %v532
        %v1152 = vunpack.c.l.b16 %v533
        %v1153 = vunpack.c.h.b16 %v533
        %v1154 = vunpack.c.l.b16 %v534
        %v1155 = vunpack.c.l.b16 %v535
        %v1156 = vunpack.c.h.b16 %v535
        %v1157 = vunpack.c.l.b16 %v536
        %v1158 = vunpack.c.l.b16 %v537
        %v1159 = vunpack.c.h.b16 %v537
        %v1160 = vunpack.c.l.b16 %v538
        %v1161 = vunpack.c.l.b16 %v539
        %v1162 = vunpack.c.h.b16 %v539
        %v1163 = vunpack.c.l.b16 %v540
        %v1164 = vunpack.c.l.b16 %v541
        %v1165 = vunpack.c.h.b16 %v541
        %v1166 = vunpack.c.l.b16 %v542
        %v1167 = vunpack.c.l.b16 %v543
        %v1168 = vunpack.c.h.b16 %v543
        %v1169 = vunpack.c.l.b16 %v544
        %v1170 = vunpack.c.l.b16 %v545
        %v1171 = vunpack.c.h.b16 %v545
        %v1172 = vunpack.c.l.b16 %v546
        %v1173 = vunpack.c.l.b16 %v547
        %v1174 = vunpack.c.h.b16 %v547
        %v1175 = vunpack.c.l.b16 %v548
        %v1176 = vunpack.c.l.b16 %v549
        %v1177 = vunpack.c.h.b16 %v549
        %v1178 = vunpack.c.l.b16 %v550
        %v1179 = vunpack.c.l.b16 %v551
        %v1180 = vunpack.c.h.b16 %v551
        %v1181 = vunpack.c.l.b16 %v552
        %v1182 = vunpack.c.l.b16 %v553
        %v1183 = vunpack.c.h.b16 %v553
        %v1184 = vunpack.c.l.b16 %v554
        %v1185 = vunpack.c.l.b16 %v555
        %v1186 = vunpack.c.h.b16 %v555
        %v1187 = vunpack.c.l.b16 %v556
        %v1188 = vunpack.c.l.b16 %v557
        %v1189 = vunpack.c.h.b16 %v557
        %v1190 = vunpack.c.l.b16 %v558
        %v1191 = vunpack.c.l.b16 %v559
        %v1192 = vunpack.c.h.b16 %v559
        %v1193 = vunpack.c.l.b16 %v560
        %v1194 = vunpack.c.l.b16 %v561
        %v1195 = vunpack.c.h.b16 %v561
        %v1196 = vunpack.c.l.b16 %v562
        %v1197 = vunpack.c.l.b16 %v563
        %v1198 = vunpack.c.h.b16 %v563
        %v1199 = vunpack.c.l.b16 %v564
        %v1200 = vunpack.c.l.b16 %v565
        %v1201 = vunpack.c.h.b16 %v565
        %v1202 = vunpack.c.l.b16 %v566
        %v1203 = vunpack.c.l.b16 %v567
        %v1204 = vunpack.c.h.b16 %v567
        %v1205 = vunpack.c.l.b16 %v568
        %v1206 = vunpack.c.l.b16 %v569
        %v1207 = vunpack.c.h.b16 %v569
        %v1208 = vunpack.c.l.b16 %v570
        %v1209 = vunpack.c.l.b16 %v571
        %v1210 = vunpack.c.h.b16 %v571
        %v1211 = vunpack.c.l.b16 %v572
        %v1212 = vunpack.c.l.b16 %v573
        %v1213 = vunpack.c.h.b16 %v573
        %v1214 = vunpack.c.l.b16 %v574
        %v1215 = vpack.c.b16 %v1026, %v1023
        %v1216 = vpack.c.b16 %v1027, %v1024
        %v1217 = vpack.c.b16 %v1028, %v1025
        %v1218 = vpack.c.b16 %v1032, %v1029
        %v1219 = vpack.c.b16 %v1033, %v1030
        %v1220 = vpack.c.b16 %v1034, %v1031
        %v1221 = vpack.c.b16 %v1038, %v1035
        %v1222 = vpack.c.b16 %v1039, %v1036
        %v1223 = vpack.c.b16 %v1040, %v1037
        %v1224 = vpack.c.b16 %v1044, %v1041
        %v1225 = vpack.c.b16 %v1045, %v1042
        %v1226 = vpack.c.b16 %v1046, %v1043
        %v1227 = vpack.c.b16 %v1050, %v1047
        %v1228 = vpack.c.b16 %v1051, %v1048
        %v1229 = vpack.c.b16 %v1052, %v1049
        %v1230 = vpack.c.b16 %v1056, %v1053
        %v1231 = vpack.c.b16 %v1057, %v1054
        %v1232 = vpack.c.b16 %v1058, %v1055
        %v1233 = vpack.c.b16 %v1062, %v1059
        %v1234 = vpack.c.b16 %v1063, %v1060
        %v1235 = vpack.c.b16 %v1064, %v1061
        %v1236 = vpack.c.b16 %v1068, %v1065
        %v1237 = vpack.c.b16 %v1069, %v1066
        %v1238 = vpack.c.b16 %v1070, %v1067
        %v1239 = vpack.c.b16 %v1074, %v1071
        %v1240 = vpack.c.b16 %v1075, %v1072
        %v1241 = vpack.c.b16 %v1076, %v1073
        %v1242 = vpack.c.b16 %v1080, %v1077
        %v1243 = vpack.c.b16 %v1081, %v1078
        %v1244 = vpack.c.b16 %v1082, %v1079
        %v1245 = vpack.c.b16 %v1086, %v1083
        %v1246 = vpack.c.b16 %v1087, %v1084
        %v1247 = vpack.c.b16 %v1088, %v1085
        %v1248 = vpack.c.b16 %v1092, %v1089
        %v1249 = vpack.c.b16 %v1093, %v1090
        %v1250 = vpack.c.b16 %v1094, %v1091
        %v1251 = vpack.c.b16 %v1098, %v1095
        %v1252 = vpack.c.b16 %v1099, %v1096
        %v1253 = vpack.c.b16 %v1100, %v1097
        %v1254 = vpack.c.b16 %v1104, %v1101
        %v1255 = vpack.c.b16 %v1105, %v1102
        %v1256 = vpack.c.b16 %v1106, %v1103
        %v1257 = vpack.c.b16 %v1110, %v1107
        %v1258 = vpack.c.b16 %v1111, %v1108
        %v1259 = vpack.c.b16 %v1112, %v1109
        %v1260 = vpack.c.b16 %v1116, %v1113
        %v1261 = vpack.c.b16 %v1117, %v1114
        %v1262 = vpack.c.b16 %v1118, %v1115
        %v1263 = vpack.c.b16 %v1122, %v1119
        %v1264 = vpack.c.b16 %v1123, %v1120
        %v1265 = vpack.c.b16 %v1124, %v1121
        %v1266 = vpack.c.b16 %v1128, %v1125
        %v1267 = vpack.c.b16 %v1129, %v1126
        %v1268 = vpack.c.b16 %v1130, %v1127
        %v1269 = vpack.c.b16 %v1134, %v1131
        %v1270 = vpack.c.b16 %v1135, %v1132
        %v1271 = vpack.c.b16 %v1136, %v1133
        %v1272 = vpack.c.b16 %v1140, %v1137
        %v1273 = vpack.c.b16 %v1141, %v1138
        %v1274 = vpack.c.b16 %v1142, %v1139
        %v1275 = vpack.c.b16 %v1146, %v1143
        %v1276 = vpack.c.b16 %v1147, %v1144
        %v1277 = vpack.c.b16 %v1148, %v1145
        %v1278 = vpack.c.b16 %v1152, %v1149
        %v1279 = vpack.c.b16 %v1153, %v1150
        %v1280 = vpack.c.b16 %v1154, %v1151
        %v1281 = vpack.c.b16 %v1158, %v1155
        %v1282 = vpack.c.b16 %v1159, %v1156
        %v1283 = vpack.c.b16 %v1160, %v1157
        %v1284 = vpack.c.b16 %v1164, %v1161
        %v1285 = vpack.c.b16 %v1165, %v1162
        %v1286 = vpack.c.b16 %v1166, %v1163
        %v1287 = vpack.c.b16 %v1170, %v1167
        %v1288 = vpack.c.b16 %v1171, %v1168
        %v1289 = vpack.c.b16 %v1172, %v1169
        %v1290 = vpack.c.b16 %v1176, %v1173
        %v1291 = vpack.c.b16 %v1177, %v1174
        %v1292 = vpack.c.b16 %v1178, %v1175
        %v1293 = vpack.c.b16 %v1182, %v1179
        %v1294 = vpack.c.b16 %v1183, %v1180
        %v1295 = vpack.c.b16 %v1184, %v1181
        %v1296 = vpack.c.b16 %v1188, %v1185
        %v1297 = vpack.c.b16 %v1189, %v1186
        %v1298 = vpack.c.b16 %v1190, %v1187
        %v1299 = vpack.c.b16 %v1194, %v1191
        %v1300 = vpack.c.b16 %v1195, %v1192
        %v1301 = vpack.c.b16 %v1196, %v1193
        %v1302 = vpack.c.b16 %v1200, %v1197
        %v1303 = vpack.c.b16 %v1201, %v1198
        %v1304 = vpack.c.b16 %v1202, %v1199
        %v1305 = vpack.c.b16 %v1206, %v1203
        %v1306 = vpack.c.b16 %v1207, %v1204
        %v1307 = vpack.c.b16 %v1208, %v1205
        %v1308 = vpack.c.b16 %v1212, %v1209
        %v1309 = vpack.c.b16 %v1213, %v1210
        %v1310 = vpack.c.b16 %v1214, %v1211
        %1407 = vmatpush.bf16.msra.mxu0 %v1236
        %1408 = vmatpush.bf16.msra.mxu0 %v1233
        %1409 = vmatpush.bf16.msra.mxu0 %v1230
        %1410 = vmatpush.bf16.msra.mxu0 %v1227
        %1411 = vmatpush.bf16.msra.mxu0 %v1224
        %1412 = vmatpush.bf16.msra.mxu0 %v1221
        %1413 = vmatpush.bf16.msra.mxu0 %v1218
        %1414 = vmatpush.bf16.msra.mxu0 %v1215
        %1415 = vmatmul.bf16.gmra.mxu0 %v767
        %v1416 = vpop.f32.mrf.mxu0
        %v1417 = vadd.f32 0.0, %v1416
        %v1418 = vpop.f32.mrf.mxu0
        %v1419 = vadd.f32 0.0, %v1418
        %1420 = vmatmul.bf16.gmra.mxu0 %v771
        %v1421 = vpop.f32.mrf.mxu0
        %v1422 = vadd.f32 0.0, %v1421
        %v1423 = vpop.f32.mrf.mxu0
        %v1424 = vadd.f32 0.0, %v1423
        %1425 = vmatmul.bf16.gmra.mxu0 %v775
        %v1426 = vpop.f32.mrf.mxu0
        %v1427 = vadd.f32 0.0, %v1426
        %v1428 = vpop.f32.mrf.mxu0
        %v1429 = vadd.f32 0.0, %v1428
        %1430 = vmatmul.bf16.gmra.mxu0 %v779
        %v1431 = vpop.f32.mrf.mxu0
        %v1432 = vadd.f32 0.0, %v1431
        %v1433 = vpop.f32.mrf.mxu0
        %v1434 = vadd.f32 0.0, %v1433
        %1435 = vmatmul.bf16.gmra.mxu0 %v783
        %v1436 = vpop.f32.mrf.mxu0
        %v1437 = vadd.f32 0.0, %v1436
        %v1438 = vpop.f32.mrf.mxu0
        %v1439 = vadd.f32 0.0, %v1438
        %1440 = vmatmul.bf16.gmra.mxu0 %v787
        %v1441 = vpop.f32.mrf.mxu0
        %v1442 = vadd.f32 0.0, %v1441
        %v1443 = vpop.f32.mrf.mxu0
        %v1444 = vadd.f32 0.0, %v1443
        %1445 = vmatmul.bf16.gmra.mxu0 %v791
        %v1446 = vpop.f32.mrf.mxu0
        %v1447 = vadd.f32 0.0, %v1446
        %v1448 = vpop.f32.mrf.mxu0
        %v1449 = vadd.f32 0.0, %v1448
        %1450 = vmatmul.bf16.gmra.mxu0 %v795
        %v1451 = vpop.f32.mrf.mxu0
        %v1452 = vadd.f32 0.0, %v1451
        %v1453 = vpop.f32.mrf.mxu0
        %v1454 = vadd.f32 0.0, %v1453
        %1455 = vmatmul.bf16.gmra.mxu0 %v799
        %v1456 = vpop.f32.mrf.mxu0
        %v1457 = vadd.f32 0.0, %v1456
        %v1458 = vpop.f32.mrf.mxu0
        %v1459 = vadd.f32 0.0, %v1458
        %1460 = vmatmul.bf16.gmra.mxu0 %v803
        %v1461 = vpop.f32.mrf.mxu0
        %v1462 = vadd.f32 0.0, %v1461
        %v1463 = vpop.f32.mrf.mxu0
        %v1464 = vadd.f32 0.0, %v1463
        %1465 = vmatmul.bf16.gmra.mxu0 %v807
        %v1466 = vpop.f32.mrf.mxu0
        %v1467 = vadd.f32 0.0, %v1466
        %v1468 = vpop.f32.mrf.mxu0
        %v1469 = vadd.f32 0.0, %v1468
        %1470 = vmatmul.bf16.gmra.mxu0 %v811
        %v1471 = vpop.f32.mrf.mxu0
        %v1472 = vadd.f32 0.0, %v1471
        %v1473 = vpop.f32.mrf.mxu0
        %v1474 = vadd.f32 0.0, %v1473
        %1475 = vmatmul.bf16.gmra.mxu0 %v815
        %v1476 = vpop.f32.mrf.mxu0
        %v1477 = vadd.f32 0.0, %v1476
        %v1478 = vpop.f32.mrf.mxu0
        %v1479 = vadd.f32 0.0, %v1478
        %1480 = vmatmul.bf16.gmra.mxu0 %v819
        %v1481 = vpop.f32.mrf.mxu0
        %v1482 = vadd.f32 0.0, %v1481
        %v1483 = vpop.f32.mrf.mxu0
        %v1484 = vadd.f32 0.0, %v1483
        %1485 = vmatmul.bf16.gmra.mxu0 %v823
        %v1486 = vpop.f32.mrf.mxu0
        %v1487 = vadd.f32 0.0, %v1486
        %v1488 = vpop.f32.mrf.mxu0
        %v1489 = vadd.f32 0.0, %v1488
        %1490 = vmatmul.bf16.gmra.mxu0 %v827
        %v1491 = vpop.f32.mrf.mxu0
        %v1492 = vadd.f32 0.0, %v1491
        %v1493 = vpop.f32.mrf.mxu0
        %v1494 = vadd.f32 0.0, %v1493
        %1495 = vdwg.mxu0
        %1496 = vmatpush.bf16.msra.mxu0 %v1260
        %1497 = vmatpush.bf16.msra.mxu0 %v1257
        %1498 = vmatpush.bf16.msra.mxu0 %v1254
        %1499 = vmatpush.bf16.msra.mxu0 %v1251
        %1500 = vmatpush.bf16.msra.mxu0 %v1248
        %1501 = vmatpush.bf16.msra.mxu0 %v1245
        %1502 = vmatpush.bf16.msra.mxu0 %v1242
        %1503 = vmatpush.bf16.msra.mxu0 %v1239
        %1504 = vmatmul.bf16.gmra.mxu0 %v768
        %v1505 = vpop.f32.mrf.mxu0
        %v1506 = vadd.f32 %v1417, %v1505
        %v1507 = vpop.f32.mrf.mxu0
        %v1508 = vadd.f32 %v1419, %v1507
        %1509 = vmatmul.bf16.gmra.mxu0 %v772
        %v1510 = vpop.f32.mrf.mxu0
        %v1511 = vadd.f32 %v1422, %v1510
        %v1512 = vpop.f32.mrf.mxu0
        %v1513 = vadd.f32 %v1424, %v1512
        %1514 = vmatmul.bf16.gmra.mxu0 %v776
        %v1515 = vpop.f32.mrf.mxu0
        %v1516 = vadd.f32 %v1427, %v1515
        %v1517 = vpop.f32.mrf.mxu0
        %v1518 = vadd.f32 %v1429, %v1517
        %1519 = vmatmul.bf16.gmra.mxu0 %v780
        %v1520 = vpop.f32.mrf.mxu0
        %v1521 = vadd.f32 %v1432, %v1520
        %v1522 = vpop.f32.mrf.mxu0
        %v1523 = vadd.f32 %v1434, %v1522
        %1524 = vmatmul.bf16.gmra.mxu0 %v784
        %v1525 = vpop.f32.mrf.mxu0
        %v1526 = vadd.f32 %v1437, %v1525
        %v1527 = vpop.f32.mrf.mxu0
        %v1528 = vadd.f32 %v1439, %v1527
        %1529 = vmatmul.bf16.gmra.mxu0 %v788
        %v1530 = vpop.f32.mrf.mxu0
        %v1531 = vadd.f32 %v1442, %v1530
        %v1532 = vpop.f32.mrf.mxu0
        %v1533 = vadd.f32 %v1444, %v1532
        %1534 = vmatmul.bf16.gmra.mxu0 %v792
        %v1535 = vpop.f32.mrf.mxu0
        %v1536 = vadd.f32 %v1447, %v1535
        %v1537 = vpop.f32.mrf.mxu0
        %v1538 = vadd.f32 %v1449, %v1537
        %1539 = vmatmul.bf16.gmra.mxu0 %v796
        %v1540 = vpop.f32.mrf.mxu0
        %v1541 = vadd.f32 %v1452, %v1540
        %v1542 = vpop.f32.mrf.mxu0
        %v1543 = vadd.f32 %v1454, %v1542
        %1544 = vmatmul.bf16.gmra.mxu0 %v800
        %v1545 = vpop.f32.mrf.mxu0
        %v1546 = vadd.f32 %v1457, %v1545
        %v1547 = vpop.f32.mrf.mxu0
        %v1548 = vadd.f32 %v1459, %v1547
        %1549 = vmatmul.bf16.gmra.mxu0 %v804
        %v1550 = vpop.f32.mrf.mxu0
        %v1551 = vadd.f32 %v1462, %v1550
        %v1552 = vpop.f32.mrf.mxu0
        %v1553 = vadd.f32 %v1464, %v1552
        %1554 = vmatmul.bf16.gmra.mxu0 %v808
        %v1555 = vpop.f32.mrf.mxu0
        %v1556 = vadd.f32 %v1467, %v1555
        %v1557 = vpop.f32.mrf.mxu0
        %v1558 = vadd.f32 %v1469, %v1557
        %1559 = vmatmul.bf16.gmra.mxu0 %v812
        %v1560 = vpop.f32.mrf.mxu0
        %v1561 = vadd.f32 %v1472, %v1560
        %v1562 = vpop.f32.mrf.mxu0
        %v1563 = vadd.f32 %v1474, %v1562
        %1564 = vmatmul.bf16.gmra.mxu0 %v816
        %v1565 = vpop.f32.mrf.mxu0
        %v1566 = vadd.f32 %v1477, %v1565
        %v1567 = vpop.f32.mrf.mxu0
        %v1568 = vadd.f32 %v1479, %v1567
        %1569 = vmatmul.bf16.gmra.mxu0 %v820
        %v1570 = vpop.f32.mrf.mxu0
        %v1571 = vadd.f32 %v1482, %v1570
        %v1572 = vpop.f32.mrf.mxu0
        %v1573 = vadd.f32 %v1484, %v1572
        %1574 = vmatmul.bf16.gmra.mxu0 %v824
        %v1575 = vpop.f32.mrf.mxu0
        %v1576 = vadd.f32 %v1487, %v1575
        %v1577 = vpop.f32.mrf.mxu0
        %v1578 = vadd.f32 %v1489, %v1577
        %1579 = vmatmul.bf16.gmra.mxu0 %v828
        %v1580 = vpop.f32.mrf.mxu0
        %v1581 = vadd.f32 %v1492, %v1580
        %v1582 = vpop.f32.mrf.mxu0
        %v1583 = vadd.f32 %v1494, %v1582
        %1584 = vdwg.mxu0
        %1585 = vmatpush.bf16.msra.mxu0 %v1284
        %1586 = vmatpush.bf16.msra.mxu0 %v1281
        %1587 = vmatpush.bf16.msra.mxu0 %v1278
        %1588 = vmatpush.bf16.msra.mxu0 %v1275
        %1589 = vmatpush.bf16.msra.mxu0 %v1272
        %1590 = vmatpush.bf16.msra.mxu0 %v1269
        %1591 = vmatpush.bf16.msra.mxu0 %v1266
        %1592 = vmatpush.bf16.msra.mxu0 %v1263
        %1593 = vmatmul.bf16.gmra.mxu0 %v769
        %v1594 = vpop.f32.mrf.mxu0
        %v1595 = vadd.f32 %v1506, %v1594
        %v1596 = vpop.f32.mrf.mxu0
        %v1597 = vadd.f32 %v1508, %v1596
        %1598 = vmatmul.bf16.gmra.mxu0 %v773
        %v1599 = vpop.f32.mrf.mxu0
        %v1600 = vadd.f32 %v1511, %v1599
        %v1601 = vpop.f32.mrf.mxu0
        %v1602 = vadd.f32 %v1513, %v1601
        %1603 = vmatmul.bf16.gmra.mxu0 %v777
        %v1604 = vpop.f32.mrf.mxu0
        %v1605 = vadd.f32 %v1516, %v1604
        %v1606 = vpop.f32.mrf.mxu0
        %v1607 = vadd.f32 %v1518, %v1606
        %1608 = vmatmul.bf16.gmra.mxu0 %v781
        %v1609 = vpop.f32.mrf.mxu0
        %v1610 = vadd.f32 %v1521, %v1609
        %v1611 = vpop.f32.mrf.mxu0
        %v1612 = vadd.f32 %v1523, %v1611
        %1613 = vmatmul.bf16.gmra.mxu0 %v785
        %v1614 = vpop.f32.mrf.mxu0
        %v1615 = vadd.f32 %v1526, %v1614
        %v1616 = vpop.f32.mrf.mxu0
        %v1617 = vadd.f32 %v1528, %v1616
        %1618 = vmatmul.bf16.gmra.mxu0 %v789
        %v1619 = vpop.f32.mrf.mxu0
        %v1620 = vadd.f32 %v1531, %v1619
        %v1621 = vpop.f32.mrf.mxu0
        %v1622 = vadd.f32 %v1533, %v1621
        %1623 = vmatmul.bf16.gmra.mxu0 %v793
        %v1624 = vpop.f32.mrf.mxu0
        %v1625 = vadd.f32 %v1536, %v1624
        %v1626 = vpop.f32.mrf.mxu0
        %v1627 = vadd.f32 %v1538, %v1626
        %1628 = vmatmul.bf16.gmra.mxu0 %v797
        %v1629 = vpop.f32.mrf.mxu0
        %v1630 = vadd.f32 %v1541, %v1629
        %v1631 = vpop.f32.mrf.mxu0
        %v1632 = vadd.f32 %v1543, %v1631
        %1633 = vmatmul.bf16.gmra.mxu0 %v801
        %v1634 = vpop.f32.mrf.mxu0
        %v1635 = vadd.f32 %v1546, %v1634
        %v1636 = vpop.f32.mrf.mxu0
        %v1637 = vadd.f32 %v1548, %v1636
        %1638 = vmatmul.bf16.gmra.mxu0 %v805
        %v1639 = vpop.f32.mrf.mxu0
        %v1640 = vadd.f32 %v1551, %v1639
        %v1641 = vpop.f32.mrf.mxu0
        %v1642 = vadd.f32 %v1553, %v1641
        %1643 = vmatmul.bf16.gmra.mxu0 %v809
        %v1644 = vpop.f32.mrf.mxu0
        %v1645 = vadd.f32 %v1556, %v1644
        %v1646 = vpop.f32.mrf.mxu0
        %v1647 = vadd.f32 %v1558, %v1646
        %1648 = vmatmul.bf16.gmra.mxu0 %v813
        %v1649 = vpop.f32.mrf.mxu0
        %v1650 = vadd.f32 %v1561, %v1649
        %v1651 = vpop.f32.mrf.mxu0
        %v1652 = vadd.f32 %v1563, %v1651
        %1653 = vmatmul.bf16.gmra.mxu0 %v817
        %v1654 = vpop.f32.mrf.mxu0
        %v1655 = vadd.f32 %v1566, %v1654
        %v1656 = vpop.f32.mrf.mxu0
        %v1657 = vadd.f32 %v1568, %v1656
        %1658 = vmatmul.bf16.gmra.mxu0 %v821
        %v1659 = vpop.f32.mrf.mxu0
        %v1660 = vadd.f32 %v1571, %v1659
        %v1661 = vpop.f32.mrf.mxu0
        %v1662 = vadd.f32 %v1573, %v1661
        %1663 = vmatmul.bf16.gmra.mxu0 %v825
        %v1664 = vpop.f32.mrf.mxu0
        %v1665 = vadd.f32 %v1576, %v1664
        %v1666 = vpop.f32.mrf.mxu0
        %v1667 = vadd.f32 %v1578, %v1666
        %1668 = vmatmul.bf16.gmra.mxu0 %v829
        %v1669 = vpop.f32.mrf.mxu0
        %v1670 = vadd.f32 %v1581, %v1669
        %v1671 = vpop.f32.mrf.mxu0
        %v1672 = vadd.f32 %v1583, %v1671
        %1673 = vdwg.mxu0
        %1674 = vmatpush.bf16.msra.mxu0 %v1308
        %1675 = vmatpush.bf16.msra.mxu0 %v1305
        %1676 = vmatpush.bf16.msra.mxu0 %v1302
        %1677 = vmatpush.bf16.msra.mxu0 %v1299
        %1678 = vmatpush.bf16.msra.mxu0 %v1296
        %1679 = vmatpush.bf16.msra.mxu0 %v1293
        %1680 = vmatpush.bf16.msra.mxu0 %v1290
        %1681 = vmatpush.bf16.msra.mxu0 %v1287
        %1682 = vmatmul.bf16.gmra.mxu0 %v770
        %v1683 = vpop.f32.mrf.mxu0
        %v1684 = vadd.f32 %v1595, %v1683
        %v1685 = vpop.f32.mrf.mxu0
        %v1686 = vadd.f32 %v1597, %v1685
        %1687 = vmatmul.bf16.gmra.mxu0 %v774
        %v1688 = vpop.f32.mrf.mxu0
        %v1689 = vadd.f32 %v1600, %v1688
        %v1690 = vpop.f32.mrf.mxu0
        %v1691 = vadd.f32 %v1602, %v1690
        %1692 = vmatmul.bf16.gmra.mxu0 %v778
        %v1693 = vpop.f32.mrf.mxu0
        %v1694 = vadd.f32 %v1605, %v1693
        %v1695 = vpop.f32.mrf.mxu0
        %v1696 = vadd.f32 %v1607, %v1695
        %1697 = vmatmul.bf16.gmra.mxu0 %v782
        %v1698 = vpop.f32.mrf.mxu0
        %v1699 = vadd.f32 %v1610, %v1698
        %v1700 = vpop.f32.mrf.mxu0
        %v1701 = vadd.f32 %v1612, %v1700
        %1702 = vmatmul.bf16.gmra.mxu0 %v786
        %v1703 = vpop.f32.mrf.mxu0
        %v1704 = vadd.f32 %v1615, %v1703
        %v1705 = vpop.f32.mrf.mxu0
        %v1706 = vadd.f32 %v1617, %v1705
        %1707 = vmatmul.bf16.gmra.mxu0 %v790
        %v1708 = vpop.f32.mrf.mxu0
        %v1709 = vadd.f32 %v1620, %v1708
        %v1710 = vpop.f32.mrf.mxu0
        %v1711 = vadd.f32 %v1622, %v1710
        %1712 = vmatmul.bf16.gmra.mxu0 %v794
        %v1713 = vpop.f32.mrf.mxu0
        %v1714 = vadd.f32 %v1625, %v1713
        %v1715 = vpop.f32.mrf.mxu0
        %v1716 = vadd.f32 %v1627, %v1715
        %1717 = vmatmul.bf16.gmra.mxu0 %v798
        %v1718 = vpop.f32.mrf.mxu0
        %v1719 = vadd.f32 %v1630, %v1718
        %v1720 = vpop.f32.mrf.mxu0
        %v1721 = vadd.f32 %v1632, %v1720
        %1722 = vmatmul.bf16.gmra.mxu0 %v802
        %v1723 = vpop.f32.mrf.mxu0
        %v1724 = vadd.f32 %v1635, %v1723
        %v1725 = vpop.f32.mrf.mxu0
        %v1726 = vadd.f32 %v1637, %v1725
        %1727 = vmatmul.bf16.gmra.mxu0 %v806
        %v1728 = vpop.f32.mrf.mxu0
        %v1729 = vadd.f32 %v1640, %v1728
        %v1730 = vpop.f32.mrf.mxu0
        %v1731 = vadd.f32 %v1642, %v1730
        %1732 = vmatmul.bf16.gmra.mxu0 %v810
        %v1733 = vpop.f32.mrf.mxu0
        %v1734 = vadd.f32 %v1645, %v1733
        %v1735 = vpop.f32.mrf.mxu0
        %v1736 = vadd.f32 %v1647, %v1735
        %1737 = vmatmul.bf16.gmra.mxu0 %v814
        %v1738 = vpop.f32.mrf.mxu0
        %v1739 = vadd.f32 %v1650, %v1738
        %v1740 = vpop.f32.mrf.mxu0
        %v1741 = vadd.f32 %v1652, %v1740
        %1742 = vmatmul.bf16.gmra.mxu0 %v818
        %v1743 = vpop.f32.mrf.mxu0
        %v1744 = vadd.f32 %v1655, %v1743
        %v1745 = vpop.f32.mrf.mxu0
        %v1746 = vadd.f32 %v1657, %v1745
        %1747 = vmatmul.bf16.gmra.mxu0 %v822
        %v1748 = vpop.f32.mrf.mxu0
        %v1749 = vadd.f32 %v1660, %v1748
        %v1750 = vpop.f32.mrf.mxu0
        %v1751 = vadd.f32 %v1662, %v1750
        %1752 = vmatmul.bf16.gmra.mxu0 %v826
        %v1753 = vpop.f32.mrf.mxu0
        %v1754 = vadd.f32 %v1665, %v1753
        %v1755 = vpop.f32.mrf.mxu0
        %v1756 = vadd.f32 %v1667, %v1755
        %1757 = vmatmul.bf16.gmra.mxu0 %v830
        %v1758 = vpop.f32.mrf.mxu0
        %v1759 = vadd.f32 %v1670, %v1758
        %v1760 = vpop.f32.mrf.mxu0
        %v1761 = vadd.f32 %v1672, %v1760
        %1762 = vdwg.mxu0
        %1763 = vmatpush.bf16.msra.mxu0 %v1237
        %1764 = vmatpush.bf16.msra.mxu0 %v1234
        %1765 = vmatpush.bf16.msra.mxu0 %v1231
        %1766 = vmatpush.bf16.msra.mxu0 %v1228
        %1767 = vmatpush.bf16.msra.mxu0 %v1225
        %1768 = vmatpush.bf16.msra.mxu0 %v1222
        %1769 = vmatpush.bf16.msra.mxu0 %v1219
        %1770 = vmatpush.bf16.msra.mxu0 %v1216
        %1771 = vmatmul.bf16.gmra.mxu0 %v767
        %v1772 = vpop.f32.mrf.mxu0
        %v1773 = vadd.f32 0.0, %v1772
        %v1774 = vpop.f32.mrf.mxu0
        %v1775 = vadd.f32 0.0, %v1774
        %1776 = vmatmul.bf16.gmra.mxu0 %v771
        %v1777 = vpop.f32.mrf.mxu0
        %v1778 = vadd.f32 0.0, %v1777
        %v1779 = vpop.f32.mrf.mxu0
        %v1780 = vadd.f32 0.0, %v1779
        %1781 = vmatmul.bf16.gmra.mxu0 %v775
        %v1782 = vpop.f32.mrf.mxu0
        %v1783 = vadd.f32 0.0, %v1782
        %v1784 = vpop.f32.mrf.mxu0
        %v1785 = vadd.f32 0.0, %v1784
        %1786 = vmatmul.bf16.gmra.mxu0 %v779
        %v1787 = vpop.f32.mrf.mxu0
        %v1788 = vadd.f32 0.0, %v1787
        %v1789 = vpop.f32.mrf.mxu0
        %v1790 = vadd.f32 0.0, %v1789
        %1791 = vmatmul.bf16.gmra.mxu0 %v783
        %v1792 = vpop.f32.mrf.mxu0
        %v1793 = vadd.f32 0.0, %v1792
        %v1794 = vpop.f32.mrf.mxu0
        %v1795 = vadd.f32 0.0, %v1794
        %1796 = vmatmul.bf16.gmra.mxu0 %v787
        %v1797 = vpop.f32.mrf.mxu0
        %v1798 = vadd.f32 0.0, %v1797
        %v1799 = vpop.f32.mrf.mxu0
        %v1800 = vadd.f32 0.0, %v1799
        %1801 = vmatmul.bf16.gmra.mxu0 %v791
        %v1802 = vpop.f32.mrf.mxu0
        %v1803 = vadd.f32 0.0, %v1802
        %v1804 = vpop.f32.mrf.mxu0
        %v1805 = vadd.f32 0.0, %v1804
        %1806 = vmatmul.bf16.gmra.mxu0 %v795
        %v1807 = vpop.f32.mrf.mxu0
        %v1808 = vadd.f32 0.0, %v1807
        %v1809 = vpop.f32.mrf.mxu0
        %v1810 = vadd.f32 0.0, %v1809
        %1811 = vmatmul.bf16.gmra.mxu0 %v799
        %v1812 = vpop.f32.mrf.mxu0
        %v1813 = vadd.f32 0.0, %v1812
        %v1814 = vpop.f32.mrf.mxu0
        %v1815 = vadd.f32 0.0, %v1814
        %1816 = vmatmul.bf16.gmra.mxu0 %v803
        %v1817 = vpop.f32.mrf.mxu0
        %v1818 = vadd.f32 0.0, %v1817
        %v1819 = vpop.f32.mrf.mxu0
        %v1820 = vadd.f32 0.0, %v1819
        %1821 = vmatmul.bf16.gmra.mxu0 %v807
        %v1822 = vpop.f32.mrf.mxu0
        %v1823 = vadd.f32 0.0, %v1822
        %v1824 = vpop.f32.mrf.mxu0
        %v1825 = vadd.f32 0.0, %v1824
        %1826 = vmatmul.bf16.gmra.mxu0 %v811
        %v1827 = vpop.f32.mrf.mxu0
        %v1828 = vadd.f32 0.0, %v1827
        %v1829 = vpop.f32.mrf.mxu0
        %v1830 = vadd.f32 0.0, %v1829
        %1831 = vmatmul.bf16.gmra.mxu0 %v815
        %v1832 = vpop.f32.mrf.mxu0
        %v1833 = vadd.f32 0.0, %v1832
        %v1834 = vpop.f32.mrf.mxu0
        %v1835 = vadd.f32 0.0, %v1834
        %1836 = vmatmul.bf16.gmra.mxu0 %v819
        %v1837 = vpop.f32.mrf.mxu0
        %v1838 = vadd.f32 0.0, %v1837
        %v1839 = vpop.f32.mrf.mxu0
        %v1840 = vadd.f32 0.0, %v1839
        %1841 = vmatmul.bf16.gmra.mxu0 %v823
        %v1842 = vpop.f32.mrf.mxu0
        %v1843 = vadd.f32 0.0, %v1842
        %v1844 = vpop.f32.mrf.mxu0
        %v1845 = vadd.f32 0.0, %v1844
        %1846 = vmatmul.bf16.gmra.mxu0 %v827
        %v1847 = vpop.f32.mrf.mxu0
        %v1848 = vadd.f32 0.0, %v1847
        %v1849 = vpop.f32.mrf.mxu0
        %v1850 = vadd.f32 0.0, %v1849
        %1851 = vdwg.mxu0
        %1852 = vmatpush.bf16.msra.mxu0 %v1261
        %1853 = vmatpush.bf16.msra.mxu0 %v1258
        %1854 = vmatpush.bf16.msra.mxu0 %v1255
        %1855 = vmatpush.bf16.msra.mxu0 %v1252
        %1856 = vmatpush.bf16.msra.mxu0 %v1249
        %1857 = vmatpush.bf16.msra.mxu0 %v1246
        %1858 = vmatpush.bf16.msra.mxu0 %v1243
        %1859 = vmatpush.bf16.msra.mxu0 %v1240
        %1860 = vmatmul.bf16.gmra.mxu0 %v768
        %v1861 = vpop.f32.mrf.mxu0
        %v1862 = vadd.f32 %v1773, %v1861
        %v1863 = vpop.f32.mrf.mxu0
        %v1864 = vadd.f32 %v1775, %v1863
        %1865 = vmatmul.bf16.gmra.mxu0 %v772
        %v1866 = vpop.f32.mrf.mxu0
        %v1867 = vadd.f32 %v1778, %v1866
        %v1868 = vpop.f32.mrf.mxu0
        %v1869 = vadd.f32 %v1780, %v1868
        %1870 = vmatmul.bf16.gmra.mxu0 %v776
        %v1871 = vpop.f32.mrf.mxu0
        %v1872 = vadd.f32 %v1783, %v1871
        %v1873 = vpop.f32.mrf.mxu0
        %v1874 = vadd.f32 %v1785, %v1873
        %1875 = vmatmul.bf16.gmra.mxu0 %v780
        %v1876 = vpop.f32.mrf.mxu0
        %v1877 = vadd.f32 %v1788, %v1876
        %v1878 = vpop.f32.mrf.mxu0
        %v1879 = vadd.f32 %v1790, %v1878
        %1880 = vmatmul.bf16.gmra.mxu0 %v784
        %v1881 = vpop.f32.mrf.mxu0
        %v1882 = vadd.f32 %v1793, %v1881
        %v1883 = vpop.f32.mrf.mxu0
        %v1884 = vadd.f32 %v1795, %v1883
        %1885 = vmatmul.bf16.gmra.mxu0 %v788
        %v1886 = vpop.f32.mrf.mxu0
        %v1887 = vadd.f32 %v1798, %v1886
        %v1888 = vpop.f32.mrf.mxu0
        %v1889 = vadd.f32 %v1800, %v1888
        %1890 = vmatmul.bf16.gmra.mxu0 %v792
        %v1891 = vpop.f32.mrf.mxu0
        %v1892 = vadd.f32 %v1803, %v1891
        %v1893 = vpop.f32.mrf.mxu0
        %v1894 = vadd.f32 %v1805, %v1893
        %1895 = vmatmul.bf16.gmra.mxu0 %v796
        %v1896 = vpop.f32.mrf.mxu0
        %v1897 = vadd.f32 %v1808, %v1896
        %v1898 = vpop.f32.mrf.mxu0
        %v1899 = vadd.f32 %v1810, %v1898
        %1900 = vmatmul.bf16.gmra.mxu0 %v800
        %v1901 = vpop.f32.mrf.mxu0
        %v1902 = vadd.f32 %v1813, %v1901
        %v1903 = vpop.f32.mrf.mxu0
        %v1904 = vadd.f32 %v1815, %v1903
        %1905 = vmatmul.bf16.gmra.mxu0 %v804
        %v1906 = vpop.f32.mrf.mxu0
        %v1907 = vadd.f32 %v1818, %v1906
        %v1908 = vpop.f32.mrf.mxu0
        %v1909 = vadd.f32 %v1820, %v1908
        %1910 = vmatmul.bf16.gmra.mxu0 %v808
        %v1911 = vpop.f32.mrf.mxu0
        %v1912 = vadd.f32 %v1823, %v1911
        %v1913 = vpop.f32.mrf.mxu0
        %v1914 = vadd.f32 %v1825, %v1913
        %1915 = vmatmul.bf16.gmra.mxu0 %v812
        %v1916 = vpop.f32.mrf.mxu0
        %v1917 = vadd.f32 %v1828, %v1916
        %v1918 = vpop.f32.mrf.mxu0
        %v1919 = vadd.f32 %v1830, %v1918
        %1920 = vmatmul.bf16.gmra.mxu0 %v816
        %v1921 = vpop.f32.mrf.mxu0
        %v1922 = vadd.f32 %v1833, %v1921
        %v1923 = vpop.f32.mrf.mxu0
        %v1924 = vadd.f32 %v1835, %v1923
        %1925 = vmatmul.bf16.gmra.mxu0 %v820
        %v1926 = vpop.f32.mrf.mxu0
        %v1927 = vadd.f32 %v1838, %v1926
        %v1928 = vpop.f32.mrf.mxu0
        %v1929 = vadd.f32 %v1840, %v1928
        %1930 = vmatmul.bf16.gmra.mxu0 %v824
        %v1931 = vpop.f32.mrf.mxu0
        %v1932 = vadd.f32 %v1843, %v1931
        %v1933 = vpop.f32.mrf.mxu0
        %v1934 = vadd.f32 %v1845, %v1933
        %1935 = vmatmul.bf16.gmra.mxu0 %v828
        %v1936 = vpop.f32.mrf.mxu0
        %v1937 = vadd.f32 %v1848, %v1936
        %v1938 = vpop.f32.mrf.mxu0
        %v1939 = vadd.f32 %v1850, %v1938
        %1940 = vdwg.mxu0
        %1941 = vmatpush.bf16.msra.mxu0 %v1285
        %1942 = vmatpush.bf16.msra.mxu0 %v1282
        %1943 = vmatpush.bf16.msra.mxu0 %v1279
        %1944 = vmatpush.bf16.msra.mxu0 %v1276
        %1945 = vmatpush.bf16.msra.mxu0 %v1273
        %1946 = vmatpush.bf16.msra.mxu0 %v1270
        %1947 = vmatpush.bf16.msra.mxu0 %v1267
        %1948 = vmatpush.bf16.msra.mxu0 %v1264
        %1949 = vmatmul.bf16.gmra.mxu0 %v769
        %v1950 = vpop.f32.mrf.mxu0
        %v1951 = vadd.f32 %v1862, %v1950
        %v1952 = vpop.f32.mrf.mxu0
        %v1953 = vadd.f32 %v1864, %v1952
        %1954 = vmatmul.bf16.gmra.mxu0 %v773
        %v1955 = vpop.f32.mrf.mxu0
        %v1956 = vadd.f32 %v1867, %v1955
        %v1957 = vpop.f32.mrf.mxu0
        %v1958 = vadd.f32 %v1869, %v1957
        %1959 = vmatmul.bf16.gmra.mxu0 %v777
        %v1960 = vpop.f32.mrf.mxu0
        %v1961 = vadd.f32 %v1872, %v1960
        %v1962 = vpop.f32.mrf.mxu0
        %v1963 = vadd.f32 %v1874, %v1962
        %1964 = vmatmul.bf16.gmra.mxu0 %v781
        %v1965 = vpop.f32.mrf.mxu0
        %v1966 = vadd.f32 %v1877, %v1965
        %v1967 = vpop.f32.mrf.mxu0
        %v1968 = vadd.f32 %v1879, %v1967
        %1969 = vmatmul.bf16.gmra.mxu0 %v785
        %v1970 = vpop.f32.mrf.mxu0
        %v1971 = vadd.f32 %v1882, %v1970
        %v1972 = vpop.f32.mrf.mxu0
        %v1973 = vadd.f32 %v1884, %v1972
        %1974 = vmatmul.bf16.gmra.mxu0 %v789
        %v1975 = vpop.f32.mrf.mxu0
        %v1976 = vadd.f32 %v1887, %v1975
        %v1977 = vpop.f32.mrf.mxu0
        %v1978 = vadd.f32 %v1889, %v1977
        %1979 = vmatmul.bf16.gmra.mxu0 %v793
        %v1980 = vpop.f32.mrf.mxu0
        %v1981 = vadd.f32 %v1892, %v1980
        %v1982 = vpop.f32.mrf.mxu0
        %v1983 = vadd.f32 %v1894, %v1982
        %1984 = vmatmul.bf16.gmra.mxu0 %v797
        %v1985 = vpop.f32.mrf.mxu0
        %v1986 = vadd.f32 %v1897, %v1985
        %v1987 = vpop.f32.mrf.mxu0
        %v1988 = vadd.f32 %v1899, %v1987
        %1989 = vmatmul.bf16.gmra.mxu0 %v801
        %v1990 = vpop.f32.mrf.mxu0
        %v1991 = vadd.f32 %v1902, %v1990
        %v1992 = vpop.f32.mrf.mxu0
        %v1993 = vadd.f32 %v1904, %v1992
        %1994 = vmatmul.bf16.gmra.mxu0 %v805
        %v1995 = vpop.f32.mrf.mxu0
        %v1996 = vadd.f32 %v1907, %v1995
        %v1997 = vpop.f32.mrf.mxu0
        %v1998 = vadd.f32 %v1909, %v1997
        %1999 = vmatmul.bf16.gmra.mxu0 %v809
        %v2000 = vpop.f32.mrf.mxu0
        %v2001 = vadd.f32 %v1912, %v2000
        %v2002 = vpop.f32.mrf.mxu0
        %v2003 = vadd.f32 %v1914, %v2002
        %2004 = vmatmul.bf16.gmra.mxu0 %v813
        %v2005 = vpop.f32.mrf.mxu0
        %v2006 = vadd.f32 %v1917, %v2005
        %v2007 = vpop.f32.mrf.mxu0
        %v2008 = vadd.f32 %v1919, %v2007
        %2009 = vmatmul.bf16.gmra.mxu0 %v817
        %v2010 = vpop.f32.mrf.mxu0
        %v2011 = vadd.f32 %v1922, %v2010
        %v2012 = vpop.f32.mrf.mxu0
        %v2013 = vadd.f32 %v1924, %v2012
        %2014 = vmatmul.bf16.gmra.mxu0 %v821
        %v2015 = vpop.f32.mrf.mxu0
        %v2016 = vadd.f32 %v1927, %v2015
        %v2017 = vpop.f32.mrf.mxu0
        %v2018 = vadd.f32 %v1929, %v2017
        %2019 = vmatmul.bf16.gmra.mxu0 %v825
        %v2020 = vpop.f32.mrf.mxu0
        %v2021 = vadd.f32 %v1932, %v2020
        %v2022 = vpop.f32.mrf.mxu0
        %v2023 = vadd.f32 %v1934, %v2022
        %2024 = vmatmul.bf16.gmra.mxu0 %v829
        %v2025 = vpop.f32.mrf.mxu0
        %v2026 = vadd.f32 %v1937, %v2025
        %v2027 = vpop.f32.mrf.mxu0
        %v2028 = vadd.f32 %v1939, %v2027
        %2029 = vdwg.mxu0
        %2030 = vmatpush.bf16.msra.mxu0 %v1309
        %2031 = vmatpush.bf16.msra.mxu0 %v1306
        %2032 = vmatpush.bf16.msra.mxu0 %v1303
        %2033 = vmatpush.bf16.msra.mxu0 %v1300
        %2034 = vmatpush.bf16.msra.mxu0 %v1297
        %2035 = vmatpush.bf16.msra.mxu0 %v1294
        %2036 = vmatpush.bf16.msra.mxu0 %v1291
        %2037 = vmatpush.bf16.msra.mxu0 %v1288
        %2038 = vmatmul.bf16.gmra.mxu0 %v770
        %v2039 = vpop.f32.mrf.mxu0
        %v2040 = vadd.f32 %v1951, %v2039
        %v2041 = vpop.f32.mrf.mxu0
        %v2042 = vadd.f32 %v1953, %v2041
        %2043 = vmatmul.bf16.gmra.mxu0 %v774
        %v2044 = vpop.f32.mrf.mxu0
        %v2045 = vadd.f32 %v1956, %v2044
        %v2046 = vpop.f32.mrf.mxu0
        %v2047 = vadd.f32 %v1958, %v2046
        %2048 = vmatmul.bf16.gmra.mxu0 %v778
        %v2049 = vpop.f32.mrf.mxu0
        %v2050 = vadd.f32 %v1961, %v2049
        %v2051 = vpop.f32.mrf.mxu0
        %v2052 = vadd.f32 %v1963, %v2051
        %2053 = vmatmul.bf16.gmra.mxu0 %v782
        %v2054 = vpop.f32.mrf.mxu0
        %v2055 = vadd.f32 %v1966, %v2054
        %v2056 = vpop.f32.mrf.mxu0
        %v2057 = vadd.f32 %v1968, %v2056
        %2058 = vmatmul.bf16.gmra.mxu0 %v786
        %v2059 = vpop.f32.mrf.mxu0
        %v2060 = vadd.f32 %v1971, %v2059
        %v2061 = vpop.f32.mrf.mxu0
        %v2062 = vadd.f32 %v1973, %v2061
        %2063 = vmatmul.bf16.gmra.mxu0 %v790
        %v2064 = vpop.f32.mrf.mxu0
        %v2065 = vadd.f32 %v1976, %v2064
        %v2066 = vpop.f32.mrf.mxu0
        %v2067 = vadd.f32 %v1978, %v2066
        %2068 = vmatmul.bf16.gmra.mxu0 %v794
        %v2069 = vpop.f32.mrf.mxu0
        %v2070 = vadd.f32 %v1981, %v2069
        %v2071 = vpop.f32.mrf.mxu0
        %v2072 = vadd.f32 %v1983, %v2071
        %2073 = vmatmul.bf16.gmra.mxu0 %v798
        %v2074 = vpop.f32.mrf.mxu0
        %v2075 = vadd.f32 %v1986, %v2074
        %v2076 = vpop.f32.mrf.mxu0
        %v2077 = vadd.f32 %v1988, %v2076
        %2078 = vmatmul.bf16.gmra.mxu0 %v802
        %v2079 = vpop.f32.mrf.mxu0
        %v2080 = vadd.f32 %v1991, %v2079
        %v2081 = vpop.f32.mrf.mxu0
        %v2082 = vadd.f32 %v1993, %v2081
        %2083 = vmatmul.bf16.gmra.mxu0 %v806
        %v2084 = vpop.f32.mrf.mxu0
        %v2085 = vadd.f32 %v1996, %v2084
        %v2086 = vpop.f32.mrf.mxu0
        %v2087 = vadd.f32 %v1998, %v2086
        %2088 = vmatmul.bf16.gmra.mxu0 %v810
        %v2089 = vpop.f32.mrf.mxu0
        %v2090 = vadd.f32 %v2001, %v2089
        %v2091 = vpop.f32.mrf.mxu0
        %v2092 = vadd.f32 %v2003, %v2091
        %2093 = vmatmul.bf16.gmra.mxu0 %v814
        %v2094 = vpop.f32.mrf.mxu0
        %v2095 = vadd.f32 %v2006, %v2094
        %v2096 = vpop.f32.mrf.mxu0
        %v2097 = vadd.f32 %v2008, %v2096
        %2098 = vmatmul.bf16.gmra.mxu0 %v818
        %v2099 = vpop.f32.mrf.mxu0
        %v2100 = vadd.f32 %v2011, %v2099
        %v2101 = vpop.f32.mrf.mxu0
        %v2102 = vadd.f32 %v2013, %v2101
        %2103 = vmatmul.bf16.gmra.mxu0 %v822
        %v2104 = vpop.f32.mrf.mxu0
        %v2105 = vadd.f32 %v2016, %v2104
        %v2106 = vpop.f32.mrf.mxu0
        %v2107 = vadd.f32 %v2018, %v2106
        %2108 = vmatmul.bf16.gmra.mxu0 %v826
        %v2109 = vpop.f32.mrf.mxu0
        %v2110 = vadd.f32 %v2021, %v2109
        %v2111 = vpop.f32.mrf.mxu0
        %v2112 = vadd.f32 %v2023, %v2111
        %2113 = vmatmul.bf16.gmra.mxu0 %v830
        %v2114 = vpop.f32.mrf.mxu0
        %v2115 = vadd.f32 %v2026, %v2114
        %v2116 = vpop.f32.mrf.mxu0
        %v2117 = vadd.f32 %v2028, %v2116
        %2118 = vdwg.mxu0
        %2119 = vmatpush.bf16.msra.mxu0 %v1238
        %2120 = vmatpush.bf16.msra.mxu0 %v1235
        %2121 = vmatpush.bf16.msra.mxu0 %v1232
        %2122 = vmatpush.bf16.msra.mxu0 %v1229
        %2123 = vmatpush.bf16.msra.mxu0 %v1226
        %2124 = vmatpush.bf16.msra.mxu0 %v1223
        %2125 = vmatpush.bf16.msra.mxu0 %v1220
        %2126 = vmatpush.bf16.msra.mxu0 %v1217
        %2127 = vmatmul.bf16.gmra.mxu0 %v767
        %v2128 = vpop.f32.mrf.mxu0
        %v2129 = vadd.f32 0.0, %v2128
        %v2130 = vpop.f32.mrf.mxu0
        %v2131 = vadd.f32 0.0, %v2130
        %2132 = vmatmul.bf16.gmra.mxu0 %v771
        %v2133 = vpop.f32.mrf.mxu0
        %v2134 = vadd.f32 0.0, %v2133
        %v2135 = vpop.f32.mrf.mxu0
        %v2136 = vadd.f32 0.0, %v2135
        %2137 = vmatmul.bf16.gmra.mxu0 %v775
        %v2138 = vpop.f32.mrf.mxu0
        %v2139 = vadd.f32 0.0, %v2138
        %v2140 = vpop.f32.mrf.mxu0
        %v2141 = vadd.f32 0.0, %v2140
        %2142 = vmatmul.bf16.gmra.mxu0 %v779
        %v2143 = vpop.f32.mrf.mxu0
        %v2144 = vadd.f32 0.0, %v2143
        %v2145 = vpop.f32.mrf.mxu0
        %v2146 = vadd.f32 0.0, %v2145
        %2147 = vmatmul.bf16.gmra.mxu0 %v783
        %v2148 = vpop.f32.mrf.mxu0
        %v2149 = vadd.f32 0.0, %v2148
        %v2150 = vpop.f32.mrf.mxu0
        %v2151 = vadd.f32 0.0, %v2150
        %2152 = vmatmul.bf16.gmra.mxu0 %v787
        %v2153 = vpop.f32.mrf.mxu0
        %v2154 = vadd.f32 0.0, %v2153
        %v2155 = vpop.f32.mrf.mxu0
        %v2156 = vadd.f32 0.0, %v2155
        %2157 = vmatmul.bf16.gmra.mxu0 %v791
        %v2158 = vpop.f32.mrf.mxu0
        %v2159 = vadd.f32 0.0, %v2158
        %v2160 = vpop.f32.mrf.mxu0
        %v2161 = vadd.f32 0.0, %v2160
        %2162 = vmatmul.bf16.gmra.mxu0 %v795
        %v2163 = vpop.f32.mrf.mxu0
        %v2164 = vadd.f32 0.0, %v2163
        %v2165 = vpop.f32.mrf.mxu0
        %v2166 = vadd.f32 0.0, %v2165
        %2167 = vmatmul.bf16.gmra.mxu0 %v799
        %v2168 = vpop.f32.mrf.mxu0
        %v2169 = vadd.f32 0.0, %v2168
        %v2170 = vpop.f32.mrf.mxu0
        %v2171 = vadd.f32 0.0, %v2170
        %2172 = vmatmul.bf16.gmra.mxu0 %v803
        %v2173 = vpop.f32.mrf.mxu0
        %v2174 = vadd.f32 0.0, %v2173
        %v2175 = vpop.f32.mrf.mxu0
        %v2176 = vadd.f32 0.0, %v2175
        %2177 = vmatmul.bf16.gmra.mxu0 %v807
        %v2178 = vpop.f32.mrf.mxu0
        %v2179 = vadd.f32 0.0, %v2178
        %v2180 = vpop.f32.mrf.mxu0
        %v2181 = vadd.f32 0.0, %v2180
        %2182 = vmatmul.bf16.gmra.mxu0 %v811
        %v2183 = vpop.f32.mrf.mxu0
        %v2184 = vadd.f32 0.0, %v2183
        %v2185 = vpop.f32.mrf.mxu0
        %v2186 = vadd.f32 0.0, %v2185
        %2187 = vmatmul.bf16.gmra.mxu0 %v815
        %v2188 = vpop.f32.mrf.mxu0
        %v2189 = vadd.f32 0.0, %v2188
        %v2190 = vpop.f32.mrf.mxu0
        %v2191 = vadd.f32 0.0, %v2190
        %2192 = vmatmul.bf16.gmra.mxu0 %v819
        %v2193 = vpop.f32.mrf.mxu0
        %v2194 = vadd.f32 0.0, %v2193
        %v2195 = vpop.f32.mrf.mxu0
        %v2196 = vadd.f32 0.0, %v2195
        %2197 = vmatmul.bf16.gmra.mxu0 %v823
        %v2198 = vpop.f32.mrf.mxu0
        %v2199 = vadd.f32 0.0, %v2198
        %v2200 = vpop.f32.mrf.mxu0
        %v2201 = vadd.f32 0.0, %v2200
        %2202 = vmatmul.bf16.gmra.mxu0 %v827
        %v2203 = vpop.f32.mrf.mxu0
        %v2204 = vadd.f32 0.0, %v2203
        %v2205 = vpop.f32.mrf.mxu0
        %v2206 = vadd.f32 0.0, %v2205
        %2207 = vdwg.mxu0
        %2208 = vmatpush.bf16.msra.mxu0 %v1262
        %2209 = vmatpush.bf16.msra.mxu0 %v1259
        %2210 = vmatpush.bf16.msra.mxu0 %v1256
        %2211 = vmatpush.bf16.msra.mxu0 %v1253
        %2212 = vmatpush.bf16.msra.mxu0 %v1250
        %2213 = vmatpush.bf16.msra.mxu0 %v1247
        %2214 = vmatpush.bf16.msra.mxu0 %v1244
        %2215 = vmatpush.bf16.msra.mxu0 %v1241
        %2216 = vmatmul.bf16.gmra.mxu0 %v768
        %v2217 = vpop.f32.mrf.mxu0
        %v2218 = vadd.f32 %v2129, %v2217
        %v2219 = vpop.f32.mrf.mxu0
        %v2220 = vadd.f32 %v2131, %v2219
        %2221 = vmatmul.bf16.gmra.mxu0 %v772
        %v2222 = vpop.f32.mrf.mxu0
        %v2223 = vadd.f32 %v2134, %v2222
        %v2224 = vpop.f32.mrf.mxu0
        %v2225 = vadd.f32 %v2136, %v2224
        %2226 = vmatmul.bf16.gmra.mxu0 %v776
        %v2227 = vpop.f32.mrf.mxu0
        %v2228 = vadd.f32 %v2139, %v2227
        %v2229 = vpop.f32.mrf.mxu0
        %v2230 = vadd.f32 %v2141, %v2229
        %2231 = vmatmul.bf16.gmra.mxu0 %v780
        %v2232 = vpop.f32.mrf.mxu0
        %v2233 = vadd.f32 %v2144, %v2232
        %v2234 = vpop.f32.mrf.mxu0
        %v2235 = vadd.f32 %v2146, %v2234
        %2236 = vmatmul.bf16.gmra.mxu0 %v784
        %v2237 = vpop.f32.mrf.mxu0
        %v2238 = vadd.f32 %v2149, %v2237
        %v2239 = vpop.f32.mrf.mxu0
        %v2240 = vadd.f32 %v2151, %v2239
        %2241 = vmatmul.bf16.gmra.mxu0 %v788
        %v2242 = vpop.f32.mrf.mxu0
        %v2243 = vadd.f32 %v2154, %v2242
        %v2244 = vpop.f32.mrf.mxu0
        %v2245 = vadd.f32 %v2156, %v2244
        %2246 = vmatmul.bf16.gmra.mxu0 %v792
        %v2247 = vpop.f32.mrf.mxu0
        %v2248 = vadd.f32 %v2159, %v2247
        %v2249 = vpop.f32.mrf.mxu0
        %v2250 = vadd.f32 %v2161, %v2249
        %2251 = vmatmul.bf16.gmra.mxu0 %v796
        %v2252 = vpop.f32.mrf.mxu0
        %v2253 = vadd.f32 %v2164, %v2252
        %v2254 = vpop.f32.mrf.mxu0
        %v2255 = vadd.f32 %v2166, %v2254
        %2256 = vmatmul.bf16.gmra.mxu0 %v800
        %v2257 = vpop.f32.mrf.mxu0
        %v2258 = vadd.f32 %v2169, %v2257
        %v2259 = vpop.f32.mrf.mxu0
        %v2260 = vadd.f32 %v2171, %v2259
        %2261 = vmatmul.bf16.gmra.mxu0 %v804
        %v2262 = vpop.f32.mrf.mxu0
        %v2263 = vadd.f32 %v2174, %v2262
        %v2264 = vpop.f32.mrf.mxu0
        %v2265 = vadd.f32 %v2176, %v2264
        %2266 = vmatmul.bf16.gmra.mxu0 %v808
        %v2267 = vpop.f32.mrf.mxu0
        %v2268 = vadd.f32 %v2179, %v2267
        %v2269 = vpop.f32.mrf.mxu0
        %v2270 = vadd.f32 %v2181, %v2269
        %2271 = vmatmul.bf16.gmra.mxu0 %v812
        %v2272 = vpop.f32.mrf.mxu0
        %v2273 = vadd.f32 %v2184, %v2272
        %v2274 = vpop.f32.mrf.mxu0
        %v2275 = vadd.f32 %v2186, %v2274
        %2276 = vmatmul.bf16.gmra.mxu0 %v816
        %v2277 = vpop.f32.mrf.mxu0
        %v2278 = vadd.f32 %v2189, %v2277
        %v2279 = vpop.f32.mrf.mxu0
        %v2280 = vadd.f32 %v2191, %v2279
        %2281 = vmatmul.bf16.gmra.mxu0 %v820
        %v2282 = vpop.f32.mrf.mxu0
        %v2283 = vadd.f32 %v2194, %v2282
        %v2284 = vpop.f32.mrf.mxu0
        %v2285 = vadd.f32 %v2196, %v2284
        %2286 = vmatmul.bf16.gmra.mxu0 %v824
        %v2287 = vpop.f32.mrf.mxu0
        %v2288 = vadd.f32 %v2199, %v2287
        %v2289 = vpop.f32.mrf.mxu0
        %v2290 = vadd.f32 %v2201, %v2289
        %2291 = vmatmul.bf16.gmra.mxu0 %v828
        %v2292 = vpop.f32.mrf.mxu0
        %v2293 = vadd.f32 %v2204, %v2292
        %v2294 = vpop.f32.mrf.mxu0
        %v2295 = vadd.f32 %v2206, %v2294
        %2296 = vdwg.mxu0
        %2297 = vmatpush.bf16.msra.mxu0 %v1286
        %2298 = vmatpush.bf16.msra.mxu0 %v1283
        %2299 = vmatpush.bf16.msra.mxu0 %v1280
        %2300 = vmatpush.bf16.msra.mxu0 %v1277
        %2301 = vmatpush.bf16.msra.mxu0 %v1274
        %2302 = vmatpush.bf16.msra.mxu0 %v1271
        %2303 = vmatpush.bf16.msra.mxu0 %v1268
        %2304 = vmatpush.bf16.msra.mxu0 %v1265
        %2305 = vmatmul.bf16.gmra.mxu0 %v769
        %v2306 = vpop.f32.mrf.mxu0
        %v2307 = vadd.f32 %v2218, %v2306
        %v2308 = vpop.f32.mrf.mxu0
        %v2309 = vadd.f32 %v2220, %v2308
        %2310 = vmatmul.bf16.gmra.mxu0 %v773
        %v2311 = vpop.f32.mrf.mxu0
        %v2312 = vadd.f32 %v2223, %v2311
        %v2313 = vpop.f32.mrf.mxu0
        %v2314 = vadd.f32 %v2225, %v2313
        %2315 = vmatmul.bf16.gmra.mxu0 %v777
        %v2316 = vpop.f32.mrf.mxu0
        %v2317 = vadd.f32 %v2228, %v2316
        %v2318 = vpop.f32.mrf.mxu0
        %v2319 = vadd.f32 %v2230, %v2318
        %2320 = vmatmul.bf16.gmra.mxu0 %v781
        %v2321 = vpop.f32.mrf.mxu0
        %v2322 = vadd.f32 %v2233, %v2321
        %v2323 = vpop.f32.mrf.mxu0
        %v2324 = vadd.f32 %v2235, %v2323
        %2325 = vmatmul.bf16.gmra.mxu0 %v785
        %v2326 = vpop.f32.mrf.mxu0
        %v2327 = vadd.f32 %v2238, %v2326
        %v2328 = vpop.f32.mrf.mxu0
        %v2329 = vadd.f32 %v2240, %v2328
        %2330 = vmatmul.bf16.gmra.mxu0 %v789
        %v2331 = vpop.f32.mrf.mxu0
        %v2332 = vadd.f32 %v2243, %v2331
        %v2333 = vpop.f32.mrf.mxu0
        %v2334 = vadd.f32 %v2245, %v2333
        %2335 = vmatmul.bf16.gmra.mxu0 %v793
        %v2336 = vpop.f32.mrf.mxu0
        %v2337 = vadd.f32 %v2248, %v2336
        %v2338 = vpop.f32.mrf.mxu0
        %v2339 = vadd.f32 %v2250, %v2338
        %2340 = vmatmul.bf16.gmra.mxu0 %v797
        %v2341 = vpop.f32.mrf.mxu0
        %v2342 = vadd.f32 %v2253, %v2341
        %v2343 = vpop.f32.mrf.mxu0
        %v2344 = vadd.f32 %v2255, %v2343
        %2345 = vmatmul.bf16.gmra.mxu0 %v801
        %v2346 = vpop.f32.mrf.mxu0
        %v2347 = vadd.f32 %v2258, %v2346
        %v2348 = vpop.f32.mrf.mxu0
        %v2349 = vadd.f32 %v2260, %v2348
        %2350 = vmatmul.bf16.gmra.mxu0 %v805
        %v2351 = vpop.f32.mrf.mxu0
        %v2352 = vadd.f32 %v2263, %v2351
        %v2353 = vpop.f32.mrf.mxu0
        %v2354 = vadd.f32 %v2265, %v2353
        %2355 = vmatmul.bf16.gmra.mxu0 %v809
        %v2356 = vpop.f32.mrf.mxu0
        %v2357 = vadd.f32 %v2268, %v2356
        %v2358 = vpop.f32.mrf.mxu0
        %v2359 = vadd.f32 %v2270, %v2358
        %2360 = vmatmul.bf16.gmra.mxu0 %v813
        %v2361 = vpop.f32.mrf.mxu0
        %v2362 = vadd.f32 %v2273, %v2361
        %v2363 = vpop.f32.mrf.mxu0
        %v2364 = vadd.f32 %v2275, %v2363
        %2365 = vmatmul.bf16.gmra.mxu0 %v817
        %v2366 = vpop.f32.mrf.mxu0
        %v2367 = vadd.f32 %v2278, %v2366
        %v2368 = vpop.f32.mrf.mxu0
        %v2369 = vadd.f32 %v2280, %v2368
        %2370 = vmatmul.bf16.gmra.mxu0 %v821
        %v2371 = vpop.f32.mrf.mxu0
        %v2372 = vadd.f32 %v2283, %v2371
        %v2373 = vpop.f32.mrf.mxu0
        %v2374 = vadd.f32 %v2285, %v2373
        %2375 = vmatmul.bf16.gmra.mxu0 %v825
        %v2376 = vpop.f32.mrf.mxu0
        %v2377 = vadd.f32 %v2288, %v2376
        %v2378 = vpop.f32.mrf.mxu0
        %v2379 = vadd.f32 %v2290, %v2378
        %2380 = vmatmul.bf16.gmra.mxu0 %v829
        %v2381 = vpop.f32.mrf.mxu0
        %v2382 = vadd.f32 %v2293, %v2381
        %v2383 = vpop.f32.mrf.mxu0
        %v2384 = vadd.f32 %v2295, %v2383
        %2385 = vdwg.mxu0
        %2386 = vmatpush.bf16.msra.mxu0 %v1310
        %2387 = vmatpush.bf16.msra.mxu0 %v1307
        %2388 = vmatpush.bf16.msra.mxu0 %v1304
        %2389 = vmatpush.bf16.msra.mxu0 %v1301
        %2390 = vmatpush.bf16.msra.mxu0 %v1298
        %2391 = vmatpush.bf16.msra.mxu0 %v1295
        %2392 = vmatpush.bf16.msra.mxu0 %v1292
        %2393 = vmatpush.bf16.msra.mxu0 %v1289
        %2394 = vmatmul.bf16.gmra.mxu0 %v770
        %v2395 = vpop.f32.mrf.mxu0
        %v2396 = vadd.f32 %v2307, %v2395
        %v2397 = vpop.f32.mrf.mxu0
        %v2398 = vadd.f32 %v2309, %v2397
        %2399 = vmatmul.bf16.gmra.mxu0 %v774
        %v2400 = vpop.f32.mrf.mxu0
        %v2401 = vadd.f32 %v2312, %v2400
        %v2402 = vpop.f32.mrf.mxu0
        %v2403 = vadd.f32 %v2314, %v2402
        %2404 = vmatmul.bf16.gmra.mxu0 %v778
        %v2405 = vpop.f32.mrf.mxu0
        %v2406 = vadd.f32 %v2317, %v2405
        %v2407 = vpop.f32.mrf.mxu0
        %v2408 = vadd.f32 %v2319, %v2407
        %2409 = vmatmul.bf16.gmra.mxu0 %v782
        %v2410 = vpop.f32.mrf.mxu0
        %v2411 = vadd.f32 %v2322, %v2410
        %v2412 = vpop.f32.mrf.mxu0
        %v2413 = vadd.f32 %v2324, %v2412
        %2414 = vmatmul.bf16.gmra.mxu0 %v786
        %v2415 = vpop.f32.mrf.mxu0
        %v2416 = vadd.f32 %v2327, %v2415
        %v2417 = vpop.f32.mrf.mxu0
        %v2418 = vadd.f32 %v2329, %v2417
        %2419 = vmatmul.bf16.gmra.mxu0 %v790
        %v2420 = vpop.f32.mrf.mxu0
        %v2421 = vadd.f32 %v2332, %v2420
        %v2422 = vpop.f32.mrf.mxu0
        %v2423 = vadd.f32 %v2334, %v2422
        %2424 = vmatmul.bf16.gmra.mxu0 %v794
        %v2425 = vpop.f32.mrf.mxu0
        %v2426 = vadd.f32 %v2337, %v2425
        %v2427 = vpop.f32.mrf.mxu0
        %v2428 = vadd.f32 %v2339, %v2427
        %2429 = vmatmul.bf16.gmra.mxu0 %v798
        %v2430 = vpop.f32.mrf.mxu0
        %v2431 = vadd.f32 %v2342, %v2430
        %v2432 = vpop.f32.mrf.mxu0
        %v2433 = vadd.f32 %v2344, %v2432
        %2434 = vmatmul.bf16.gmra.mxu0 %v802
        %v2435 = vpop.f32.mrf.mxu0
        %v2436 = vadd.f32 %v2347, %v2435
        %v2437 = vpop.f32.mrf.mxu0
        %v2438 = vadd.f32 %v2349, %v2437
        %2439 = vmatmul.bf16.gmra.mxu0 %v806
        %v2440 = vpop.f32.mrf.mxu0
        %v2441 = vadd.f32 %v2352, %v2440
        %v2442 = vpop.f32.mrf.mxu0
        %v2443 = vadd.f32 %v2354, %v2442
        %2444 = vmatmul.bf16.gmra.mxu0 %v810
        %v2445 = vpop.f32.mrf.mxu0
        %v2446 = vadd.f32 %v2357, %v2445
        %v2447 = vpop.f32.mrf.mxu0
        %v2448 = vadd.f32 %v2359, %v2447
        %2449 = vmatmul.bf16.gmra.mxu0 %v814
        %v2450 = vpop.f32.mrf.mxu0
        %v2451 = vadd.f32 %v2362, %v2450
        %v2452 = vpop.f32.mrf.mxu0
        %v2453 = vadd.f32 %v2364, %v2452
        %2454 = vmatmul.bf16.gmra.mxu0 %v818
        %v2455 = vpop.f32.mrf.mxu0
        %v2456 = vadd.f32 %v2367, %v2455
        %v2457 = vpop.f32.mrf.mxu0
        %v2458 = vadd.f32 %v2369, %v2457
        %2459 = vmatmul.bf16.gmra.mxu0 %v822
        %v2460 = vpop.f32.mrf.mxu0
        %v2461 = vadd.f32 %v2372, %v2460
        %v2462 = vpop.f32.mrf.mxu0
        %v2463 = vadd.f32 %v2374, %v2462
        %2464 = vmatmul.bf16.gmra.mxu0 %v826
        %v2465 = vpop.f32.mrf.mxu0
        %v2466 = vadd.f32 %v2377, %v2465
        %v2467 = vpop.f32.mrf.mxu0
        %v2468 = vadd.f32 %v2379, %v2467
        %2469 = vmatmul.bf16.gmra.mxu0 %v830
        %v2470 = vpop.f32.mrf.mxu0
        %v2471 = vadd.f32 %v2382, %v2470
        %v2472 = vpop.f32.mrf.mxu0
        %v2473 = vadd.f32 %v2384, %v2472
        %2474 = vdwg.mxu0
        %v2475 = vperm.slane %v382, 0
        %v2476 = vadd.f32 %v1684, %v2475
        %v2477 = vadd.f32 %v1686, %v2475
        %v2478 = vadd.f32 %v1689, %v2475
        %v2479 = vadd.f32 %v1691, %v2475
        %v2480 = vadd.f32 %v1694, %v2475
        %v2481 = vadd.f32 %v1696, %v2475
        %v2482 = vadd.f32 %v1699, %v2475
        %v2483 = vadd.f32 %v1701, %v2475
        %v2484 = vadd.f32 %v1704, %v2475
        %v2485 = vadd.f32 %v1706, %v2475
        %v2486 = vadd.f32 %v1709, %v2475
        %v2487 = vadd.f32 %v1711, %v2475
        %v2488 = vadd.f32 %v1714, %v2475
        %v2489 = vadd.f32 %v1716, %v2475
        %v2490 = vadd.f32 %v1719, %v2475
        %v2491 = vadd.f32 %v1721, %v2475
        %v2492 = vadd.f32 %v1724, %v2475
        %v2493 = vadd.f32 %v1726, %v2475
        %v2494 = vadd.f32 %v1729, %v2475
        %v2495 = vadd.f32 %v1731, %v2475
        %v2496 = vadd.f32 %v1734, %v2475
        %v2497 = vadd.f32 %v1736, %v2475
        %v2498 = vadd.f32 %v1739, %v2475
        %v2499 = vadd.f32 %v1741, %v2475
        %v2500 = vadd.f32 %v1744, %v2475
        %v2501 = vadd.f32 %v1746, %v2475
        %v2502 = vadd.f32 %v1749, %v2475
        %v2503 = vadd.f32 %v1751, %v2475
        %v2504 = vadd.f32 %v1754, %v2475
        %v2505 = vadd.f32 %v1756, %v2475
        %v2506 = vadd.f32 %v1759, %v2475
        %v2507 = vadd.f32 %v1761, %v2475
        %v2508 = vperm.slane %v382, 1
        %v2509 = vadd.f32 %v2040, %v2508
        %v2510 = vadd.f32 %v2042, %v2508
        %v2511 = vadd.f32 %v2045, %v2508
        %v2512 = vadd.f32 %v2047, %v2508
        %v2513 = vadd.f32 %v2050, %v2508
        %v2514 = vadd.f32 %v2052, %v2508
        %v2515 = vadd.f32 %v2055, %v2508
        %v2516 = vadd.f32 %v2057, %v2508
        %v2517 = vadd.f32 %v2060, %v2508
        %v2518 = vadd.f32 %v2062, %v2508
        %v2519 = vadd.f32 %v2065, %v2508
        %v2520 = vadd.f32 %v2067, %v2508
        %v2521 = vadd.f32 %v2070, %v2508
        %v2522 = vadd.f32 %v2072, %v2508
        %v2523 = vadd.f32 %v2075, %v2508
        %v2524 = vadd.f32 %v2077, %v2508
        %v2525 = vadd.f32 %v2080, %v2508
        %v2526 = vadd.f32 %v2082, %v2508
        %v2527 = vadd.f32 %v2085, %v2508
        %v2528 = vadd.f32 %v2087, %v2508
        %v2529 = vadd.f32 %v2090, %v2508
        %v2530 = vadd.f32 %v2092, %v2508
        %v2531 = vadd.f32 %v2095, %v2508
        %v2532 = vadd.f32 %v2097, %v2508
        %v2533 = vadd.f32 %v2100, %v2508
        %v2534 = vadd.f32 %v2102, %v2508
        %v2535 = vadd.f32 %v2105, %v2508
        %v2536 = vadd.f32 %v2107, %v2508
        %v2537 = vadd.f32 %v2110, %v2508
        %v2538 = vadd.f32 %v2112, %v2508
        %v2539 = vadd.f32 %v2115, %v2508
        %v2540 = vadd.f32 %v2117, %v2508
        %v2541 = vperm.slane %v382, 2
        %v2542 = vadd.f32 %v2396, %v2541
        %v2543 = vadd.f32 %v2398, %v2541
        %v2544 = vadd.f32 %v2401, %v2541
        %v2545 = vadd.f32 %v2403, %v2541
        %v2546 = vadd.f32 %v2406, %v2541
        %v2547 = vadd.f32 %v2408, %v2541
        %v2548 = vadd.f32 %v2411, %v2541
        %v2549 = vadd.f32 %v2413, %v2541
        %v2550 = vadd.f32 %v2416, %v2541
        %v2551 = vadd.f32 %v2418, %v2541
        %v2552 = vadd.f32 %v2421, %v2541
        %v2553 = vadd.f32 %v2423, %v2541
        %v2554 = vadd.f32 %v2426, %v2541
        %v2555 = vadd.f32 %v2428, %v2541
        %v2556 = vadd.f32 %v2431, %v2541
        %v2557 = vadd.f32 %v2433, %v2541
        %v2558 = vadd.f32 %v2436, %v2541
        %v2559 = vadd.f32 %v2438, %v2541
        %v2560 = vadd.f32 %v2441, %v2541
        %v2561 = vadd.f32 %v2443, %v2541
        %v2562 = vadd.f32 %v2446, %v2541
        %v2563 = vadd.f32 %v2448, %v2541
        %v2564 = vadd.f32 %v2451, %v2541
        %v2565 = vadd.f32 %v2453, %v2541
        %v2566 = vadd.f32 %v2456, %v2541
        %v2567 = vadd.f32 %v2458, %v2541
        %v2568 = vadd.f32 %v2461, %v2541
        %v2569 = vadd.f32 %v2463, %v2541
        %v2570 = vadd.f32 %v2466, %v2541
        %v2571 = vadd.f32 %v2468, %v2541
        %v2572 = vadd.f32 %v2471, %v2541
        %v2573 = vadd.f32 %v2473, %v2541
        %v2574 = vmul.f32 %v2542, %v2476
        %v2575 = vmul.f32 %v2543, %v2477
        %v2576 = vmul.f32 %v2544, %v2478
        %v2577 = vmul.f32 %v2545, %v2479
        %v2578 = vmul.f32 %v2546, %v2480
        %v2579 = vmul.f32 %v2547, %v2481
        %v2580 = vmul.f32 %v2548, %v2482
        %v2581 = vmul.f32 %v2549, %v2483
        %v2582 = vmul.f32 %v2550, %v2484
        %v2583 = vmul.f32 %v2551, %v2485
        %v2584 = vmul.f32 %v2552, %v2486
        %v2585 = vmul.f32 %v2553, %v2487
        %v2586 = vmul.f32 %v2554, %v2488
        %v2587 = vmul.f32 %v2555, %v2489
        %v2588 = vmul.f32 %v2556, %v2490
        %v2589 = vmul.f32 %v2557, %v2491
        %v2590 = vmul.f32 %v2558, %v2492
        %v2591 = vmul.f32 %v2559, %v2493
        %v2592 = vmul.f32 %v2560, %v2494
        %v2593 = vmul.f32 %v2561, %v2495
        %v2594 = vmul.f32 %v2562, %v2496
        %v2595 = vmul.f32 %v2563, %v2497
        %v2596 = vmul.f32 %v2564, %v2498
        %v2597 = vmul.f32 %v2565, %v2499
        %v2598 = vmul.f32 %v2566, %v2500
        %v2599 = vmul.f32 %v2567, %v2501
        %v2600 = vmul.f32 %v2568, %v2502
        %v2601 = vmul.f32 %v2569, %v2503
        %v2602 = vmul.f32 %v2570, %v2504
        %v2603 = vmul.f32 %v2571, %v2505
        %v2604 = vmul.f32 %v2572, %v2506
        %v2605 = vmul.f32 %v2573, %v2507
        %v2606 = vpack.c.bf16 %v2575, %v2574
        %v2607 = vpack.c.bf16 %v2577, %v2576
        %v2608 = vpack.c.bf16 %v2579, %v2578
        %v2609 = vpack.c.bf16 %v2581, %v2580
        %v2610 = vpack.c.bf16 %v2583, %v2582
        %v2611 = vpack.c.bf16 %v2585, %v2584
        %v2612 = vpack.c.bf16 %v2587, %v2586
        %v2613 = vpack.c.bf16 %v2589, %v2588
        %v2614 = vpack.c.bf16 %v2591, %v2590
        %v2615 = vpack.c.bf16 %v2593, %v2592
        %v2616 = vpack.c.bf16 %v2595, %v2594
        %v2617 = vpack.c.bf16 %v2597, %v2596
        %v2618 = vpack.c.bf16 %v2599, %v2598
        %v2619 = vpack.c.bf16 %v2601, %v2600
        %v2620 = vpack.c.bf16 %v2603, %v2602
        %v2621 = vpack.c.bf16 %v2605, %v2604
        %v2622 = vld [vmem:[#allocation10] sm:$0xf]
        %v2623 = vld [vmem:[#allocation10 + $0x4] sm:$0xf]
        %v2624 = vld [vmem:[#allocation10 + $0x8] sm:$0xf]
        %v2625 = vld [vmem:[#allocation10 + $0xc] sm:$0xf]
        %v2626 = vld [vmem:[#allocation10 + $0x10] sm:$0xf]
        %v2627 = vld [vmem:[#allocation10 + $0x14] sm:$0xf]
        %v2628 = vld [vmem:[#allocation10 + $0x18] sm:$0xf]
        %v2629 = vld [vmem:[#allocation10 + $0x1c] sm:$0xf]
        %v2630 = vld [vmem:[#allocation10 + $0x20] sm:$0xf]
        %v2631 = vld [vmem:[#allocation10 + $0x24] sm:$0xf]
        %v2632 = vld [vmem:[#allocation10 + $0x28] sm:$0xf]
        %v2633 = vld [vmem:[#allocation10 + $0x2c] sm:$0xf]
        %v2634 = vld [vmem:[#allocation10 + $0x30] sm:$0xf]
        %v2635 = vld [vmem:[#allocation10 + $0x34] sm:$0xf]
        %v2636 = vld [vmem:[#allocation10 + $0x38] sm:$0xf]
        %v2637 = vld [vmem:[#allocation10 + $0x3c] sm:$0xf]
        %v2654 = vunpack.c.l.b16 %v2622
        %v2655 = vunpack.c.l.b16 %v2623
        %v2656 = vunpack.c.l.b16 %v2624
        %v2657 = vunpack.c.l.b16 %v2625
        %v2658 = vunpack.c.l.b16 %v2626
        %v2659 = vunpack.c.l.b16 %v2627
        %v2660 = vunpack.c.l.b16 %v2628
        %v2661 = vunpack.c.l.b16 %v2629
        %v2662 = vunpack.c.l.b16 %v2630
        %v2663 = vunpack.c.l.b16 %v2631
        %v2664 = vunpack.c.l.b16 %v2632
        %v2665 = vunpack.c.l.b16 %v2633
        %v2666 = vunpack.c.l.b16 %v2634
        %v2667 = vunpack.c.l.b16 %v2635
        %v2668 = vunpack.c.l.b16 %v2636
        %v2669 = vunpack.c.l.b16 %v2637
        %v2670 = vpack.c.b16 %v2655, %v2654
        %v2671 = vpack.c.b16 %v2657, %v2656
        %v2672 = vpack.c.b16 %v2659, %v2658
        %v2673 = vpack.c.b16 %v2661, %v2660
        %v2674 = vpack.c.b16 %v2663, %v2662
        %v2675 = vpack.c.b16 %v2665, %v2664
        %v2676 = vpack.c.b16 %v2667, %v2666
        %v2677 = vpack.c.b16 %v2669, %v2668
        %2686 = vmatpush.bf16.msra.mxu0 %v2677
        %2687 = vmatpush.bf16.msra.mxu0 %v2676
        %2688 = vmatpush.bf16.msra.mxu0 %v2675
        %2689 = vmatpush.bf16.msra.mxu0 %v2674
        %2690 = vmatpush.bf16.msra.mxu0 %v2673
        %2691 = vmatpush.bf16.msra.mxu0 %v2672
        %2692 = vmatpush.bf16.msra.mxu0 %v2671
        %2693 = vmatpush.bf16.msra.mxu0 %v2670
        %2694 = vmatmul.bf16.gmra.mxu0 %v2606
        %v2695 = vpop.f32.mrf.mxu0
        %v2696 = vadd.f32 0.0, %v2695
        %v2697 = vpop.f32.mrf.mxu0
        %v2698 = vadd.f32 0.0, %v2697
        %2699 = vmatmul.bf16.gmra.mxu0 %v2607
        %v2700 = vpop.f32.mrf.mxu0
        %v2701 = vadd.f32 0.0, %v2700
        %v2702 = vpop.f32.mrf.mxu0
        %v2703 = vadd.f32 0.0, %v2702
        %2704 = vmatmul.bf16.gmra.mxu0 %v2608
        %v2705 = vpop.f32.mrf.mxu0
        %v2706 = vadd.f32 0.0, %v2705
        %v2707 = vpop.f32.mrf.mxu0
        %v2708 = vadd.f32 0.0, %v2707
        %2709 = vmatmul.bf16.gmra.mxu0 %v2609
        %v2710 = vpop.f32.mrf.mxu0
        %v2711 = vadd.f32 0.0, %v2710
        %v2712 = vpop.f32.mrf.mxu0
        %v2713 = vadd.f32 0.0, %v2712
        %2714 = vmatmul.bf16.gmra.mxu0 %v2610
        %v2715 = vpop.f32.mrf.mxu0
        %v2716 = vadd.f32 0.0, %v2715
        %v2717 = vpop.f32.mrf.mxu0
        %v2718 = vadd.f32 0.0, %v2717
        %2719 = vmatmul.bf16.gmra.mxu0 %v2611
        %v2720 = vpop.f32.mrf.mxu0
        %v2721 = vadd.f32 0.0, %v2720
        %v2722 = vpop.f32.mrf.mxu0
        %v2723 = vadd.f32 0.0, %v2722
        %2724 = vmatmul.bf16.gmra.mxu0 %v2612
        %v2725 = vpop.f32.mrf.mxu0
        %v2726 = vadd.f32 0.0, %v2725
        %v2727 = vpop.f32.mrf.mxu0
        %v2728 = vadd.f32 0.0, %v2727
        %2729 = vmatmul.bf16.gmra.mxu0 %v2613
        %v2730 = vpop.f32.mrf.mxu0
        %v2731 = vadd.f32 0.0, %v2730
        %v2732 = vpop.f32.mrf.mxu0
        %v2733 = vadd.f32 0.0, %v2732
        %2734 = vmatmul.bf16.gmra.mxu0 %v2614
        %v2735 = vpop.f32.mrf.mxu0
        %v2736 = vadd.f32 0.0, %v2735
        %v2737 = vpop.f32.mrf.mxu0
        %v2738 = vadd.f32 0.0, %v2737
        %2739 = vmatmul.bf16.gmra.mxu0 %v2615
        %v2740 = vpop.f32.mrf.mxu0
        %v2741 = vadd.f32 0.0, %v2740
        %v2742 = vpop.f32.mrf.mxu0
        %v2743 = vadd.f32 0.0, %v2742
        %2744 = vmatmul.bf16.gmra.mxu0 %v2616
        %v2745 = vpop.f32.mrf.mxu0
        %v2746 = vadd.f32 0.0, %v2745
        %v2747 = vpop.f32.mrf.mxu0
        %v2748 = vadd.f32 0.0, %v2747
        %2749 = vmatmul.bf16.gmra.mxu0 %v2617
        %v2750 = vpop.f32.mrf.mxu0
        %v2751 = vadd.f32 0.0, %v2750
        %v2752 = vpop.f32.mrf.mxu0
        %v2753 = vadd.f32 0.0, %v2752
        %2754 = vmatmul.bf16.gmra.mxu0 %v2618
        %v2755 = vpop.f32.mrf.mxu0
        %v2756 = vadd.f32 0.0, %v2755
        %v2757 = vpop.f32.mrf.mxu0
        %v2758 = vadd.f32 0.0, %v2757
        %2759 = vmatmul.bf16.gmra.mxu0 %v2619
        %v2760 = vpop.f32.mrf.mxu0
        %v2761 = vadd.f32 0.0, %v2760
        %v2762 = vpop.f32.mrf.mxu0
        %v2763 = vadd.f32 0.0, %v2762
        %2764 = vmatmul.bf16.gmra.mxu0 %v2620
        %v2765 = vpop.f32.mrf.mxu0
        %v2766 = vadd.f32 0.0, %v2765
        %v2767 = vpop.f32.mrf.mxu0
        %v2768 = vadd.f32 0.0, %v2767
        %2769 = vmatmul.bf16.gmra.mxu0 %v2621
        %v2770 = vpop.f32.mrf.mxu0
        %v2771 = vadd.f32 0.0, %v2770
        %v2772 = vpop.f32.mrf.mxu0
        %v2773 = vadd.f32 0.0, %v2772
        %2774 = vdwg.mxu0
        %vm2775 = vcmp.ge.f32.partialorder %v2696, 0.0
        %vm2776 = vcmp.ge.f32.partialorder %v2698, 0.0
        %vm2777 = vcmp.ge.f32.partialorder %v2701, 0.0
        %vm2778 = vcmp.ge.f32.partialorder %v2703, 0.0
        %vm2779 = vcmp.ge.f32.partialorder %v2706, 0.0
        %vm2780 = vcmp.ge.f32.partialorder %v2708, 0.0
        %vm2781 = vcmp.ge.f32.partialorder %v2711, 0.0
        %vm2782 = vcmp.ge.f32.partialorder %v2713, 0.0
        %vm2783 = vcmp.ge.f32.partialorder %v2716, 0.0
        %vm2784 = vcmp.ge.f32.partialorder %v2718, 0.0
        %vm2785 = vcmp.ge.f32.partialorder %v2721, 0.0
        %vm2786 = vcmp.ge.f32.partialorder %v2723, 0.0
        %vm2787 = vcmp.ge.f32.partialorder %v2726, 0.0
        %vm2788 = vcmp.ge.f32.partialorder %v2728, 0.0
        %vm2789 = vcmp.ge.f32.partialorder %v2731, 0.0
        %vm2790 = vcmp.ge.f32.partialorder %v2733, 0.0
        %vm2791 = vcmp.ge.f32.partialorder %v2736, 0.0
        %vm2792 = vcmp.ge.f32.partialorder %v2738, 0.0
        %vm2793 = vcmp.ge.f32.partialorder %v2741, 0.0
        %vm2794 = vcmp.ge.f32.partialorder %v2743, 0.0
        %vm2795 = vcmp.ge.f32.partialorder %v2746, 0.0
        %vm2796 = vcmp.ge.f32.partialorder %v2748, 0.0
        %vm2797 = vcmp.ge.f32.partialorder %v2751, 0.0
        %vm2798 = vcmp.ge.f32.partialorder %v2753, 0.0
        %vm2799 = vcmp.ge.f32.partialorder %v2756, 0.0
        %vm2800 = vcmp.ge.f32.partialorder %v2758, 0.0
        %vm2801 = vcmp.ge.f32.partialorder %v2761, 0.0
        %vm2802 = vcmp.ge.f32.partialorder %v2763, 0.0
        %vm2803 = vcmp.ge.f32.partialorder %v2766, 0.0
        %vm2804 = vcmp.ge.f32.partialorder %v2768, 0.0
        %vm2805 = vcmp.ge.f32.partialorder %v2771, 0.0
        %vm2806 = vcmp.ge.f32.partialorder %v2773, 0.0
        %v2807 = vmul.f32 %v2696, 0.2
        %v2808 = vmul.f32 %v2698, 0.2
        %v2809 = vmul.f32 %v2701, 0.2
        %v2810 = vmul.f32 %v2703, 0.2
        %v2811 = vmul.f32 %v2706, 0.2
        %v2812 = vmul.f32 %v2708, 0.2
        %v2813 = vmul.f32 %v2711, 0.2
        %v2814 = vmul.f32 %v2713, 0.2
        %v2815 = vmul.f32 %v2716, 0.2
        %v2816 = vmul.f32 %v2718, 0.2
        %v2817 = vmul.f32 %v2721, 0.2
        %v2818 = vmul.f32 %v2723, 0.2
        %v2819 = vmul.f32 %v2726, 0.2
        %v2820 = vmul.f32 %v2728, 0.2
        %v2821 = vmul.f32 %v2731, 0.2
        %v2822 = vmul.f32 %v2733, 0.2
        %v2823 = vmul.f32 %v2736, 0.2
        %v2824 = vmul.f32 %v2738, 0.2
        %v2825 = vmul.f32 %v2741, 0.2
        %v2826 = vmul.f32 %v2743, 0.2
        %v2827 = vmul.f32 %v2746, 0.2
        %v2828 = vmul.f32 %v2748, 0.2
        %v2829 = vmul.f32 %v2751, 0.2
        %v2830 = vmul.f32 %v2753, 0.2
        %v2831 = vmul.f32 %v2756, 0.2
        %v2832 = vmul.f32 %v2758, 0.2
        %v2833 = vmul.f32 %v2761, 0.2
        %v2834 = vmul.f32 %v2763, 0.2
        %v2835 = vmul.f32 %v2766, 0.2
        %v2836 = vmul.f32 %v2768, 0.2
        %v2837 = vmul.f32 %v2771, 0.2
        %v2838 = vmul.f32 %v2773, 0.2
        %v2839 = vsel %vm2775, %v2696, %v2807
        %v2840 = vsel %vm2776, %v2698, %v2808
        %v2841 = vsel %vm2777, %v2701, %v2809
        %v2842 = vsel %vm2778, %v2703, %v2810
        %v2843 = vsel %vm2779, %v2706, %v2811
        %v2844 = vsel %vm2780, %v2708, %v2812
        %v2845 = vsel %vm2781, %v2711, %v2813
        %v2846 = vsel %vm2782, %v2713, %v2814
        %v2847 = vsel %vm2783, %v2716, %v2815
        %v2848 = vsel %vm2784, %v2718, %v2816
        %v2849 = vsel %vm2785, %v2721, %v2817
        %v2850 = vsel %vm2786, %v2723, %v2818
        %v2851 = vsel %vm2787, %v2726, %v2819
        %v2852 = vsel %vm2788, %v2728, %v2820
        %v2853 = vsel %vm2789, %v2731, %v2821
        %v2854 = vsel %vm2790, %v2733, %v2822
        %v2855 = vsel %vm2791, %v2736, %v2823
        %v2856 = vsel %vm2792, %v2738, %v2824
        %v2857 = vsel %vm2793, %v2741, %v2825
        %v2858 = vsel %vm2794, %v2743, %v2826
        %v2859 = vsel %vm2795, %v2746, %v2827
        %v2860 = vsel %vm2796, %v2748, %v2828
        %v2861 = vsel %vm2797, %v2751, %v2829
        %v2862 = vsel %vm2798, %v2753, %v2830
        %v2863 = vsel %vm2799, %v2756, %v2831
        %v2864 = vsel %vm2800, %v2758, %v2832
        %v2865 = vsel %vm2801, %v2761, %v2833
        %v2866 = vsel %vm2802, %v2763, %v2834
        %v2867 = vsel %vm2803, %v2766, %v2835
        %v2868 = vsel %vm2804, %v2768, %v2836
        %v2869 = vsel %vm2805, %v2771, %v2837
        %v2870 = vsel %vm2806, %v2773, %v2838
        %v2871 = vrot.slane %v2839, 4
        %v2872 = vmax.f32 %v2839, %v2871
        %v2873 = vrot.slane %v2872, 2
        %v2874 = vmax.f32 %v2872, %v2873
        %v2875 = vrot.slane %v2874, 1
        %v2876 = vmax.f32 %v2874, %v2875
        %v2877 = vrot.slane %v2840, 4
        %v2878 = vmax.f32 %v2840, %v2877
        %v2879 = vrot.slane %v2878, 2
        %v2880 = vmax.f32 %v2878, %v2879
        %v2881 = vrot.slane %v2880, 1
        %v2882 = vmax.f32 %v2880, %v2881
        %v2883 = vrot.slane %v2841, 4
        %v2884 = vmax.f32 %v2841, %v2883
        %v2885 = vrot.slane %v2884, 2
        %v2886 = vmax.f32 %v2884, %v2885
        %v2887 = vrot.slane %v2886, 1
        %v2888 = vmax.f32 %v2886, %v2887
        %v2889 = vrot.slane %v2842, 4
        %v2890 = vmax.f32 %v2842, %v2889
        %v2891 = vrot.slane %v2890, 2
        %v2892 = vmax.f32 %v2890, %v2891
        %v2893 = vrot.slane %v2892, 1
        %v2894 = vmax.f32 %v2892, %v2893
        %v2895 = vrot.slane %v2843, 4
        %v2896 = vmax.f32 %v2843, %v2895
        %v2897 = vrot.slane %v2896, 2
        %v2898 = vmax.f32 %v2896, %v2897
        %v2899 = vrot.slane %v2898, 1
        %v2900 = vmax.f32 %v2898, %v2899
        %v2901 = vrot.slane %v2844, 4
        %v2902 = vmax.f32 %v2844, %v2901
        %v2903 = vrot.slane %v2902, 2
        %v2904 = vmax.f32 %v2902, %v2903
        %v2905 = vrot.slane %v2904, 1
        %v2906 = vmax.f32 %v2904, %v2905
        %v2907 = vrot.slane %v2845, 4
        %v2908 = vmax.f32 %v2845, %v2907
        %v2909 = vrot.slane %v2908, 2
        %v2910 = vmax.f32 %v2908, %v2909
        %v2911 = vrot.slane %v2910, 1
        %v2912 = vmax.f32 %v2910, %v2911
        %v2913 = vrot.slane %v2846, 4
        %v2914 = vmax.f32 %v2846, %v2913
        %v2915 = vrot.slane %v2914, 2
        %v2916 = vmax.f32 %v2914, %v2915
        %v2917 = vrot.slane %v2916, 1
        %v2918 = vmax.f32 %v2916, %v2917
        %v2919 = vrot.slane %v2847, 4
        %v2920 = vmax.f32 %v2847, %v2919
        %v2921 = vrot.slane %v2920, 2
        %v2922 = vmax.f32 %v2920, %v2921
        %v2923 = vrot.slane %v2922, 1
        %v2924 = vmax.f32 %v2922, %v2923
        %v2925 = vrot.slane %v2848, 4
        %v2926 = vmax.f32 %v2848, %v2925
        %v2927 = vrot.slane %v2926, 2
        %v2928 = vmax.f32 %v2926, %v2927
        %v2929 = vrot.slane %v2928, 1
        %v2930 = vmax.f32 %v2928, %v2929
        %v2931 = vrot.slane %v2849, 4
        %v2932 = vmax.f32 %v2849, %v2931
        %v2933 = vrot.slane %v2932, 2
        %v2934 = vmax.f32 %v2932, %v2933
        %v2935 = vrot.slane %v2934, 1
        %v2936 = vmax.f32 %v2934, %v2935
        %v2937 = vrot.slane %v2850, 4
        %v2938 = vmax.f32 %v2850, %v2937
        %v2939 = vrot.slane %v2938, 2
        %v2940 = vmax.f32 %v2938, %v2939
        %v2941 = vrot.slane %v2940, 1
        %v2942 = vmax.f32 %v2940, %v2941
        %v2943 = vrot.slane %v2851, 4
        %v2944 = vmax.f32 %v2851, %v2943
        %v2945 = vrot.slane %v2944, 2
        %v2946 = vmax.f32 %v2944, %v2945
        %v2947 = vrot.slane %v2946, 1
        %v2948 = vmax.f32 %v2946, %v2947
        %v2949 = vrot.slane %v2852, 4
        %v2950 = vmax.f32 %v2852, %v2949
        %v2951 = vrot.slane %v2950, 2
        %v2952 = vmax.f32 %v2950, %v2951
        %v2953 = vrot.slane %v2952, 1
        %v2954 = vmax.f32 %v2952, %v2953
        %v2955 = vrot.slane %v2853, 4
        %v2956 = vmax.f32 %v2853, %v2955
        %v2957 = vrot.slane %v2956, 2
        %v2958 = vmax.f32 %v2956, %v2957
        %v2959 = vrot.slane %v2958, 1
        %v2960 = vmax.f32 %v2958, %v2959
        %v2961 = vrot.slane %v2854, 4
        %v2962 = vmax.f32 %v2854, %v2961
        %v2963 = vrot.slane %v2962, 2
        %v2964 = vmax.f32 %v2962, %v2963
        %v2965 = vrot.slane %v2964, 1
        %v2966 = vmax.f32 %v2964, %v2965
        %v2967 = vrot.slane %v2855, 4
        %v2968 = vmax.f32 %v2855, %v2967
        %v2969 = vrot.slane %v2968, 2
        %v2970 = vmax.f32 %v2968, %v2969
        %v2971 = vrot.slane %v2970, 1
        %v2972 = vmax.f32 %v2970, %v2971
        %v2973 = vrot.slane %v2856, 4
        %v2974 = vmax.f32 %v2856, %v2973
        %v2975 = vrot.slane %v2974, 2
        %v2976 = vmax.f32 %v2974, %v2975
        %v2977 = vrot.slane %v2976, 1
        %v2978 = vmax.f32 %v2976, %v2977
        %v2979 = vrot.slane %v2857, 4
        %v2980 = vmax.f32 %v2857, %v2979
        %v2981 = vrot.slane %v2980, 2
        %v2982 = vmax.f32 %v2980, %v2981
        %v2983 = vrot.slane %v2982, 1
        %v2984 = vmax.f32 %v2982, %v2983
        %v2985 = vrot.slane %v2858, 4
        %v2986 = vmax.f32 %v2858, %v2985
        %v2987 = vrot.slane %v2986, 2
        %v2988 = vmax.f32 %v2986, %v2987
        %v2989 = vrot.slane %v2988, 1
        %v2990 = vmax.f32 %v2988, %v2989
        %v2991 = vrot.slane %v2859, 4
        %v2992 = vmax.f32 %v2859, %v2991
        %v2993 = vrot.slane %v2992, 2
        %v2994 = vmax.f32 %v2992, %v2993
        %v2995 = vrot.slane %v2994, 1
        %v2996 = vmax.f32 %v2994, %v2995
        %v2997 = vrot.slane %v2860, 4
        %v2998 = vmax.f32 %v2860, %v2997
        %v2999 = vrot.slane %v2998, 2
        %v3000 = vmax.f32 %v2998, %v2999
        %v3001 = vrot.slane %v3000, 1
        %v3002 = vmax.f32 %v3000, %v3001
        %v3003 = vrot.slane %v2861, 4
        %v3004 = vmax.f32 %v2861, %v3003
        %v3005 = vrot.slane %v3004, 2
        %v3006 = vmax.f32 %v3004, %v3005
        %v3007 = vrot.slane %v3006, 1
        %v3008 = vmax.f32 %v3006, %v3007
        %v3009 = vrot.slane %v2862, 4
        %v3010 = vmax.f32 %v2862, %v3009
        %v3011 = vrot.slane %v3010, 2
        %v3012 = vmax.f32 %v3010, %v3011
        %v3013 = vrot.slane %v3012, 1
        %v3014 = vmax.f32 %v3012, %v3013
        %v3015 = vrot.slane %v2863, 4
        %v3016 = vmax.f32 %v2863, %v3015
        %v3017 = vrot.slane %v3016, 2
        %v3018 = vmax.f32 %v3016, %v3017
        %v3019 = vrot.slane %v3018, 1
        %v3020 = vmax.f32 %v3018, %v3019
        %v3021 = vrot.slane %v2864, 4
        %v3022 = vmax.f32 %v2864, %v3021
        %v3023 = vrot.slane %v3022, 2
        %v3024 = vmax.f32 %v3022, %v3023
        %v3025 = vrot.slane %v3024, 1
        %v3026 = vmax.f32 %v3024, %v3025
        %v3027 = vrot.slane %v2865, 4
        %v3028 = vmax.f32 %v2865, %v3027
        %v3029 = vrot.slane %v3028, 2
        %v3030 = vmax.f32 %v3028, %v3029
        %v3031 = vrot.slane %v3030, 1
        %v3032 = vmax.f32 %v3030, %v3031
        %v3033 = vrot.slane %v2866, 4
        %v3034 = vmax.f32 %v2866, %v3033
        %v3035 = vrot.slane %v3034, 2
        %v3036 = vmax.f32 %v3034, %v3035
        %v3037 = vrot.slane %v3036, 1
        %v3038 = vmax.f32 %v3036, %v3037
        %v3039 = vrot.slane %v2867, 4
        %v3040 = vmax.f32 %v2867, %v3039
        %v3041 = vrot.slane %v3040, 2
        %v3042 = vmax.f32 %v3040, %v3041
        %v3043 = vrot.slane %v3042, 1
        %v3044 = vmax.f32 %v3042, %v3043
        %v3045 = vrot.slane %v2868, 4
        %v3046 = vmax.f32 %v2868, %v3045
        %v3047 = vrot.slane %v3046, 2
        %v3048 = vmax.f32 %v3046, %v3047
        %v3049 = vrot.slane %v3048, 1
        %v3050 = vmax.f32 %v3048, %v3049
        %v3051 = vrot.slane %v2869, 4
        %v3052 = vmax.f32 %v2869, %v3051
        %v3053 = vrot.slane %v3052, 2
        %v3054 = vmax.f32 %v3052, %v3053
        %v3055 = vrot.slane %v3054, 1
        %v3056 = vmax.f32 %v3054, %v3055
        %v3057 = vrot.slane %v2870, 4
        %v3058 = vmax.f32 %v2870, %v3057
        %v3059 = vrot.slane %v3058, 2
        %v3060 = vmax.f32 %v3058, %v3059
        %v3061 = vrot.slane %v3060, 1
        %v3062 = vmax.f32 %v3060, %v3061
        %v3063 = vsub.f32 %v2839, %v2876
        %v3064 = vsub.f32 %v2840, %v2882
        %v3065 = vsub.f32 %v2841, %v2888
        %v3066 = vsub.f32 %v2842, %v2894
        %v3067 = vsub.f32 %v2843, %v2900
        %v3068 = vsub.f32 %v2844, %v2906
        %v3069 = vsub.f32 %v2845, %v2912
        %v3070 = vsub.f32 %v2846, %v2918
        %v3071 = vsub.f32 %v2847, %v2924
        %v3072 = vsub.f32 %v2848, %v2930
        %v3073 = vsub.f32 %v2849, %v2936
        %v3074 = vsub.f32 %v2850, %v2942
        %v3075 = vsub.f32 %v2851, %v2948
        %v3076 = vsub.f32 %v2852, %v2954
        %v3077 = vsub.f32 %v2853, %v2960
        %v3078 = vsub.f32 %v2854, %v2966
        %v3079 = vsub.f32 %v2855, %v2972
        %v3080 = vsub.f32 %v2856, %v2978
        %v3081 = vsub.f32 %v2857, %v2984
        %v3082 = vsub.f32 %v2858, %v2990
        %v3083 = vsub.f32 %v2859, %v2996
        %v3084 = vsub.f32 %v2860, %v3002
        %v3085 = vsub.f32 %v2861, %v3008
        %v3086 = vsub.f32 %v2862, %v3014
        %v3087 = vsub.f32 %v2863, %v3020
        %v3088 = vsub.f32 %v2864, %v3026
        %v3089 = vsub.f32 %v2865, %v3032
        %v3090 = vsub.f32 %v2866, %v3038
        %v3091 = vsub.f32 %v2867, %v3044
        %v3092 = vsub.f32 %v2868, %v3050
        %v3093 = vsub.f32 %v2869, %v3056
        %v3094 = vsub.f32 %v2870, %v3062
        %v3095 = vmul.f32 %v3063, 1.442695
        %v3096 = vpow.pop %v3095
        %v3097 = vmul.f32 %v3064, 1.442695
        %v3098 = vpow.pop %v3097
        %v3099 = vmul.f32 %v3065, 1.442695
        %v3100 = vpow.pop %v3099
        %v3101 = vmul.f32 %v3066, 1.442695
        %v3102 = vpow.pop %v3101
        %v3103 = vmul.f32 %v3067, 1.442695
        %v3104 = vpow.pop %v3103
        %v3105 = vmul.f32 %v3068, 1.442695
        %v3106 = vpow.pop %v3105
        %v3107 = vmul.f32 %v3069, 1.442695
        %v3108 = vpow.pop %v3107
        %v3109 = vmul.f32 %v3070, 1.442695
        %v3110 = vpow.pop %v3109
        %v3111 = vmul.f32 %v3071, 1.442695
        %v3112 = vpow.pop %v3111
        %v3113 = vmul.f32 %v3072, 1.442695
        %v3114 = vpow.pop %v3113
        %v3115 = vmul.f32 %v3073, 1.442695
        %v3116 = vpow.pop %v3115
        %v3117 = vmul.f32 %v3074, 1.442695
        %v3118 = vpow.pop %v3117
        %v3119 = vmul.f32 %v3075, 1.442695
        %v3120 = vpow.pop %v3119
        %v3121 = vmul.f32 %v3076, 1.442695
        %v3122 = vpow.pop %v3121
        %v3123 = vmul.f32 %v3077, 1.442695
        %v3124 = vpow.pop %v3123
        %v3125 = vmul.f32 %v3078, 1.442695
        %v3126 = vpow.pop %v3125
        %v3127 = vmul.f32 %v3079, 1.442695
        %v3128 = vpow.pop %v3127
        %v3129 = vmul.f32 %v3080, 1.442695
        %v3130 = vpow.pop %v3129
        %v3131 = vmul.f32 %v3081, 1.442695
        %v3132 = vpow.pop %v3131
        %v3133 = vmul.f32 %v3082, 1.442695
        %v3134 = vpow.pop %v3133
        %v3135 = vmul.f32 %v3083, 1.442695
        %v3136 = vpow.pop %v3135
        %v3137 = vmul.f32 %v3084, 1.442695
        %v3138 = vpow.pop %v3137
        %v3139 = vmul.f32 %v3085, 1.442695
        %v3140 = vpow.pop %v3139
        %v3141 = vmul.f32 %v3086, 1.442695
        %v3142 = vpow.pop %v3141
        %v3143 = vmul.f32 %v3087, 1.442695
        %v3144 = vpow.pop %v3143
        %v3145 = vmul.f32 %v3088, 1.442695
        %v3146 = vpow.pop %v3145
        %v3147 = vmul.f32 %v3089, 1.442695
        %v3148 = vpow.pop %v3147
        %v3149 = vmul.f32 %v3090, 1.442695
        %v3150 = vpow.pop %v3149
        %v3151 = vmul.f32 %v3091, 1.442695
        %v3152 = vpow.pop %v3151
        %v3153 = vmul.f32 %v3092, 1.442695
        %v3154 = vpow.pop %v3153
        %v3155 = vmul.f32 %v3093, 1.442695
        %v3156 = vpow.pop %v3155
        %v3157 = vmul.f32 %v3094, 1.442695
        %v3158 = vpow.pop %v3157
        %v3159 = vrot.slane %v3096, 4
        %v3160 = vadd.f32 %v3096, %v3159
        %v3161 = vrot.slane %v3160, 2
        %v3162 = vadd.f32 %v3160, %v3161
        %v3163 = vrot.slane %v3162, 1
        %v3164 = vadd.f32 %v3162, %v3163
        %v3165 = vrot.slane %v3098, 4
        %v3166 = vadd.f32 %v3098, %v3165
        %v3167 = vrot.slane %v3166, 2
        %v3168 = vadd.f32 %v3166, %v3167
        %v3169 = vrot.slane %v3168, 1
        %v3170 = vadd.f32 %v3168, %v3169
        %v3171 = vrot.slane %v3100, 4
        %v3172 = vadd.f32 %v3100, %v3171
        %v3173 = vrot.slane %v3172, 2
        %v3174 = vadd.f32 %v3172, %v3173
        %v3175 = vrot.slane %v3174, 1
        %v3176 = vadd.f32 %v3174, %v3175
        %v3177 = vrot.slane %v3102, 4
        %v3178 = vadd.f32 %v3102, %v3177
        %v3179 = vrot.slane %v3178, 2
        %v3180 = vadd.f32 %v3178, %v3179
        %v3181 = vrot.slane %v3180, 1
        %v3182 = vadd.f32 %v3180, %v3181
        %v3183 = vrot.slane %v3104, 4
        %v3184 = vadd.f32 %v3104, %v3183
        %v3185 = vrot.slane %v3184, 2
        %v3186 = vadd.f32 %v3184, %v3185
        %v3187 = vrot.slane %v3186, 1
        %v3188 = vadd.f32 %v3186, %v3187
        %v3189 = vrot.slane %v3106, 4
        %v3190 = vadd.f32 %v3106, %v3189
        %v3191 = vrot.slane %v3190, 2
        %v3192 = vadd.f32 %v3190, %v3191
        %v3193 = vrot.slane %v3192, 1
        %v3194 = vadd.f32 %v3192, %v3193
        %v3195 = vrot.slane %v3108, 4
        %v3196 = vadd.f32 %v3108, %v3195
        %v3197 = vrot.slane %v3196, 2
        %v3198 = vadd.f32 %v3196, %v3197
        %v3199 = vrot.slane %v3198, 1
        %v3200 = vadd.f32 %v3198, %v3199
        %v3201 = vrot.slane %v3110, 4
        %v3202 = vadd.f32 %v3110, %v3201
        %v3203 = vrot.slane %v3202, 2
        %v3204 = vadd.f32 %v3202, %v3203
        %v3205 = vrot.slane %v3204, 1
        %v3206 = vadd.f32 %v3204, %v3205
        %v3207 = vrot.slane %v3112, 4
        %v3208 = vadd.f32 %v3112, %v3207
        %v3209 = vrot.slane %v3208, 2
        %v3210 = vadd.f32 %v3208, %v3209
        %v3211 = vrot.slane %v3210, 1
        %v3212 = vadd.f32 %v3210, %v3211
        %v3213 = vrot.slane %v3114, 4
        %v3214 = vadd.f32 %v3114, %v3213
        %v3215 = vrot.slane %v3214, 2
        %v3216 = vadd.f32 %v3214, %v3215
        %v3217 = vrot.slane %v3216, 1
        %v3218 = vadd.f32 %v3216, %v3217
        %v3219 = vrot.slane %v3116, 4
        %v3220 = vadd.f32 %v3116, %v3219
        %v3221 = vrot.slane %v3220, 2
        %v3222 = vadd.f32 %v3220, %v3221
        %v3223 = vrot.slane %v3222, 1
        %v3224 = vadd.f32 %v3222, %v3223
        %v3225 = vrot.slane %v3118, 4
        %v3226 = vadd.f32 %v3118, %v3225
        %v3227 = vrot.slane %v3226, 2
        %v3228 = vadd.f32 %v3226, %v3227
        %v3229 = vrot.slane %v3228, 1
        %v3230 = vadd.f32 %v3228, %v3229
        %v3231 = vrot.slane %v3120, 4
        %v3232 = vadd.f32 %v3120, %v3231
        %v3233 = vrot.slane %v3232, 2
        %v3234 = vadd.f32 %v3232, %v3233
        %v3235 = vrot.slane %v3234, 1
        %v3236 = vadd.f32 %v3234, %v3235
        %v3237 = vrot.slane %v3122, 4
        %v3238 = vadd.f32 %v3122, %v3237
        %v3239 = vrot.slane %v3238, 2
        %v3240 = vadd.f32 %v3238, %v3239
        %v3241 = vrot.slane %v3240, 1
        %v3242 = vadd.f32 %v3240, %v3241
        %v3243 = vrot.slane %v3124, 4
        %v3244 = vadd.f32 %v3124, %v3243
        %v3245 = vrot.slane %v3244, 2
        %v3246 = vadd.f32 %v3244, %v3245
        %v3247 = vrot.slane %v3246, 1
        %v3248 = vadd.f32 %v3246, %v3247
        %v3249 = vrot.slane %v3126, 4
        %v3250 = vadd.f32 %v3126, %v3249
        %v3251 = vrot.slane %v3250, 2
        %v3252 = vadd.f32 %v3250, %v3251
        %v3253 = vrot.slane %v3252, 1
        %v3254 = vadd.f32 %v3252, %v3253
        %v3255 = vrot.slane %v3128, 4
        %v3256 = vadd.f32 %v3128, %v3255
        %v3257 = vrot.slane %v3256, 2
        %v3258 = vadd.f32 %v3256, %v3257
        %v3259 = vrot.slane %v3258, 1
        %v3260 = vadd.f32 %v3258, %v3259
        %v3261 = vrot.slane %v3130, 4
        %v3262 = vadd.f32 %v3130, %v3261
        %v3263 = vrot.slane %v3262, 2
        %v3264 = vadd.f32 %v3262, %v3263
        %v3265 = vrot.slane %v3264, 1
        %v3266 = vadd.f32 %v3264, %v3265
        %v3267 = vrot.slane %v3132, 4
        %v3268 = vadd.f32 %v3132, %v3267
        %v3269 = vrot.slane %v3268, 2
        %v3270 = vadd.f32 %v3268, %v3269
        %v3271 = vrot.slane %v3270, 1
        %v3272 = vadd.f32 %v3270, %v3271
        %v3273 = vrot.slane %v3134, 4
        %v3274 = vadd.f32 %v3134, %v3273
        %v3275 = vrot.slane %v3274, 2
        %v3276 = vadd.f32 %v3274, %v3275
        %v3277 = vrot.slane %v3276, 1
        %v3278 = vadd.f32 %v3276, %v3277
        %v3279 = vrot.slane %v3136, 4
        %v3280 = vadd.f32 %v3136, %v3279
        %v3281 = vrot.slane %v3280, 2
        %v3282 = vadd.f32 %v3280, %v3281
        %v3283 = vrot.slane %v3282, 1
        %v3284 = vadd.f32 %v3282, %v3283
        %v3285 = vrot.slane %v3138, 4
        %v3286 = vadd.f32 %v3138, %v3285
        %v3287 = vrot.slane %v3286, 2
        %v3288 = vadd.f32 %v3286, %v3287
        %v3289 = vrot.slane %v3288, 1
        %v3290 = vadd.f32 %v3288, %v3289
        %v3291 = vrot.slane %v3140, 4
        %v3292 = vadd.f32 %v3140, %v3291
        %v3293 = vrot.slane %v3292, 2
        %v3294 = vadd.f32 %v3292, %v3293
        %v3295 = vrot.slane %v3294, 1
        %v3296 = vadd.f32 %v3294, %v3295
        %v3297 = vrot.slane %v3142, 4
        %v3298 = vadd.f32 %v3142, %v3297
        %v3299 = vrot.slane %v3298, 2
        %v3300 = vadd.f32 %v3298, %v3299
        %v3301 = vrot.slane %v3300, 1
        %v3302 = vadd.f32 %v3300, %v3301
        %v3303 = vrot.slane %v3144, 4
        %v3304 = vadd.f32 %v3144, %v3303
        %v3305 = vrot.slane %v3304, 2
        %v3306 = vadd.f32 %v3304, %v3305
        %v3307 = vrot.slane %v3306, 1
        %v3308 = vadd.f32 %v3306, %v3307
        %v3309 = vrot.slane %v3146, 4
        %v3310 = vadd.f32 %v3146, %v3309
        %v3311 = vrot.slane %v3310, 2
        %v3312 = vadd.f32 %v3310, %v3311
        %v3313 = vrot.slane %v3312, 1
        %v3314 = vadd.f32 %v3312, %v3313
        %v3315 = vrot.slane %v3148, 4
        %v3316 = vadd.f32 %v3148, %v3315
        %v3317 = vrot.slane %v3316, 2
        %v3318 = vadd.f32 %v3316, %v3317
        %v3319 = vrot.slane %v3318, 1
        %v3320 = vadd.f32 %v3318, %v3319
        %v3321 = vrot.slane %v3150, 4
        %v3322 = vadd.f32 %v3150, %v3321
        %v3323 = vrot.slane %v3322, 2
        %v3324 = vadd.f32 %v3322, %v3323
        %v3325 = vrot.slane %v3324, 1
        %v3326 = vadd.f32 %v3324, %v3325
        %v3327 = vrot.slane %v3152, 4
        %v3328 = vadd.f32 %v3152, %v3327
        %v3329 = vrot.slane %v3328, 2
        %v3330 = vadd.f32 %v3328, %v3329
        %v3331 = vrot.slane %v3330, 1
        %v3332 = vadd.f32 %v3330, %v3331
        %v3333 = vrot.slane %v3154, 4
        %v3334 = vadd.f32 %v3154, %v3333
        %v3335 = vrot.slane %v3334, 2
        %v3336 = vadd.f32 %v3334, %v3335
        %v3337 = vrot.slane %v3336, 1
        %v3338 = vadd.f32 %v3336, %v3337
        %v3339 = vrot.slane %v3156, 4
        %v3340 = vadd.f32 %v3156, %v3339
        %v3341 = vrot.slane %v3340, 2
        %v3342 = vadd.f32 %v3340, %v3341
        %v3343 = vrot.slane %v3342, 1
        %v3344 = vadd.f32 %v3342, %v3343
        %v3345 = vrot.slane %v3158, 4
        %v3346 = vadd.f32 %v3158, %v3345
        %v3347 = vrot.slane %v3346, 2
        %v3348 = vadd.f32 %v3346, %v3347
        %v3349 = vrot.slane %v3348, 1
        %v3350 = vadd.f32 %v3348, %v3349
        %v3351 = vrcp.pop %v3164
        %v3352 = vrcp.pop %v3170
        %v3353 = vrcp.pop %v3176
        %v3354 = vrcp.pop %v3182
        %v3355 = vrcp.pop %v3188
        %v3356 = vrcp.pop %v3194
        %v3357 = vrcp.pop %v3200
        %v3358 = vrcp.pop %v3206
        %v3359 = vrcp.pop %v3212
        %v3360 = vrcp.pop %v3218
        %v3361 = vrcp.pop %v3224
        %v3362 = vrcp.pop %v3230
        %v3363 = vrcp.pop %v3236
        %v3364 = vrcp.pop %v3242
        %v3365 = vrcp.pop %v3248
        %v3366 = vrcp.pop %v3254
        %v3367 = vrcp.pop %v3260
        %v3368 = vrcp.pop %v3266
        %v3369 = vrcp.pop %v3272
        %v3370 = vrcp.pop %v3278
        %v3371 = vrcp.pop %v3284
        %v3372 = vrcp.pop %v3290
        %v3373 = vrcp.pop %v3296
        %v3374 = vrcp.pop %v3302
        %v3375 = vrcp.pop %v3308
        %v3376 = vrcp.pop %v3314
        %v3377 = vrcp.pop %v3320
        %v3378 = vrcp.pop %v3326
        %v3379 = vrcp.pop %v3332
        %v3380 = vrcp.pop %v3338
        %v3381 = vrcp.pop %v3344
        %v3382 = vrcp.pop %v3350
        %v3383 = vmul.f32 %v3096, %v3351
        %v3384 = vmul.f32 %v3098, %v3352
        %v3385 = vmul.f32 %v3100, %v3353
        %v3386 = vmul.f32 %v3102, %v3354
        %v3387 = vmul.f32 %v3104, %v3355
        %v3388 = vmul.f32 %v3106, %v3356
        %v3389 = vmul.f32 %v3108, %v3357
        %v3390 = vmul.f32 %v3110, %v3358
        %v3391 = vmul.f32 %v3112, %v3359
        %v3392 = vmul.f32 %v3114, %v3360
        %v3393 = vmul.f32 %v3116, %v3361
        %v3394 = vmul.f32 %v3118, %v3362
        %v3395 = vmul.f32 %v3120, %v3363
        %v3396 = vmul.f32 %v3122, %v3364
        %v3397 = vmul.f32 %v3124, %v3365
        %v3398 = vmul.f32 %v3126, %v3366
        %v3399 = vmul.f32 %v3128, %v3367
        %v3400 = vmul.f32 %v3130, %v3368
        %v3401 = vmul.f32 %v3132, %v3369
        %v3402 = vmul.f32 %v3134, %v3370
        %v3403 = vmul.f32 %v3136, %v3371
        %v3404 = vmul.f32 %v3138, %v3372
        %v3405 = vmul.f32 %v3140, %v3373
        %v3406 = vmul.f32 %v3142, %v3374
        %v3407 = vmul.f32 %v3144, %v3375
        %v3408 = vmul.f32 %v3146, %v3376
        %v3409 = vmul.f32 %v3148, %v3377
        %v3410 = vmul.f32 %v3150, %v3378
        %v3411 = vmul.f32 %v3152, %v3379
        %v3412 = vmul.f32 %v3154, %v3380
        %v3413 = vmul.f32 %v3156, %v3381
        %v3414 = vmul.f32 %v3158, %v3382
        %v3415 = vmul.f32 %v2509, %v3383
        %v3416 = vmul.f32 %v2510, %v3384
        %v3417 = vmul.f32 %v2511, %v3385
        %v3418 = vmul.f32 %v2512, %v3386
        %v3419 = vmul.f32 %v2513, %v3387
        %v3420 = vmul.f32 %v2514, %v3388
        %v3421 = vmul.f32 %v2515, %v3389
        %v3422 = vmul.f32 %v2516, %v3390
        %v3423 = vmul.f32 %v2517, %v3391
        %v3424 = vmul.f32 %v2518, %v3392
        %v3425 = vmul.f32 %v2519, %v3393
        %v3426 = vmul.f32 %v2520, %v3394
        %v3427 = vmul.f32 %v2521, %v3395
        %v3428 = vmul.f32 %v2522, %v3396
        %v3429 = vmul.f32 %v2523, %v3397
        %v3430 = vmul.f32 %v2524, %v3398
        %v3431 = vmul.f32 %v2525, %v3399
        %v3432 = vmul.f32 %v2526, %v3400
        %v3433 = vmul.f32 %v2527, %v3401
        %v3434 = vmul.f32 %v2528, %v3402
        %v3435 = vmul.f32 %v2529, %v3403
        %v3436 = vmul.f32 %v2530, %v3404
        %v3437 = vmul.f32 %v2531, %v3405
        %v3438 = vmul.f32 %v2532, %v3406
        %v3439 = vmul.f32 %v2533, %v3407
        %v3440 = vmul.f32 %v2534, %v3408
        %v3441 = vmul.f32 %v2535, %v3409
        %v3442 = vmul.f32 %v2536, %v3410
        %v3443 = vmul.f32 %v2537, %v3411
        %v3444 = vmul.f32 %v2538, %v3412
        %v3445 = vmul.f32 %v2539, %v3413
        %v3446 = vmul.f32 %v2540, %v3414
        %v3447 = vrot.slane %v3415, 4
        %v3448 = vadd.f32 %v3415, %v3447
        %v3449 = vrot.slane %v3448, 2
        %v3450 = vadd.f32 %v3448, %v3449
        %v3451 = vrot.slane %v3450, 1
        %v3452 = vadd.f32 %v3450, %v3451
        %v3453 = vrot.slane %v3416, 4
        %v3454 = vadd.f32 %v3416, %v3453
        %v3455 = vrot.slane %v3454, 2
        %v3456 = vadd.f32 %v3454, %v3455
        %v3457 = vrot.slane %v3456, 1
        %v3458 = vadd.f32 %v3456, %v3457
        %v3459 = vrot.slane %v3417, 4
        %v3460 = vadd.f32 %v3417, %v3459
        %v3461 = vrot.slane %v3460, 2
        %v3462 = vadd.f32 %v3460, %v3461
        %v3463 = vrot.slane %v3462, 1
        %v3464 = vadd.f32 %v3462, %v3463
        %v3465 = vrot.slane %v3418, 4
        %v3466 = vadd.f32 %v3418, %v3465
        %v3467 = vrot.slane %v3466, 2
        %v3468 = vadd.f32 %v3466, %v3467
        %v3469 = vrot.slane %v3468, 1
        %v3470 = vadd.f32 %v3468, %v3469
        %v3471 = vrot.slane %v3419, 4
        %v3472 = vadd.f32 %v3419, %v3471
        %v3473 = vrot.slane %v3472, 2
        %v3474 = vadd.f32 %v3472, %v3473
        %v3475 = vrot.slane %v3474, 1
        %v3476 = vadd.f32 %v3474, %v3475
        %v3477 = vrot.slane %v3420, 4
        %v3478 = vadd.f32 %v3420, %v3477
        %v3479 = vrot.slane %v3478, 2
        %v3480 = vadd.f32 %v3478, %v3479
        %v3481 = vrot.slane %v3480, 1
        %v3482 = vadd.f32 %v3480, %v3481
        %v3483 = vrot.slane %v3421, 4
        %v3484 = vadd.f32 %v3421, %v3483
        %v3485 = vrot.slane %v3484, 2
        %v3486 = vadd.f32 %v3484, %v3485
        %v3487 = vrot.slane %v3486, 1
        %v3488 = vadd.f32 %v3486, %v3487
        %v3489 = vrot.slane %v3422, 4
        %v3490 = vadd.f32 %v3422, %v3489
        %v3491 = vrot.slane %v3490, 2
        %v3492 = vadd.f32 %v3490, %v3491
        %v3493 = vrot.slane %v3492, 1
        %v3494 = vadd.f32 %v3492, %v3493
        %v3495 = vrot.slane %v3423, 4
        %v3496 = vadd.f32 %v3423, %v3495
        %v3497 = vrot.slane %v3496, 2
        %v3498 = vadd.f32 %v3496, %v3497
        %v3499 = vrot.slane %v3498, 1
        %v3500 = vadd.f32 %v3498, %v3499
        %v3501 = vrot.slane %v3424, 4
        %v3502 = vadd.f32 %v3424, %v3501
        %v3503 = vrot.slane %v3502, 2
        %v3504 = vadd.f32 %v3502, %v3503
        %v3505 = vrot.slane %v3504, 1
        %v3506 = vadd.f32 %v3504, %v3505
        %v3507 = vrot.slane %v3425, 4
        %v3508 = vadd.f32 %v3425, %v3507
        %v3509 = vrot.slane %v3508, 2
        %v3510 = vadd.f32 %v3508, %v3509
        %v3511 = vrot.slane %v3510, 1
        %v3512 = vadd.f32 %v3510, %v3511
        %v3513 = vrot.slane %v3426, 4
        %v3514 = vadd.f32 %v3426, %v3513
        %v3515 = vrot.slane %v3514, 2
        %v3516 = vadd.f32 %v3514, %v3515
        %v3517 = vrot.slane %v3516, 1
        %v3518 = vadd.f32 %v3516, %v3517
        %v3519 = vrot.slane %v3427, 4
        %v3520 = vadd.f32 %v3427, %v3519
        %v3521 = vrot.slane %v3520, 2
        %v3522 = vadd.f32 %v3520, %v3521
        %v3523 = vrot.slane %v3522, 1
        %v3524 = vadd.f32 %v3522, %v3523
        %v3525 = vrot.slane %v3428, 4
        %v3526 = vadd.f32 %v3428, %v3525
        %v3527 = vrot.slane %v3526, 2
        %v3528 = vadd.f32 %v3526, %v3527
        %v3529 = vrot.slane %v3528, 1
        %v3530 = vadd.f32 %v3528, %v3529
        %v3531 = vrot.slane %v3429, 4
        %v3532 = vadd.f32 %v3429, %v3531
        %v3533 = vrot.slane %v3532, 2
        %v3534 = vadd.f32 %v3532, %v3533
        %v3535 = vrot.slane %v3534, 1
        %v3536 = vadd.f32 %v3534, %v3535
        %v3537 = vrot.slane %v3430, 4
        %v3538 = vadd.f32 %v3430, %v3537
        %v3539 = vrot.slane %v3538, 2
        %v3540 = vadd.f32 %v3538, %v3539
        %v3541 = vrot.slane %v3540, 1
        %v3542 = vadd.f32 %v3540, %v3541
        %v3543 = vrot.slane %v3431, 4
        %v3544 = vadd.f32 %v3431, %v3543
        %v3545 = vrot.slane %v3544, 2
        %v3546 = vadd.f32 %v3544, %v3545
        %v3547 = vrot.slane %v3546, 1
        %v3548 = vadd.f32 %v3546, %v3547
        %v3549 = vrot.slane %v3432, 4
        %v3550 = vadd.f32 %v3432, %v3549
        %v3551 = vrot.slane %v3550, 2
        %v3552 = vadd.f32 %v3550, %v3551
        %v3553 = vrot.slane %v3552, 1
        %v3554 = vadd.f32 %v3552, %v3553
        %v3555 = vrot.slane %v3433, 4
        %v3556 = vadd.f32 %v3433, %v3555
        %v3557 = vrot.slane %v3556, 2
        %v3558 = vadd.f32 %v3556, %v3557
        %v3559 = vrot.slane %v3558, 1
        %v3560 = vadd.f32 %v3558, %v3559
        %v3561 = vrot.slane %v3434, 4
        %v3562 = vadd.f32 %v3434, %v3561
        %v3563 = vrot.slane %v3562, 2
        %v3564 = vadd.f32 %v3562, %v3563
        %v3565 = vrot.slane %v3564, 1
        %v3566 = vadd.f32 %v3564, %v3565
        %v3567 = vrot.slane %v3435, 4
        %v3568 = vadd.f32 %v3435, %v3567
        %v3569 = vrot.slane %v3568, 2
        %v3570 = vadd.f32 %v3568, %v3569
        %v3571 = vrot.slane %v3570, 1
        %v3572 = vadd.f32 %v3570, %v3571
        %v3573 = vrot.slane %v3436, 4
        %v3574 = vadd.f32 %v3436, %v3573
        %v3575 = vrot.slane %v3574, 2
        %v3576 = vadd.f32 %v3574, %v3575
        %v3577 = vrot.slane %v3576, 1
        %v3578 = vadd.f32 %v3576, %v3577
        %v3579 = vrot.slane %v3437, 4
        %v3580 = vadd.f32 %v3437, %v3579
        %v3581 = vrot.slane %v3580, 2
        %v3582 = vadd.f32 %v3580, %v3581
        %v3583 = vrot.slane %v3582, 1
        %v3584 = vadd.f32 %v3582, %v3583
        %v3585 = vrot.slane %v3438, 4
        %v3586 = vadd.f32 %v3438, %v3585
        %v3587 = vrot.slane %v3586, 2
        %v3588 = vadd.f32 %v3586, %v3587
        %v3589 = vrot.slane %v3588, 1
        %v3590 = vadd.f32 %v3588, %v3589
        %v3591 = vrot.slane %v3439, 4
        %v3592 = vadd.f32 %v3439, %v3591
        %v3593 = vrot.slane %v3592, 2
        %v3594 = vadd.f32 %v3592, %v3593
        %v3595 = vrot.slane %v3594, 1
        %v3596 = vadd.f32 %v3594, %v3595
        %v3597 = vrot.slane %v3440, 4
        %v3598 = vadd.f32 %v3440, %v3597
        %v3599 = vrot.slane %v3598, 2
        %v3600 = vadd.f32 %v3598, %v3599
        %v3601 = vrot.slane %v3600, 1
        %v3602 = vadd.f32 %v3600, %v3601
        %v3603 = vrot.slane %v3441, 4
        %v3604 = vadd.f32 %v3441, %v3603
        %v3605 = vrot.slane %v3604, 2
        %v3606 = vadd.f32 %v3604, %v3605
        %v3607 = vrot.slane %v3606, 1
        %v3608 = vadd.f32 %v3606, %v3607
        %v3609 = vrot.slane %v3442, 4
        %v3610 = vadd.f32 %v3442, %v3609
        %v3611 = vrot.slane %v3610, 2
        %v3612 = vadd.f32 %v3610, %v3611
        %v3613 = vrot.slane %v3612, 1
        %v3614 = vadd.f32 %v3612, %v3613
        %v3615 = vrot.slane %v3443, 4
        %v3616 = vadd.f32 %v3443, %v3615
        %v3617 = vrot.slane %v3616, 2
        %v3618 = vadd.f32 %v3616, %v3617
        %v3619 = vrot.slane %v3618, 1
        %v3620 = vadd.f32 %v3618, %v3619
        %v3621 = vrot.slane %v3444, 4
        %v3622 = vadd.f32 %v3444, %v3621
        %v3623 = vrot.slane %v3622, 2
        %v3624 = vadd.f32 %v3622, %v3623
        %v3625 = vrot.slane %v3624, 1
        %v3626 = vadd.f32 %v3624, %v3625
        %v3627 = vrot.slane %v3445, 4
        %v3628 = vadd.f32 %v3445, %v3627
        %v3629 = vrot.slane %v3628, 2
        %v3630 = vadd.f32 %v3628, %v3629
        %v3631 = vrot.slane %v3630, 1
        %v3632 = vadd.f32 %v3630, %v3631
        %v3633 = vrot.slane %v3446, 4
        %v3634 = vadd.f32 %v3446, %v3633
        %v3635 = vrot.slane %v3634, 2
        %v3636 = vadd.f32 %v3634, %v3635
        %v3637 = vrot.slane %v3636, 1
        %v3638 = vadd.f32 %v3636, %v3637
        %v3639 = vpack.c.bf16 %v3452, %v3452
        %v3640 = vpack.c.bf16 %v3458, %v3458
        %v3641 = vpack.c.bf16 %v3464, %v3464
        %v3642 = vpack.c.bf16 %v3470, %v3470
        %v3643 = vpack.c.bf16 %v3476, %v3476
        %v3644 = vpack.c.bf16 %v3482, %v3482
        %v3645 = vpack.c.bf16 %v3488, %v3488
        %v3646 = vpack.c.bf16 %v3494, %v3494
        %v3647 = vpack.c.bf16 %v3500, %v3500
        %v3648 = vpack.c.bf16 %v3506, %v3506
        %v3649 = vpack.c.bf16 %v3512, %v3512
        %v3650 = vpack.c.bf16 %v3518, %v3518
        %v3651 = vpack.c.bf16 %v3524, %v3524
        %v3652 = vpack.c.bf16 %v3530, %v3530
        %v3653 = vpack.c.bf16 %v3536, %v3536
        %v3654 = vpack.c.bf16 %v3542, %v3542
        %v3655 = vpack.c.bf16 %v3548, %v3548
        %v3656 = vpack.c.bf16 %v3554, %v3554
        %v3657 = vpack.c.bf16 %v3560, %v3560
        %v3658 = vpack.c.bf16 %v3566, %v3566
        %v3659 = vpack.c.bf16 %v3572, %v3572
        %v3660 = vpack.c.bf16 %v3578, %v3578
        %v3661 = vpack.c.bf16 %v3584, %v3584
        %v3662 = vpack.c.bf16 %v3590, %v3590
        %v3663 = vpack.c.bf16 %v3596, %v3596
        %v3664 = vpack.c.bf16 %v3602, %v3602
        %v3665 = vpack.c.bf16 %v3608, %v3608
        %v3666 = vpack.c.bf16 %v3614, %v3614
        %v3667 = vpack.c.bf16 %v3620, %v3620
        %v3668 = vpack.c.bf16 %v3626, %v3626
        %v3669 = vpack.c.bf16 %v3632, %v3632
        %v3670 = vpack.c.bf16 %v3638, %v3638
        %v3671 = vld [vmem:[%s314] sm:$0xf]
        %v3672 = vld [vmem:[%s314 + $0x4] sm:$0xf]
        %v3673 = vld [vmem:[%s314 + $0x8] sm:$0xf]
        %v3674 = vld [vmem:[%s314 + $0xc] sm:$0xf]
        %v3707 = vperm.slane %v3639, 0
        %v3708 = vperm.slane %v3640, 0
        %v3709 = vperm.slane %v3641, 0
        %v3710 = vperm.slane %v3642, 0
        %v3711 = vperm.slane %v3643, 0
        %v3712 = vperm.slane %v3644, 0
        %v3713 = vperm.slane %v3645, 0
        %v3714 = vperm.slane %v3646, 0
        %v3715 = vperm.slane %v3647, 0
        %v3716 = vperm.slane %v3648, 0
        %v3717 = vperm.slane %v3649, 0
        %v3718 = vperm.slane %v3650, 0
        %v3719 = vperm.slane %v3651, 0
        %v3720 = vperm.slane %v3652, 0
        %v3721 = vperm.slane %v3653, 0
        %v3722 = vperm.slane %v3654, 0
        %v3723 = vperm.slane %v3655, 0
        %v3724 = vperm.slane %v3656, 0
        %v3725 = vperm.slane %v3657, 0
        %v3726 = vperm.slane %v3658, 0
        %v3727 = vperm.slane %v3659, 0
        %v3728 = vperm.slane %v3660, 0
        %v3729 = vperm.slane %v3661, 0
        %v3730 = vperm.slane %v3662, 0
        %v3731 = vperm.slane %v3663, 0
        %v3732 = vperm.slane %v3664, 0
        %v3733 = vperm.slane %v3665, 0
        %v3734 = vperm.slane %v3666, 0
        %v3735 = vperm.slane %v3667, 0
        %v3736 = vperm.slane %v3668, 0
        %v3737 = vperm.slane %v3669, 0
        %v3738 = vperm.slane %v3670, 0
        %v3739 = vunpack.c.l.b16 %v3707
        %v3740 = vunpack.c.l.b16 %v3708
        %v3741 = vunpack.c.l.b16 %v3709
        %v3742 = vunpack.c.l.b16 %v3710
        %v3743 = vunpack.c.l.b16 %v3711
        %v3744 = vunpack.c.l.b16 %v3712
        %v3745 = vunpack.c.l.b16 %v3713
        %v3746 = vunpack.c.l.b16 %v3714
        %v3747 = vunpack.c.l.b16 %v3715
        %v3748 = vunpack.c.l.b16 %v3716
        %v3749 = vunpack.c.l.b16 %v3717
        %v3750 = vunpack.c.l.b16 %v3718
        %v3751 = vunpack.c.l.b16 %v3719
        %v3752 = vunpack.c.l.b16 %v3720
        %v3753 = vunpack.c.l.b16 %v3721
        %v3754 = vunpack.c.l.b16 %v3722
        %v3755 = vunpack.c.l.b16 %v3723
        %v3756 = vunpack.c.l.b16 %v3724
        %v3757 = vunpack.c.l.b16 %v3725
        %v3758 = vunpack.c.l.b16 %v3726
        %v3759 = vunpack.c.l.b16 %v3727
        %v3760 = vunpack.c.l.b16 %v3728
        %v3761 = vunpack.c.l.b16 %v3729
        %v3762 = vunpack.c.l.b16 %v3730
        %v3763 = vunpack.c.l.b16 %v3731
        %v3764 = vunpack.c.l.b16 %v3732
        %v3765 = vunpack.c.l.b16 %v3733
        %v3766 = vunpack.c.l.b16 %v3734
        %v3767 = vunpack.c.l.b16 %v3735
        %v3768 = vunpack.c.l.b16 %v3736
        %v3769 = vunpack.c.l.b16 %v3737
        %v3770 = vunpack.c.l.b16 %v3738
        %vm3771 = vcmask 1041409
        %v3772 = vsel %vm3771, %v3740, %v3739
        %vm3773 = vcmask 1042434
        %v3774 = vsel %vm3773, %v3741, %v3772
        %vm3775 = vcmask 1043459
        %v3776 = vsel %vm3775, %v3742, %v3774
        %vm3777 = vcmask 1044484
        %v3778 = vsel %vm3777, %v3743, %v3776
        %vm3779 = vcmask 1045509
        %v3780 = vsel %vm3779, %v3744, %v3778
        %vm3781 = vcmask 1046534
        %v3782 = vsel %vm3781, %v3745, %v3780
        %vm3783 = vcmask 1047559
        %v3784 = vsel %vm3783, %v3746, %v3782
        %v3785 = vsel %vm3771, %v3748, %v3747
        %v3786 = vsel %vm3773, %v3749, %v3785
        %v3787 = vsel %vm3775, %v3750, %v3786
        %v3788 = vsel %vm3777, %v3751, %v3787
        %v3789 = vsel %vm3779, %v3752, %v3788
        %v3790 = vsel %vm3781, %v3753, %v3789
        %v3791 = vsel %vm3783, %v3754, %v3790
        %v3792 = vsel %vm3771, %v3756, %v3755
        %v3793 = vsel %vm3773, %v3757, %v3792
        %v3794 = vsel %vm3775, %v3758, %v3793
        %v3795 = vsel %vm3777, %v3759, %v3794
        %v3796 = vsel %vm3779, %v3760, %v3795
        %v3797 = vsel %vm3781, %v3761, %v3796
        %v3798 = vsel %vm3783, %v3762, %v3797
        %v3799 = vsel %vm3771, %v3764, %v3763
        %v3800 = vsel %vm3773, %v3765, %v3799
        %v3801 = vsel %vm3775, %v3766, %v3800
        %v3802 = vsel %vm3777, %v3767, %v3801
        %v3803 = vsel %vm3779, %v3768, %v3802
        %v3804 = vsel %vm3781, %v3769, %v3803
        %v3805 = vsel %vm3783, %v3770, %v3804
        %v3806 = vpack.c.b16 %v3791, %v3784
        %v3807 = vpack.c.b16 %v3805, %v3798
        %v3814 = vunpack.c.l.b16 %v3671
        %v3815 = vunpack.c.l.b16 %v3672
        %v3816 = vunpack.c.l.b16 %v3673
        %v3817 = vunpack.c.l.b16 %v3674
        %v3818 = vpack.c.b16 %v3815, %v3814
        %v3819 = vpack.c.b16 %v3817, %v3816
        %v3822 = vld [vmem:[#allocation8] sm:$0xf]
        %v3823 = vld [vmem:[#allocation8 + $0x4] sm:$0xf]
        %v3824 = vld [vmem:[#allocation8 + $0x8] sm:$0xf]
        %v3825 = vld [vmem:[#allocation8 + $0xc] sm:$0xf]
        %v3826 = vld [vmem:[#allocation8 + $0x10] sm:$0xf]
        %v3827 = vld [vmem:[#allocation8 + $0x14] sm:$0xf]
        %v3828 = vld [vmem:[#allocation8 + $0x18] sm:$0xf]
        %v3829 = vld [vmem:[#allocation8 + $0x1c] sm:$0xf]
        %v3830 = vld [vmem:[#allocation8 + $0x20] sm:$0xf]
        %v3831 = vld [vmem:[#allocation8 + $0x24] sm:$0xf]
        %v3832 = vld [vmem:[#allocation8 + $0x28] sm:$0xf]
        %v3833 = vld [vmem:[#allocation8 + $0x2c] sm:$0xf]
        %v3834 = vld [vmem:[#allocation8 + $0x30] sm:$0xf]
        %v3835 = vld [vmem:[#allocation8 + $0x34] sm:$0xf]
        %v3836 = vld [vmem:[#allocation8 + $0x38] sm:$0xf]
        %v3837 = vld [vmem:[#allocation8 + $0x3c] sm:$0xf]
        %v3838 = vld [vmem:[#allocation8 + $0x40] sm:$0xf]
        %v3839 = vld [vmem:[#allocation8 + $0x44] sm:$0xf]
        %v3840 = vld [vmem:[#allocation8 + $0x48] sm:$0xf]
        %v3841 = vld [vmem:[#allocation8 + $0x4c] sm:$0xf]
        %v3842 = vld [vmem:[#allocation8 + $0x50] sm:$0xf]
        %v3843 = vld [vmem:[#allocation8 + $0x54] sm:$0xf]
        %v3844 = vld [vmem:[#allocation8 + $0x58] sm:$0xf]
        %v3845 = vld [vmem:[#allocation8 + $0x5c] sm:$0xf]
        %v3846 = vld [vmem:[#allocation8 + $0x60] sm:$0xf]
        %v3847 = vld [vmem:[#allocation8 + $0x64] sm:$0xf]
        %v3848 = vld [vmem:[#allocation8 + $0x68] sm:$0xf]
        %v3849 = vld [vmem:[#allocation8 + $0x6c] sm:$0xf]
        %v3850 = vld [vmem:[#allocation8 + $0x70] sm:$0xf]
        %v3851 = vld [vmem:[#allocation8 + $0x74] sm:$0xf]
        %v3852 = vld [vmem:[#allocation8 + $0x78] sm:$0xf]
        %v3853 = vld [vmem:[#allocation8 + $0x7c] sm:$0xf]
        %v3854 = vperm.slane %v382, 3
        %v3887 = vunpack.c.l.b16 %v3822
        %v3888 = vunpack.c.l.b16 %v3823
        %v3889 = vunpack.c.l.b16 %v3824
        %v3890 = vunpack.c.l.b16 %v3825
        %v3891 = vunpack.c.l.b16 %v3826
        %v3892 = vunpack.c.l.b16 %v3827
        %v3893 = vunpack.c.l.b16 %v3828
        %v3894 = vunpack.c.l.b16 %v3829
        %v3895 = vunpack.c.l.b16 %v3830
        %v3896 = vunpack.c.l.b16 %v3831
        %v3897 = vunpack.c.l.b16 %v3832
        %v3898 = vunpack.c.l.b16 %v3833
        %v3899 = vunpack.c.l.b16 %v3834
        %v3900 = vunpack.c.l.b16 %v3835
        %v3901 = vunpack.c.l.b16 %v3836
        %v3902 = vunpack.c.l.b16 %v3837
        %v3903 = vunpack.c.l.b16 %v3838
        %v3904 = vunpack.c.l.b16 %v3839
        %v3905 = vunpack.c.l.b16 %v3840
        %v3906 = vunpack.c.l.b16 %v3841
        %v3907 = vunpack.c.l.b16 %v3842
        %v3908 = vunpack.c.l.b16 %v3843
        %v3909 = vunpack.c.l.b16 %v3844
        %v3910 = vunpack.c.l.b16 %v3845
        %v3911 = vunpack.c.l.b16 %v3846
        %v3912 = vunpack.c.l.b16 %v3847
        %v3913 = vunpack.c.l.b16 %v3848
        %v3914 = vunpack.c.l.b16 %v3849
        %v3915 = vunpack.c.l.b16 %v3850
        %v3916 = vunpack.c.l.b16 %v3851
        %v3917 = vunpack.c.l.b16 %v3852
        %v3918 = vunpack.c.l.b16 %v3853
        %v3919 = vpack.c.b16 %v3888, %v3887
        %v3920 = vpack.c.b16 %v3890, %v3889
        %v3921 = vpack.c.b16 %v3892, %v3891
        %v3922 = vpack.c.b16 %v3894, %v3893
        %v3923 = vpack.c.b16 %v3896, %v3895
        %v3924 = vpack.c.b16 %v3898, %v3897
        %v3925 = vpack.c.b16 %v3900, %v3899
        %v3926 = vpack.c.b16 %v3902, %v3901
        %v3927 = vpack.c.b16 %v3904, %v3903
        %v3928 = vpack.c.b16 %v3906, %v3905
        %v3929 = vpack.c.b16 %v3908, %v3907
        %v3930 = vpack.c.b16 %v3910, %v3909
        %v3931 = vpack.c.b16 %v3912, %v3911
        %v3932 = vpack.c.b16 %v3914, %v3913
        %v3933 = vpack.c.b16 %v3916, %v3915
        %v3934 = vpack.c.b16 %v3918, %v3917
        %3951 = vmatpush.bf16.msra.mxu0 %v3926
        %3952 = vmatpush.bf16.msra.mxu0 %v3925
        %3953 = vmatpush.bf16.msra.mxu0 %v3924
        %3954 = vmatpush.bf16.msra.mxu0 %v3923
        %3955 = vmatpush.bf16.msra.mxu0 %v3922
        %3956 = vmatpush.bf16.msra.mxu0 %v3921
        %3957 = vmatpush.bf16.msra.mxu0 %v3920
        %3958 = vmatpush.bf16.msra.mxu0 %v3919
        %3959 = vmatmul.bf16.gmra.mxu0 %v3806
        %v3960 = vpop.f32.mrf.mxu0
        %v3961 = vadd.f32 %v3854, %v3960
        %v3962 = vpop.f32.mrf.mxu0
        %v3963 = vadd.f32 %v3854, %v3962
        %3964 = vmatmul.bf16.gmra.mxu0 %v3807
        %v3965 = vpop.f32.mrf.mxu0
        %v3966 = vadd.f32 %v3854, %v3965
        %v3967 = vpop.f32.mrf.mxu0
        %v3968 = vadd.f32 %v3854, %v3967
        %3969 = vdwg.mxu0
        %3970 = vmatpush.bf16.msra.mxu0 %v3934
        %3971 = vmatpush.bf16.msra.mxu0 %v3933
        %3972 = vmatpush.bf16.msra.mxu0 %v3932
        %3973 = vmatpush.bf16.msra.mxu0 %v3931
        %3974 = vmatpush.bf16.msra.mxu0 %v3930
        %3975 = vmatpush.bf16.msra.mxu0 %v3929
        %3976 = vmatpush.bf16.msra.mxu0 %v3928
        %3977 = vmatpush.bf16.msra.mxu0 %v3927
        %3978 = vmatmul.bf16.gmra.mxu0 %v3818
        %v3979 = vpop.f32.mrf.mxu0
        %v3980 = vadd.f32 %v3961, %v3979
        %v3981 = vpop.f32.mrf.mxu0
        %v3982 = vadd.f32 %v3963, %v3981
        %3983 = vmatmul.bf16.gmra.mxu0 %v3819
        %v3984 = vpop.f32.mrf.mxu0
        %v3985 = vadd.f32 %v3966, %v3984
        %v3986 = vpop.f32.mrf.mxu0
        %v3987 = vadd.f32 %v3968, %v3986
        %3988 = vdwg.mxu0
        %v3989 = vmax.f32 %v3980, 0.0
        %v3990 = vmax.f32 %v3982, 0.0
        %v3991 = vmax.f32 %v3985, 0.0
        %v3992 = vmax.f32 %v3987, 0.0
        %3993 = vadd.xlane.f32.xlu0 %v3989
        %v3994 = vpop.xlane.xlu0 %3993
        %3995 = vadd.xlane.f32.xlu0 %v3990
        %v3996 = vpop.xlane.xlu0 %3995
        %3997 = vadd.xlane.f32.xlu0 %v3991
        %v3998 = vpop.xlane.xlu0 %3997
        %3999 = vadd.xlane.f32.xlu0 %v3992
        %v4000 = vpop.xlane.xlu0 %3999
        %v4001 = vrcp.pop 128.0
        %v4002 = vmul.f32 128.0, %v4001
        %v4003 = vsub.f32 1.0, %v4002
        %v4004 = vmul.f32 %v4001, %v4003
        %v4005 = vadd.f32 %v4001, %v4004
        %vm4006 = vweird.f32 %v4001
        %v4007 = vsel %vm4006, %v4001, %v4005
        %v4008 = vmul.f32 %v3994, %v4007
        %v4009 = vmul.f32 %v3996, %v4007
        %v4010 = vmul.f32 %v3998, %v4007
        %v4011 = vmul.f32 %v4000, %v4007
        %v4012 = vsub.f32 %v3989, %v4008
        %v4013 = vsub.f32 %v3990, %v4009
        %v4014 = vsub.f32 %v3991, %v4010
        %v4015 = vsub.f32 %v3992, %v4011
        %v4016 = vmul.f32 %v4012, %v4012
        %v4017 = vmul.f32 %v4013, %v4013
        %v4018 = vmul.f32 %v4014, %v4014
        %v4019 = vmul.f32 %v4015, %v4015
        %4020 = vadd.xlane.f32.xlu0 %v4016
        %v4021 = vpop.xlane.xlu0 %4020
        %4022 = vadd.xlane.f32.xlu0 %v4017
        %v4023 = vpop.xlane.xlu0 %4022
        %4024 = vadd.xlane.f32.xlu0 %v4018
        %v4025 = vpop.xlane.xlu0 %4024
        %4026 = vadd.xlane.f32.xlu0 %v4019
        %v4027 = vpop.xlane.xlu0 %4026
        %v4028 = vmul.f32 %v4021, %v4007
        %v4029 = vmul.f32 %v4023, %v4007
        %v4030 = vmul.f32 %v4025, %v4007
        %v4031 = vmul.f32 %v4027, %v4007
        %v4032 = vadd.f32 %v4028, 1e-05
        %v4033 = vadd.f32 %v4029, 1e-05
        %v4034 = vadd.f32 %v4030, 1e-05
        %v4035 = vadd.f32 %v4031, 1e-05
        %v4036 = vrsqrt.pop %v4032
        %v4037 = vmul.f32 %v4036, %v4032
        %v4038 = vmul.f32 %v4037, %v4036
        %v4039 = vmul.f32 0.5, %v4038
        %v4040 = vsub.f32 1.5, %v4039
        %v4041 = vmul.f32 %v4036, %v4040
        %vm4042 = vweird.f32 %v4032
        %vm4043 = vweird.f32 %v4036
        %vm4044 = vmor %vm4042, %vm4043
        %v4045 = vsel %vm4044, %v4036, %v4041
        %v4046 = vrsqrt.pop %v4033
        %v4047 = vmul.f32 %v4046, %v4033
        %v4048 = vmul.f32 %v4047, %v4046
        %v4049 = vmul.f32 0.5, %v4048
        %v4050 = vsub.f32 1.5, %v4049
        %v4051 = vmul.f32 %v4046, %v4050
        %vm4052 = vweird.f32 %v4033
        %vm4053 = vweird.f32 %v4046
        %vm4054 = vmor %vm4052, %vm4053
        %v4055 = vsel %vm4054, %v4046, %v4051
        %v4056 = vrsqrt.pop %v4034
        %v4057 = vmul.f32 %v4056, %v4034
        %v4058 = vmul.f32 %v4057, %v4056
        %v4059 = vmul.f32 0.5, %v4058
        %v4060 = vsub.f32 1.5, %v4059
        %v4061 = vmul.f32 %v4056, %v4060
        %vm4062 = vweird.f32 %v4034
        %vm4063 = vweird.f32 %v4056
        %vm4064 = vmor %vm4062, %vm4063
        %v4065 = vsel %vm4064, %v4056, %v4061
        %v4066 = vrsqrt.pop %v4035
        %v4067 = vmul.f32 %v4066, %v4035
        %v4068 = vmul.f32 %v4067, %v4066
        %v4069 = vmul.f32 0.5, %v4068
        %v4070 = vsub.f32 1.5, %v4069
        %v4071 = vmul.f32 %v4066, %v4070
        %vm4072 = vweird.f32 %v4035
        %vm4073 = vweird.f32 %v4066
        %vm4074 = vmor %vm4072, %vm4073
        %v4075 = vsel %vm4074, %v4066, %v4071
        %v4076 = vmul.f32 %v4012, %v4045
        %v4077 = vmul.f32 %v4013, %v4055
        %v4078 = vmul.f32 %v4014, %v4065
        %v4079 = vmul.f32 %v4015, %v4075
        %v4080 = vperm.slane %v382, 4
        %v4081 = vmul.f32 %v4076, %v4080
        %v4082 = vmul.f32 %v4077, %v4080
        %v4083 = vmul.f32 %v4078, %v4080
        %v4084 = vmul.f32 %v4079, %v4080
        %v4085 = vperm.slane %v382, 5
        %v4086 = vadd.f32 %v4081, %v4085
        %v4087 = vadd.f32 %v4082, %v4085
        %v4088 = vadd.f32 %v4083, %v4085
        %v4089 = vadd.f32 %v4084, %v4085
        %4090 = vst [vmem:[%s378] sm:$0xff] %v4086
        %4091 = vst [vmem:[%s378 + $0x8] sm:$0xff] %v4087
        %4092 = vst [vmem:[%s378 + $0x10] sm:$0xff] %v4088
        %4093 = vst [vmem:[%s378 + $0x18] sm:$0xff] %v4089
        %s4094 = sand.u32 %s172, 1
        %s4095 = scalar_lea.sflag [#allocation4], %s4094
        %s4096 = sand.u32 %s172, 1
        %s4097 = smul.addr %s4096, 32
        %s4098 = scalar_lea.vmem [#allocation13], %s4097
        // Predicated region
        $region69: #{tpu_custom_call.1} parent=43 // pred_check
          %p4099 = pneg %p182
        $region70: #{tpu_custom_call.1} parent=43 // pred_check_branch
          %4101 = sbr.rel (%p4099) target = $region72
        $region71: #{tpu_custom_call.1} parent=43 // pred_region
          %s4102 = smul.u32 4, %s28
          %4104 = vsyncadd %s4095, 0
          %s4105 = smul.addr %s4102, 8
          %s4106 = scalar_lea.hbm %s6, %s4105
          %s4107 = sshll.u32 %s4098, 4
          %s4108 = int_to_ptr.vmem [resolvable:$true] %s4107
          %s4109 = sshll.u32 %s4106, 4
          %s4110 = int_to_ptr.hbm [resolvable:$true] %s4109
          %4115 = dma.vmem_to_hbm [thread:$0]  %s4108, 512, %s4110, %s4095, 128, 128, 8
        $region72: #{tpu_custom_call.1} parent=43 // pred_fallthru
          _
      $region44: #{tpu_custom_call.1} parent=5 // pred_fallthru
        _
      %p4116 = scmp.le.s32.totalorder 2, %s23
      // Predicated region
      $region73: #{tpu_custom_call.1} parent=5 // pred_check
        %p4117 = pneg %p4116
      $region74: #{tpu_custom_call.1} parent=5 // pred_check_branch
        %4119 = sbr.rel (%p4117) target = $region76
      $region75: #{tpu_custom_call.1} parent=5 // pred_region
        %s4120 = ssub.s32 %s23, 2
        // Predicated region
        $region77: #{tpu_custom_call.1} parent=75 // pred_check
          %p4121 = pneg %p188
        $region78: #{tpu_custom_call.1} parent=75 // pred_check_branch
          %4123 = sbr.rel (%p4121) target = $region80
        $region79: #{tpu_custom_call.1} parent=75 // pred_region
          %s4124 = sand.u32 %s173, 1
          %s4125 = scalar_lea.sflag [#allocation4], %s4124
          %s4126 = sand.u32 %s173, 1
          %s4127 = smul.addr %s4126, 32
          %s4128 = scalar_lea.vmem [#allocation13], %s4127
          %4130 = dma.done %s4125, 512
        $region80: #{tpu_custom_call.1} parent=75 // pred_fallthru
          _
      $region76: #{tpu_custom_call.1} parent=5 // pred_fallthru
        _
    $region6: #{tpu_custom_call.1} parent=1 // loop_footer
      %s27 = sadd.s32 1, %s23
    $region7: #{tpu_custom_call.1} parent=1 // loop_footer_branch
      %22 = sbr.rel target = $region3
    $region8: #{tpu_custom_call.1} parent=1 // loop_exit
      _
    %4131 = vsyncpa [#allocation3], 1
    %s4132 = scalar_lea.sflag [#allocation3], 1
    %4133 = vsyncpa %s4132, 1
    %4134 = vsyncpa [#allocation6], 1
    %s4135 = scalar_lea.sflag [#allocation6], 1
    %4136 = vsyncpa %s4135, 1
    %4137 = vsyncpa [#allocation9], 1
    %4138 = vsyncpa [#allocation12], 1
    %4139 = vsyncpa [#allocation4], 1
    %s4140 = scalar_lea.sflag [#allocation4], 1
    %4141 = vsyncpa %s4140, 1

</llo_original>
